<compile_context>
chip_gen: v5e
topology: v5e:2x2
jax: 0.10.0
libtpu: 0.0.40
codegen_flags: <defaults>
</compile_context>

<pallas_src>
import functools
import math

import jax
import jax.numpy as jnp
from jax import lax
from jax.experimental import pallas as pl
from jax.experimental.pallas import tpu as pltpu


def _round_up(x, m):
    return (x + m - 1) // m * m


# ---------------------------------------------------------------------------
# Fused kernel: H-shift -> fc1 -> dwconv3x3+bias -> GELU -> W-shift -> fc2
# ---------------------------------------------------------------------------
def _fused_shiftmlp_kernel(x_ref, w1_ref, b1_ref, kdw_ref, bdw_ref, w2_ref, b2_ref,
                           o_ref, dwpad_scr, wpad_scr, acc_scr, *,
                           H, W, pad, shift_size, c_in, c_hidden):
    # x_ref    : (1, H + 2*pad, W, Cp)  channel-padded input, H zero-padded by `pad`
    # w1_ref   : (Cp, CT)               fc1 weight tile (dot dtype)
    # b1_ref   : (1, CT)   f32          fc1 bias tile
    # kdw_ref  : (9, CT)   f32          depthwise 3x3 taps, flattened (dh*3 + dw)
    # bdw_ref  : (1, CT)   f32          depthwise bias tile
    # w2_ref   : (CT, Cop)              fc2 weight tile (dot dtype)
    # b2_ref   : (1, Cop)  f32          fc2 bias
    # o_ref    : (1, H*W, Cop)          final output (written at the last hidden tile)
    # dwpad_scr: (H+2, W+2, CT)     f32 zero-bordered scratch for the 3x3 conv
    # wpad_scr : (H, W+2*pad, CT)   f32 zero-bordered scratch for the W-shift
    # acc_scr  : (H*W, Cop)         f32 fc2 accumulator, resident across hidden tiles
    Cp = x_ref.shape[-1]
    CT = w1_ref.shape[-1]
    j = pl.program_id(1)
    nj = pl.num_programs(1)

    @pl.when(j == 0)
    def _():
        # Scratch borders stay zero for the whole image (only the interiors are
        # rewritten per hidden tile); fc2 accumulator resets per image.
        dwpad_scr[...] = jnp.zeros_like(dwpad_scr)
        wpad_scr[...] = jnp.zeros_like(wpad_scr)
        acc_scr[...] = jnp.zeros_like(acc_scr)

    # ---- channel-group spatial shift along H (zero fill), fused into fc1 ----
    xp = x_ref[0]                              # (H+2p, W, Cp); major-dim slices are cheap
    gin = c_in // shift_size
    cidx = lax.broadcasted_iota(jnp.int32, (1, 1, Cp), 2)
    x_shift = jnp.zeros((H, W, Cp), xp.dtype)
    for g in range(shift_size):
        s = g - pad                            # out[h] = x[h - s], zero outside [0, H)
        sl = xp[pad - s:pad - s + H]
        grp = (cidx >= g * gin) & (cidx < (g + 1) * gin)
        x_shift = jnp.where(grp, sl, x_shift)

    # ---- fc1 on the MXU, f32 accumulation ----
    h = jnp.dot(x_shift.reshape(H * W, Cp), w1_ref[...],
                preferred_element_type=jnp.float32)
    h = (h + b1_ref[...].astype(jnp.float32)).reshape(H, W, CT)

    # ---- depthwise 3x3 conv + bias (padding=1 via zeroed VMEM border) ----
    dwpad_scr[1:H + 1, 1:W + 1, :] = h
    acc = jnp.zeros((H, W, CT), jnp.float32)
    for t in range(9):                         # unrolled 9-tap MAC on the VPU
        dh, dw = t // 3, t % 3
        tap = dwpad_scr[dh:dh + H, dw:dw + W, :]          # Ref slice per tap
        acc = acc + tap * kdw_ref[t:t + 1, :].reshape(1, 1, CT)
    y = acc + bdw_ref[...].reshape(1, 1, CT)

    # ---- exact (erf) GELU, matching nn.GELU ----
    y = 0.5 * y * (1.0 + lax.erf(y * jnp.float32(1.0 / math.sqrt(2.0))))

    # ---- channel-group spatial shift along W (zero fill) ----
    wpad_scr[:, pad:pad + W, :] = y
    ghid = c_hidden // shift_size
    hidx = lax.broadcasted_iota(jnp.int32, (1, 1, CT), 2) + j * CT
    out = jnp.zeros((H, W, CT), jnp.float32)
    for g in range(shift_size):
        s = g - pad                            # out[w] = y[w - s], zero outside [0, W)
        sl = wpad_scr[:, pad - s:pad - s + W, :]
        grp = (hidx >= g * ghid) & (hidx < (g + 1) * ghid)
        out = jnp.where(grp, sl, out)

    # ---- fc2 partial product on the MXU; hidden-tile axis is the reduction ----
    acc_scr[...] += jnp.dot(out.reshape(H * W, CT).astype(w2_ref.dtype), w2_ref[...],
                            preferred_element_type=jnp.float32)

    @pl.when(j == nj - 1)
    def _():
        o_ref[0] = (acc_scr[...] + b2_ref[...].astype(jnp.float32)).astype(o_ref.dtype)


# ---------------------------------------------------------------------------
# Full forward
# ---------------------------------------------------------------------------
def shiftmlp_forward(x, params, H, W, shift_size=5, dot_dtype=jnp.float32):
    """x: (B, N, C) with N = H*W.  Returns (B, N, out_features) in float32."""
    B, N, C = x.shape
    assert N == H * W
    assert shift_size % 2 == 1
    pad = shift_size // 2
    hidden = params["w1"].shape[1]
    out_f = params["w2"].shape[1]
    assert C % shift_size == 0 and hidden % shift_size == 0

    Cp = _round_up(C, 128)
    Chp = _round_up(hidden, 128)
    Cop = _round_up(out_f, 128)
    CT = 128                                   # lane-dense hidden-channel tile
    n_ct = Chp // CT

    # Lane-dense (multiple-of-128) zero-padding of the parameters.
    # TODO(synk): in a real model, pre-pad the parameters once outside the forward.
    w1p = jnp.pad(params["w1"], ((0, Cp - C), (0, Chp - hidden))).astype(dot_dtype)
    b1p = jnp.pad(params["b1"], (0, Chp - hidden)).reshape(1, Chp)
    kdwp = jnp.pad(params["kdw"].reshape(9, hidden), ((0, 0), (0, Chp - hidden)))
    bdwp = jnp.pad(params["bdw"], (0, Chp - hidden)).reshape(1, Chp)
    w2p = jnp.pad(params["w2"], ((0, Chp - hidden), (0, Cop - out_f))).astype(dot_dtype)
    b2p = jnp.pad(params["b2"], (0, Cop - out_f)).reshape(1, Cop)

    # Single cheap input pad: channels -> Cp, H zero-padded by `pad` rows
    # (conv padding and the W-shift padding happen in-kernel on VMEM scratch).
    x_bhwc = x.reshape(B, H, W, C)
    xp = jnp.pad(x_bhwc, ((0, 0), (pad, pad), (0, 0), (0, Cp - C))).astype(dot_dtype)

    kernel = functools.partial(_fused_shiftmlp_kernel, H=H, W=W, pad=pad,
                               shift_size=shift_size, c_in=C, c_hidden=hidden)
    out = pl.pallas_call(
        kernel,
        out_shape=jax.ShapeDtypeStruct((B, H * W, Cop), jnp.float32),
        grid=(B, n_ct),
        in_specs=[
            pl.BlockSpec((1, H + 2 * pad, W, Cp), lambda b, j: (b, 0, 0, 0)),
            pl.BlockSpec((Cp, CT), lambda b, j: (0, j)),
            pl.BlockSpec((1, CT), lambda b, j: (0, j)),
            pl.BlockSpec((9, CT), lambda b, j: (0, j)),
            pl.BlockSpec((1, CT), lambda b, j: (0, j)),
            pl.BlockSpec((CT, Cop), lambda b, j: (j, 0)),
            pl.BlockSpec((1, Cop), lambda b, j: (0, 0)),
        ],
        out_specs=pl.BlockSpec((1, H * W, Cop), lambda b, j: (b, 0, 0)),
        scratch_shapes=[
            pltpu.VMEM((H + 2, W + 2, CT), jnp.float32),
            pltpu.VMEM((H, W + 2 * pad, CT), jnp.float32),
            pltpu.VMEM((H * W, Cop), jnp.float32),
        ],
        compiler_params=pltpu.CompilerParams(
            dimension_semantics=("parallel", "arbitrary"),
            vmem_limit_bytes=32 * 1024 * 1024),
    )(xp, w1p, b1p, kdwp, bdwp, w2p, b2p)

    return out[:, :, :out_f]


# ---------------------------------------------------------------------------
# Pure-JAX reference (same math, no Pallas) for a sanity check
# ---------------------------------------------------------------------------
def shift_op(x_bhwc, shift_size, axis):
    B, H, W, C = x_bhwc.shape
    pad = shift_size // 2
    xp = jnp.pad(x_bhwc, ((0, 0), (pad, pad), (pad, pad), (0, 0)))
    chunks = jnp.split(xp, shift_size, axis=3)
    shifted = [jnp.roll(c, s, axis=axis) for c, s in zip(chunks, range(-pad, pad + 1))]
    xc = jnp.concatenate(shifted, axis=3)
    return xc[:, pad:pad + H, pad:pad + W, :]


def ref_forward(x, params, H, W, shift_size=5):
    B, N, C = x.shape
    xs = shift_op(x.reshape(B, H, W, C), shift_size, 1)
    h = xs.reshape(B, N, C) @ params["w1"] + params["b1"]
    hb = h.reshape(B, H, W, -1)
    hp = jnp.pad(hb, ((0, 0), (1, 1), (1, 1), (0, 0)))
    conv = sum(hp[:, dh:dh + H, dw:dw + W, :] * params["kdw"][dh, dw]
               for dh in range(3) for dw in range(3)) + params["bdw"]
    act = 0.5 * conv * (1.0 + lax.erf(conv / jnp.sqrt(2.0)))
    xs2 = shift_op(act, shift_size, 2)
    return xs2.reshape(B, N, -1) @ params["w2"] + params["b2"]


# ---------------------------------------------------------------------------
if __name__ == "__main__":
    B, H, W = 2, 16, 16
    C = 20                      # in_features == hidden_features == out_features
    shift_size = 5              # pad = 2; C divisible by shift_size
    N = H * W

    key = jax.random.PRNGKey(0)
    kx, kw1, kw2, kdw = jax.random.split(key, 4)

    x = jax.random.normal(kx, (B, N, C), jnp.float32)

    # Deterministic init mirroring _init_weights:
    #  Linear: weight ~ N(0, 0.02), bias = 0
    #  Conv2d (depthwise 3x3): weight ~ N(0, sqrt(2 / 9)), bias = 0
    params = {
        "w1": 0.02 * jax.random.normal(kw1, (C, C), jnp.float32),   # stored (in, out)
        "b1": jnp.zeros((C,), jnp.float32),
        "w2": 0.02 * jax.random.normal(kw2, (C, C), jnp.float32),
        "b2": jnp.zeros((C,), jnp.float32),
        "kdw": math.sqrt(2.0 / 9.0) * jax.random.normal(kdw, (3, 3, C), jnp.float32),
        "bdw": jnp.zeros((C,), jnp.float32),
    }

    ref = ref_forward(x, params, H, W, shift_size)

    # f32 MXU operands: tight check against the pure-JAX reference.
    out_f32 = jax.block_until_ready(
        shiftmlp_forward(x, params, H, W, shift_size, dot_dtype=jnp.float32))
    assert out_f32.shape == (B, N, C), out_f32.shape
    assert jnp.allclose(out_f32, ref, atol=1e-4, rtol=1e-4), "f32 mismatch vs reference"

    # bf16 MXU operands (perf path): halves HBM/VMEM weight+input traffic, keeps
    # f32 accumulation; compared against the f32 reference with bf16 tolerance.
    out_bf16 = jax.block_until_ready(
        shiftmlp_forward(x, params, H, W, shift_size, dot_dtype=jnp.bfloat16))
    assert out_bf16.shape == (B, N, C), out_bf16.shape
    assert jnp.allclose(out_bf16, ref, atol=5e-3, rtol=5e-2), "bf16 mismatch vs reference"

    print("KERNEL_OK")
</pallas_src>

<mosaic_0001>
module attributes {stable_mosaic.version = 11 : i64} {
  func.func @_fused_shiftmlp_kernel(%arg0: i32, %arg1: i32, %arg2: memref<1x20x16x128xf32, #tpu.memory_space<vmem>>, %arg3: memref<128x128xf32, #tpu.memory_space<vmem>>, %arg4: memref<1x128xf32, #tpu.memory_space<vmem>>, %arg5: memref<9x128xf32, #tpu.memory_space<vmem>>, %arg6: memref<1x128xf32, #tpu.memory_space<vmem>>, %arg7: memref<128x128xf32, #tpu.memory_space<vmem>>, %arg8: memref<1x128xf32, #tpu.memory_space<vmem>>, %arg9: memref<1x256x128xf32, #tpu.memory_space<vmem>>, %arg10: memref<18x18x128xf32, #tpu.memory_space<vmem>>, %arg11: memref<16x20x128xf32, #tpu.memory_space<vmem>>, %arg12: memref<256x128xf32, #tpu.memory_space<vmem>>) attributes {dimension_semantics = [#tpu.dimension_semantics<parallel>, #tpu.dimension_semantics<arbitrary>], iteration_bounds = array<i64: 2, 1>, scalar_prefetch = 0 : i64, scratch_operands = 3 : i64, tpu.core_type = #tpu.core_type<tc>, window_params = [{transform_indices = @transform_0, window_bounds = array<i64: 1, 20, 16, 128>}, {transform_indices = @transform_1, window_bounds = array<i64: 128, 128>}, {transform_indices = @transform_2, window_bounds = array<i64: 1, 128>}, {transform_indices = @transform_3, window_bounds = array<i64: 9, 128>}, {transform_indices = @transform_4, window_bounds = array<i64: 1, 128>}, {transform_indices = @transform_5, window_bounds = array<i64: 128, 128>}, {pipeline_mode = #tpu.pipeline_mode<synchronous>, transform_indices = @transform_6, window_bounds = array<i64: 1, 128>}, {transform_indices = @transform_7, window_bounds = array<i64: 1, 256, 128>}]} {
    %c0_i32 = arith.constant 0 : i32
    %0 = arith.cmpi eq, %arg1, %c0_i32 : i32
    %1 = arith.extui %0 : i1 to i32
    %c0_i32_0 = arith.constant 0 : i32
    %2 = arith.cmpi ne, %1, %c0_i32_0 : i32
    scf.if %2 {
      %cst_98 = arith.constant 0.000000e+00 : f32
      %187 = vector.broadcast %cst_98 : f32 to vector<18x18x128xf32>
      %c0_99 = arith.constant 0 : index
      %c0_100 = arith.constant 0 : index
      %c0_101 = arith.constant 0 : index
      %188 = vector.load %arg10[%c0_99, %c0_100, %c0_101] : memref<18x18x128xf32, #tpu.memory_space<vmem>>, vector<18x18x128xf32>
      tpu.vector_store %arg10[%c0_99, %c0_100, %c0_101], %187 {strides = array<i32>} : memref<18x18x128xf32, #tpu.memory_space<vmem>>, vector<18x18x128xf32>,
      %cst_102 = arith.constant 0.000000e+00 : f32
      %189 = vector.broadcast %cst_102 : f32 to vector<16x20x128xf32>
      %c0_103 = arith.constant 0 : index
      %c0_104 = arith.constant 0 : index
      %c0_105 = arith.constant 0 : index
      %190 = vector.load %arg11[%c0_103, %c0_104, %c0_105] : memref<16x20x128xf32, #tpu.memory_space<vmem>>, vector<16x20x128xf32>
      tpu.vector_store %arg11[%c0_103, %c0_104, %c0_105], %189 {strides = array<i32>} : memref<16x20x128xf32, #tpu.memory_space<vmem>>, vector<16x20x128xf32>,
      %cst_106 = arith.constant 0.000000e+00 : f32
      %191 = vector.broadcast %cst_106 : f32 to vector<256x128xf32>
      %c0_107 = arith.constant 0 : index
      %c0_108 = arith.constant 0 : index
      %192 = vector.load %arg12[%c0_107, %c0_108] : memref<256x128xf32, #tpu.memory_space<vmem>>, vector<256x128xf32>
      tpu.vector_store %arg12[%c0_107, %c0_108], %191 {strides = array<i32>} : memref<256x128xf32, #tpu.memory_space<vmem>>, vector<256x128xf32>,
    } else {
    }
    %c0 = arith.constant 0 : index
    %c0_1 = arith.constant 0 : index
    %c0_2 = arith.constant 0 : index
    %c0_3 = arith.constant 0 : index
    %3 = vector.load %arg2[%c0, %c0_1, %c0_2, %c0_3] : memref<1x20x16x128xf32, #tpu.memory_space<vmem>>, vector<1x20x16x128xf32>
    %4 = vector.shape_cast %3 : vector<1x20x16x128xf32> to vector<20x16x128xf32>
    %5 = tpu.iota {dimensions = array<i32: 2>} : vector<1x1x128xi32>
    %cst = arith.constant 0.000000e+00 : f32
    %6 = vector.broadcast %cst : f32 to vector<16x16x128xf32>
    %7 = vector.extract_strided_slice %4 {offsets = [4, 0, 0], sizes = [16, 16, 128], strides = [1, 1, 1]} : vector<20x16x128xf32> to vector<16x16x128xf32>
    %c0_i32_4 = arith.constant 0 : i32
    %8 = vector.broadcast %c0_i32_4 : i32 to vector<1x1x128xi32>
    %9 = arith.cmpi sge, %5, %8 : vector<1x1x128xi32>
    %c4_i32 = arith.constant 4 : i32
    %10 = vector.broadcast %c4_i32 : i32 to vector<1x1x128xi32>
    %11 = arith.cmpi slt, %5, %10 : vector<1x1x128xi32>
    %12 = arith.andi %9, %11 : vector<1x1x128xi1>
    %13 = vector.shape_cast %12 : vector<1x1x128xi1> to vector<1x1x128xi1>
    %14 = vector.broadcast %13 : vector<1x1x128xi1> to vector<16x16x128xi1>
    %15 = arith.select %14, %7, %6 : vector<16x16x128xi1>, vector<16x16x128xf32>
    %16 = vector.extract_strided_slice %4 {offsets = [3, 0, 0], sizes = [16, 16, 128], strides = [1, 1, 1]} : vector<20x16x128xf32> to vector<16x16x128xf32>
    %c4_i32_5 = arith.constant 4 : i32
    %17 = vector.broadcast %c4_i32_5 : i32 to vector<1x1x128xi32>
    %18 = arith.cmpi sge, %5, %17 : vector<1x1x128xi32>
    %c8_i32 = arith.constant 8 : i32
    %19 = vector.broadcast %c8_i32 : i32 to vector<1x1x128xi32>
    %20 = arith.cmpi slt, %5, %19 : vector<1x1x128xi32>
    %21 = arith.andi %18, %20 : vector<1x1x128xi1>
    %22 = vector.shape_cast %21 : vector<1x1x128xi1> to vector<1x1x128xi1>
    %23 = vector.broadcast %22 : vector<1x1x128xi1> to vector<16x16x128xi1>
    %24 = arith.select %23, %16, %15 : vector<16x16x128xi1>, vector<16x16x128xf32>
    %25 = vector.extract_strided_slice %4 {offsets = [2, 0, 0], sizes = [16, 16, 128], strides = [1, 1, 1]} : vector<20x16x128xf32> to vector<16x16x128xf32>
    %c8_i32_6 = arith.constant 8 : i32
    %26 = vector.broadcast %c8_i32_6 : i32 to vector<1x1x128xi32>
    %27 = arith.cmpi sge, %5, %26 : vector<1x1x128xi32>
    %c12_i32 = arith.constant 12 : i32
    %28 = vector.broadcast %c12_i32 : i32 to vector<1x1x128xi32>
    %29 = arith.cmpi slt, %5, %28 : vector<1x1x128xi32>
    %30 = arith.andi %27, %29 : vector<1x1x128xi1>
    %31 = vector.shape_cast %30 : vector<1x1x128xi1> to vector<1x1x128xi1>
    %32 = vector.broadcast %31 : vector<1x1x128xi1> to vector<16x16x128xi1>
    %33 = arith.select %32, %25, %24 : vector<16x16x128xi1>, vector<16x16x128xf32>
    %34 = vector.extract_strided_slice %4 {offsets = [1, 0, 0], sizes = [16, 16, 128], strides = [1, 1, 1]} : vector<20x16x128xf32> to vector<16x16x128xf32>
    %c12_i32_7 = arith.constant 12 : i32
    %35 = vector.broadcast %c12_i32_7 : i32 to vector<1x1x128xi32>
    %36 = arith.cmpi sge, %5, %35 : vector<1x1x128xi32>
    %c16_i32 = arith.constant 16 : i32
    %37 = vector.broadcast %c16_i32 : i32 to vector<1x1x128xi32>
    %38 = arith.cmpi slt, %5, %37 : vector<1x1x128xi32>
    %39 = arith.andi %36, %38 : vector<1x1x128xi1>
    %40 = vector.shape_cast %39 : vector<1x1x128xi1> to vector<1x1x128xi1>
    %41 = vector.broadcast %40 : vector<1x1x128xi1> to vector<16x16x128xi1>
    %42 = arith.select %41, %34, %33 : vector<16x16x128xi1>, vector<16x16x128xf32>
    %43 = vector.extract_strided_slice %4 {offsets = [0, 0, 0], sizes = [16, 16, 128], strides = [1, 1, 1]} : vector<20x16x128xf32> to vector<16x16x128xf32>
    %c16_i32_8 = arith.constant 16 : i32
    %44 = vector.broadcast %c16_i32_8 : i32 to vector<1x1x128xi32>
    %45 = arith.cmpi sge, %5, %44 : vector<1x1x128xi32>
    %c20_i32 = arith.constant 20 : i32
    %46 = vector.broadcast %c20_i32 : i32 to vector<1x1x128xi32>
    %47 = arith.cmpi slt, %5, %46 : vector<1x1x128xi32>
    %48 = arith.andi %45, %47 : vector<1x1x128xi1>
    %49 = vector.shape_cast %48 : vector<1x1x128xi1> to vector<1x1x128xi1>
    %50 = vector.broadcast %49 : vector<1x1x128xi1> to vector<16x16x128xi1>
    %51 = arith.select %50, %43, %42 : vector<16x16x128xi1>, vector<16x16x128xf32>
    %52 = vector.shape_cast %51 : vector<16x16x128xf32> to vector<256x128xf32>
    %c0_9 = arith.constant 0 : index
    %c0_10 = arith.constant 0 : index
    %53 = vector.load %arg3[%c0_9, %c0_10] : memref<128x128xf32, #tpu.memory_space<vmem>>, vector<128x128xf32>
    %cst_11 = arith.constant dense<0.000000e+00> : vector<256x128xf32>
    %54 = tpu.matmul %52, %53, %cst_11 {dimension_numbers = #tpu.dot_dimension_numbers<[1], [0], [0], [1], [0, 0, 1, 1], [], []>} : vector<256x128xf32>, vector<128x128xf32>, vector<256x128xf32> -> vector<256x128xf32>
    %c0_12 = arith.constant 0 : index
    %c0_13 = arith.constant 0 : index
    %55 = vector.load %arg4[%c0_12, %c0_13] : memref<1x128xf32, #tpu.memory_space<vmem>>, vector<1x128xf32>
    %56 = vector.broadcast %55 : vector<1x128xf32> to vector<256x128xf32>
    %57 = arith.addf %54, %56 : vector<256x128xf32>
    %58 = vector.shape_cast %57 : vector<256x128xf32> to vector<16x16x128xf32>
    %c1 = arith.constant 1 : index
    %c1_14 = arith.constant 1 : index
    %c0_15 = arith.constant 0 : index
    %59 = vector.load %arg10[%c1, %c1_14, %c0_15] : memref<18x18x128xf32, #tpu.memory_space<vmem>>, vector<16x16x128xf32>
    tpu.vector_store %arg10[%c1, %c1_14, %c0_15], %58 {strides = array<i32>} : memref<18x18x128xf32, #tpu.memory_space<vmem>>, vector<16x16x128xf32>,
    %cst_16 = arith.constant 0.000000e+00 : f32
    %60 = vector.broadcast %cst_16 : f32 to vector<16x16x128xf32>
    %c0_17 = arith.constant 0 : index
    %c0_18 = arith.constant 0 : index
    %c0_19 = arith.constant 0 : index
    %61 = vector.load %arg10[%c0_17, %c0_18, %c0_19] : memref<18x18x128xf32, #tpu.memory_space<vmem>>, vector<16x16x128xf32>
    %c0_20 = arith.constant 0 : index
    %c0_21 = arith.constant 0 : index
    %62 = vector.load %arg5[%c0_20, %c0_21] : memref<9x128xf32, #tpu.memory_space<vmem>>, vector<1x128xf32>
    %63 = vector.shape_cast %62 : vector<1x128xf32> to vector<1x1x128xf32>
    %64 = vector.broadcast %63 : vector<1x1x128xf32> to vector<16x16x128xf32>
    %65 = arith.mulf %61, %64 : vector<16x16x128xf32>
    %66 = arith.addf %60, %65 : vector<16x16x128xf32>
    %c0_22 = arith.constant 0 : index
    %c1_23 = arith.constant 1 : index
    %c0_24 = arith.constant 0 : index
    %67 = vector.load %arg10[%c0_22, %c1_23, %c0_24] : memref<18x18x128xf32, #tpu.memory_space<vmem>>, vector<16x16x128xf32>
    %c1_25 = arith.constant 1 : index
    %c0_26 = arith.constant 0 : index
    %68 = vector.load %arg5[%c1_25, %c0_26] : memref<9x128xf32, #tpu.memory_space<vmem>>, vector<1x128xf32>
    %69 = vector.shape_cast %68 : vector<1x128xf32> to vector<1x1x128xf32>
    %70 = vector.broadcast %69 : vector<1x1x128xf32> to vector<16x16x128xf32>
    %71 = arith.mulf %67, %70 : vector<16x16x128xf32>
    %72 = arith.addf %66, %71 : vector<16x16x128xf32>
    %c0_27 = arith.constant 0 : index
    %c2 = arith.constant 2 : index
    %c0_28 = arith.constant 0 : index
    %73 = vector.load %arg10[%c0_27, %c2, %c0_28] : memref<18x18x128xf32, #tpu.memory_space<vmem>>, vector<16x16x128xf32>
    %c2_29 = arith.constant 2 : index
    %c0_30 = arith.constant 0 : index
    %74 = vector.load %arg5[%c2_29, %c0_30] : memref<9x128xf32, #tpu.memory_space<vmem>>, vector<1x128xf32>
    %75 = vector.shape_cast %74 : vector<1x128xf32> to vector<1x1x128xf32>
    %76 = vector.broadcast %75 : vector<1x1x128xf32> to vector<16x16x128xf32>
    %77 = arith.mulf %73, %76 : vector<16x16x128xf32>
    %78 = arith.addf %72, %77 : vector<16x16x128xf32>
    %c1_31 = arith.constant 1 : index
    %c0_32 = arith.constant 0 : index
    %c0_33 = arith.constant 0 : index
    %79 = vector.load %arg10[%c1_31, %c0_32, %c0_33] : memref<18x18x128xf32, #tpu.memory_space<vmem>>, vector<16x16x128xf32>
    %c3 = arith.constant 3 : index
    %c0_34 = arith.constant 0 : index
    %80 = vector.load %arg5[%c3, %c0_34] : memref<9x128xf32, #tpu.memory_space<vmem>>, vector<1x128xf32>
    %81 = vector.shape_cast %80 : vector<1x128xf32> to vector<1x1x128xf32>
    %82 = vector.broadcast %81 : vector<1x1x128xf32> to vector<16x16x128xf32>
    %83 = arith.mulf %79, %82 : vector<16x16x128xf32>
    %84 = arith.addf %78, %83 : vector<16x16x128xf32>
    %c1_35 = arith.constant 1 : index
    %c1_36 = arith.constant 1 : index
    %c0_37 = arith.constant 0 : index
    %85 = vector.load %arg10[%c1_35, %c1_36, %c0_37] : memref<18x18x128xf32, #tpu.memory_space<vmem>>, vector<16x16x128xf32>
    %c4 = arith.constant 4 : index
    %c0_38 = arith.constant 0 : index
    %86 = vector.load %arg5[%c4, %c0_38] : memref<9x128xf32, #tpu.memory_space<vmem>>, vector<1x128xf32>
    %87 = vector.shape_cast %86 : vector<1x128xf32> to vector<1x1x128xf32>
    %88 = vector.broadcast %87 : vector<1x1x128xf32> to vector<16x16x128xf32>
    %89 = arith.mulf %85, %88 : vector<16x16x128xf32>
    %90 = arith.addf %84, %89 : vector<16x16x128xf32>
    %c1_39 = arith.constant 1 : index
    %c2_40 = arith.constant 2 : index
    %c0_41 = arith.constant 0 : index
    %91 = vector.load %arg10[%c1_39, %c2_40, %c0_41] : memref<18x18x128xf32, #tpu.memory_space<vmem>>, vector<16x16x128xf32>
    %c5 = arith.constant 5 : index
    %c0_42 = arith.constant 0 : index
    %92 = vector.load %arg5[%c5, %c0_42] : memref<9x128xf32, #tpu.memory_space<vmem>>, vector<1x128xf32>
    %93 = vector.shape_cast %92 : vector<1x128xf32> to vector<1x1x128xf32>
    %94 = vector.broadcast %93 : vector<1x1x128xf32> to vector<16x16x128xf32>
    %95 = arith.mulf %91, %94 : vector<16x16x128xf32>
    %96 = arith.addf %90, %95 : vector<16x16x128xf32>
    %c2_43 = arith.constant 2 : index
    %c0_44 = arith.constant 0 : index
    %c0_45 = arith.constant 0 : index
    %97 = vector.load %arg10[%c2_43, %c0_44, %c0_45] : memref<18x18x128xf32, #tpu.memory_space<vmem>>, vector<16x16x128xf32>
    %c6 = arith.constant 6 : index
    %c0_46 = arith.constant 0 : index
    %98 = vector.load %arg5[%c6, %c0_46] : memref<9x128xf32, #tpu.memory_space<vmem>>, vector<1x128xf32>
    %99 = vector.shape_cast %98 : vector<1x128xf32> to vector<1x1x128xf32>
    %100 = vector.broadcast %99 : vector<1x1x128xf32> to vector<16x16x128xf32>
    %101 = arith.mulf %97, %100 : vector<16x16x128xf32>
    %102 = arith.addf %96, %101 : vector<16x16x128xf32>
    %c2_47 = arith.constant 2 : index
    %c1_48 = arith.constant 1 : index
    %c0_49 = arith.constant 0 : index
    %103 = vector.load %arg10[%c2_47, %c1_48, %c0_49] : memref<18x18x128xf32, #tpu.memory_space<vmem>>, vector<16x16x128xf32>
    %c7 = arith.constant 7 : index
    %c0_50 = arith.constant 0 : index
    %104 = vector.load %arg5[%c7, %c0_50] : memref<9x128xf32, #tpu.memory_space<vmem>>, vector<1x128xf32>
    %105 = vector.shape_cast %104 : vector<1x128xf32> to vector<1x1x128xf32>
    %106 = vector.broadcast %105 : vector<1x1x128xf32> to vector<16x16x128xf32>
    %107 = arith.mulf %103, %106 : vector<16x16x128xf32>
    %108 = arith.addf %102, %107 : vector<16x16x128xf32>
    %c2_51 = arith.constant 2 : index
    %c2_52 = arith.constant 2 : index
    %c0_53 = arith.constant 0 : index
    %109 = vector.load %arg10[%c2_51, %c2_52, %c0_53] : memref<18x18x128xf32, #tpu.memory_space<vmem>>, vector<16x16x128xf32>
    %c8 = arith.constant 8 : index
    %c0_54 = arith.constant 0 : index
    %110 = vector.load %arg5[%c8, %c0_54] : memref<9x128xf32, #tpu.memory_space<vmem>>, vector<1x128xf32>
    %111 = vector.shape_cast %110 : vector<1x128xf32> to vector<1x1x128xf32>
    %112 = vector.broadcast %111 : vector<1x1x128xf32> to vector<16x16x128xf32>
    %113 = arith.mulf %109, %112 : vector<16x16x128xf32>
    %114 = arith.addf %108, %113 : vector<16x16x128xf32>
    %c0_55 = arith.constant 0 : index
    %c0_56 = arith.constant 0 : index
    %115 = vector.load %arg6[%c0_55, %c0_56] : memref<1x128xf32, #tpu.memory_space<vmem>>, vector<1x128xf32>
    %116 = vector.shape_cast %115 : vector<1x128xf32> to vector<1x1x128xf32>
    %117 = vector.broadcast %116 : vector<1x1x128xf32> to vector<16x16x128xf32>
    %118 = arith.addf %114, %117 : vector<16x16x128xf32>
    %cst_57 = arith.constant 5.000000e-01 : f32
    %119 = vector.broadcast %cst_57 : f32 to vector<16x16x128xf32>
    %120 = arith.mulf %119, %118 : vector<16x16x128xf32>
    %cst_58 = arith.constant 0.707106769 : f32
    %121 = vector.broadcast %cst_58 : f32 to vector<16x16x128xf32>
    %122 = arith.mulf %118, %121 : vector<16x16x128xf32>
    %123 = math.erf %122 : vector<16x16x128xf32>
    %cst_59 = arith.constant 1.000000e+00 : f32
    %124 = vector.broadcast %cst_59 : f32 to vector<16x16x128xf32>
    %125 = arith.addf %124, %123 : vector<16x16x128xf32>
    %126 = arith.mulf %120, %125 : vector<16x16x128xf32>
    %c0_60 = arith.constant 0 : index
    %c2_61 = arith.constant 2 : index
    %c0_62 = arith.constant 0 : index
    %127 = vector.load %arg11[%c0_60, %c2_61, %c0_62] : memref<16x20x128xf32, #tpu.memory_space<vmem>>, vector<16x16x128xf32>
    tpu.vector_store %arg11[%c0_60, %c2_61, %c0_62], %126 {strides = array<i32>} : memref<16x20x128xf32, #tpu.memory_space<vmem>>, vector<16x16x128xf32>,
    %128 = tpu.iota {dimensions = array<i32: 2>} : vector<1x1x128xi32>
    %c128_i32 = arith.constant 128 : i32
    %129 = arith.muli %arg1, %c128_i32 : i32
    %130 = vector.broadcast %129 : i32 to vector<1x1x128xi32>
    %131 = arith.addi %128, %130 : vector<1x1x128xi32>
    %cst_63 = arith.constant 0.000000e+00 : f32
    %132 = vector.broadcast %cst_63 : f32 to vector<16x16x128xf32>
    %c0_64 = arith.constant 0 : index
    %c4_65 = arith.constant 4 : index
    %c0_66 = arith.constant 0 : index
    %133 = vector.load %arg11[%c0_64, %c4_65, %c0_66] : memref<16x20x128xf32, #tpu.memory_space<vmem>>, vector<16x16x128xf32>
    %c0_i32_67 = arith.constant 0 : i32
    %134 = vector.broadcast %c0_i32_67 : i32 to vector<1x1x128xi32>
    %135 = arith.cmpi sge, %131, %134 : vector<1x1x128xi32>
    %c4_i32_68 = arith.constant 4 : i32
    %136 = vector.broadcast %c4_i32_68 : i32 to vector<1x1x128xi32>
    %137 = arith.cmpi slt, %131, %136 : vector<1x1x128xi32>
    %138 = arith.andi %135, %137 : vector<1x1x128xi1>
    %139 = vector.shape_cast %138 : vector<1x1x128xi1> to vector<1x1x128xi1>
    %140 = vector.broadcast %139 : vector<1x1x128xi1> to vector<16x16x128xi1>
    %141 = arith.select %140, %133, %132 : vector<16x16x128xi1>, vector<16x16x128xf32>
    %c0_69 = arith.constant 0 : index
    %c3_70 = arith.constant 3 : index
    %c0_71 = arith.constant 0 : index
    %142 = vector.load %arg11[%c0_69, %c3_70, %c0_71] : memref<16x20x128xf32, #tpu.memory_space<vmem>>, vector<16x16x128xf32>
    %c4_i32_72 = arith.constant 4 : i32
    %143 = vector.broadcast %c4_i32_72 : i32 to vector<1x1x128xi32>
    %144 = arith.cmpi sge, %131, %143 : vector<1x1x128xi32>
    %c8_i32_73 = arith.constant 8 : i32
    %145 = vector.broadcast %c8_i32_73 : i32 to vector<1x1x128xi32>
    %146 = arith.cmpi slt, %131, %145 : vector<1x1x128xi32>
    %147 = arith.andi %144, %146 : vector<1x1x128xi1>
    %148 = vector.shape_cast %147 : vector<1x1x128xi1> to vector<1x1x128xi1>
    %149 = vector.broadcast %148 : vector<1x1x128xi1> to vector<16x16x128xi1>
    %150 = arith.select %149, %142, %141 : vector<16x16x128xi1>, vector<16x16x128xf32>
    %c0_74 = arith.constant 0 : index
    %c2_75 = arith.constant 2 : index
    %c0_76 = arith.constant 0 : index
    %151 = vector.load %arg11[%c0_74, %c2_75, %c0_76] : memref<16x20x128xf32, #tpu.memory_space<vmem>>, vector<16x16x128xf32>
    %c8_i32_77 = arith.constant 8 : i32
    %152 = vector.broadcast %c8_i32_77 : i32 to vector<1x1x128xi32>
    %153 = arith.cmpi sge, %131, %152 : vector<1x1x128xi32>
    %c12_i32_78 = arith.constant 12 : i32
    %154 = vector.broadcast %c12_i32_78 : i32 to vector<1x1x128xi32>
    %155 = arith.cmpi slt, %131, %154 : vector<1x1x128xi32>
    %156 = arith.andi %153, %155 : vector<1x1x128xi1>
    %157 = vector.shape_cast %156 : vector<1x1x128xi1> to vector<1x1x128xi1>
    %158 = vector.broadcast %157 : vector<1x1x128xi1> to vector<16x16x128xi1>
    %159 = arith.select %158, %151, %150 : vector<16x16x128xi1>, vector<16x16x128xf32>
    %c0_79 = arith.constant 0 : index
    %c1_80 = arith.constant 1 : index
    %c0_81 = arith.constant 0 : index
    %160 = vector.load %arg11[%c0_79, %c1_80, %c0_81] : memref<16x20x128xf32, #tpu.memory_space<vmem>>, vector<16x16x128xf32>
    %c12_i32_82 = arith.constant 12 : i32
    %161 = vector.broadcast %c12_i32_82 : i32 to vector<1x1x128xi32>
    %162 = arith.cmpi sge, %131, %161 : vector<1x1x128xi32>
    %c16_i32_83 = arith.constant 16 : i32
    %163 = vector.broadcast %c16_i32_83 : i32 to vector<1x1x128xi32>
    %164 = arith.cmpi slt, %131, %163 : vector<1x1x128xi32>
    %165 = arith.andi %162, %164 : vector<1x1x128xi1>
    %166 = vector.shape_cast %165 : vector<1x1x128xi1> to vector<1x1x128xi1>
    %167 = vector.broadcast %166 : vector<1x1x128xi1> to vector<16x16x128xi1>
    %168 = arith.select %167, %160, %159 : vector<16x16x128xi1>, vector<16x16x128xf32>
    %c0_84 = arith.constant 0 : index
    %c0_85 = arith.constant 0 : index
    %c0_86 = arith.constant 0 : index
    %169 = vector.load %arg11[%c0_84, %c0_85, %c0_86] : memref<16x20x128xf32, #tpu.memory_space<vmem>>, vector<16x16x128xf32>
    %c16_i32_87 = arith.constant 16 : i32
    %170 = vector.broadcast %c16_i32_87 : i32 to vector<1x1x128xi32>
    %171 = arith.cmpi sge, %131, %170 : vector<1x1x128xi32>
    %c20_i32_88 = arith.constant 20 : i32
    %172 = vector.broadcast %c20_i32_88 : i32 to vector<1x1x128xi32>
    %173 = arith.cmpi slt, %131, %172 : vector<1x1x128xi32>
    %174 = arith.andi %171, %173 : vector<1x1x128xi1>
    %175 = vector.shape_cast %174 : vector<1x1x128xi1> to vector<1x1x128xi1>
    %176 = vector.broadcast %175 : vector<1x1x128xi1> to vector<16x16x128xi1>
    %177 = arith.select %176, %169, %168 : vector<16x16x128xi1>, vector<16x16x128xf32>
    %c0_89 = arith.constant 0 : index
    %c0_90 = arith.constant 0 : index
    %178 = vector.load %arg12[%c0_89, %c0_90] : memref<256x128xf32, #tpu.memory_space<vmem>>, vector<256x128xf32>
    %179 = vector.shape_cast %177 : vector<16x16x128xf32> to vector<256x128xf32>
    %c0_91 = arith.constant 0 : index
    %c0_92 = arith.constant 0 : index
    %180 = vector.load %arg7[%c0_91, %c0_92] : memref<128x128xf32, #tpu.memory_space<vmem>>, vector<128x128xf32>
    %cst_93 = arith.constant dense<0.000000e+00> : vector<256x128xf32>
    %181 = tpu.matmul %179, %180, %cst_93 {dimension_numbers = #tpu.dot_dimension_numbers<[1], [0], [0], [1], [0, 0, 1, 1], [], []>} : vector<256x128xf32>, vector<128x128xf32>, vector<256x128xf32> -> vector<256x128xf32>
    %182 = arith.addf %178, %181 : vector<256x128xf32>
    %c0_94 = arith.constant 0 : index
    %c0_95 = arith.constant 0 : index
    %183 = vector.load %arg12[%c0_94, %c0_95] : memref<256x128xf32, #tpu.memory_space<vmem>>, vector<256x128xf32>
    tpu.vector_store %arg12[%c0_94, %c0_95], %182 {strides = array<i32>} : memref<256x128xf32, #tpu.memory_space<vmem>>, vector<256x128xf32>,
    %c0_i32_96 = arith.constant 0 : i32
    %184 = arith.cmpi eq, %arg1, %c0_i32_96 : i32
    %185 = arith.extui %184 : i1 to i32
    %c0_i32_97 = arith.constant 0 : i32
    %186 = arith.cmpi ne, %185, %c0_i32_97 : i32
    scf.if %186 {
      %c0_98 = arith.constant 0 : index
      %c0_99 = arith.constant 0 : index
      %187 = vector.load %arg12[%c0_98, %c0_99] : memref<256x128xf32, #tpu.memory_space<vmem>>, vector<256x128xf32>
      %c0_100 = arith.constant 0 : index
      %c0_101 = arith.constant 0 : index
      %188 = vector.load %arg8[%c0_100, %c0_101] : memref<1x128xf32, #tpu.memory_space<vmem>>, vector<1x128xf32>
      %189 = vector.broadcast %188 : vector<1x128xf32> to vector<256x128xf32>
      %190 = arith.addf %187, %189 : vector<256x128xf32>
      %c0_102 = arith.constant 0 : index
      %c0_103 = arith.constant 0 : index
      %c0_104 = arith.constant 0 : index
      %191 = vector.load %arg9[%c0_102, %c0_103, %c0_104] : memref<1x256x128xf32, #tpu.memory_space<vmem>>, vector<1x256x128xf32>
      %192 = vector.shape_cast %191 : vector<1x256x128xf32> to vector<256x128xf32>
      %193 = vector.shape_cast %190 : vector<256x128xf32> to vector<1x256x128xf32>
      tpu.vector_store %arg9[%c0_102, %c0_103, %c0_104], %193 {strides = array<i32>} : memref<1x256x128xf32, #tpu.memory_space<vmem>>, vector<1x256x128xf32>,
    } else {
    }
    return
  }
  func.func @transform_0(%arg0: i32, %arg1: i32) -> (i32, i32, i32, i32) {
    %c0_i32 = arith.constant 0 : i32
    %c0_i32_0 = arith.constant 0 : i32
    %c0_i32_1 = arith.constant 0 : i32
    %c0_i32_2 = arith.constant 0 : i32
    return %arg0, %c0_i32, %c0_i32_0, %c0_i32_1 : i32, i32, i32, i32
  }
  func.func @transform_1(%arg0: i32, %arg1: i32) -> (i32, i32) {
    %c0_i32 = arith.constant 0 : i32
    %c0_i32_0 = arith.constant 0 : i32
    return %c0_i32, %arg1 : i32, i32
  }
  func.func @transform_2(%arg0: i32, %arg1: i32) -> (i32, i32) {
    %c0_i32 = arith.constant 0 : i32
    %c0_i32_0 = arith.constant 0 : i32
    return %c0_i32, %arg1 : i32, i32
  }
  func.func @transform_3(%arg0: i32, %arg1: i32) -> (i32, i32) {
    %c0_i32 = arith.constant 0 : i32
    %c0_i32_0 = arith.constant 0 : i32
    return %c0_i32, %arg1 : i32, i32
  }
  func.func @transform_4(%arg0: i32, %arg1: i32) -> (i32, i32) {
    %c0_i32 = arith.constant 0 : i32
    %c0_i32_0 = arith.constant 0 : i32
    return %c0_i32, %arg1 : i32, i32
  }
  func.func @transform_5(%arg0: i32, %arg1: i32) -> (i32, i32) {
    %c0_i32 = arith.constant 0 : i32
    %c0_i32_0 = arith.constant 0 : i32
    return %arg1, %c0_i32 : i32, i32
  }
  func.func @transform_6(%arg0: i32, %arg1: i32) -> (i32, i32) {
    %c0_i32 = arith.constant 0 : i32
    %c0_i32_0 = arith.constant 0 : i32
    %c0_i32_1 = arith.constant 0 : i32
    return %c0_i32, %c0_i32_0 : i32, i32
  }
  func.func @transform_7(%arg0: i32, %arg1: i32) -> (i32, i32, i32) {
    %c0_i32 = arith.constant 0 : i32
    %c0_i32_0 = arith.constant 0 : i32
    %c0_i32_1 = arith.constant 0 : i32
    return %arg0, %c0_i32, %c0_i32_0 : i32, i32, i32
  }
}

</mosaic_0001>

<llo_original>
// kernel: tpu_custom_call.1
$region0: #{tpu_custom_call.1}
  #allocation0 [shape = 'u32[]', space=smem, size = 0x4, offset = 0x4, fixed_abs, tag = 'smem constant byte address 0x4 - core index']
  #allocation1 [shape = 'u32[72,128]{1,0:T(1,128)}', space=vmem, size = 0x9000, scoped, tag = 'internal scratch']
  #allocation2 [shape = 'f32[18,18,128]{2,1,0:T(8,128)}', space=vmem, size = 0x36000, scoped, tag = 'scratch operand']
  #allocation3 [shape = 'f32[16,20,128]{2,1,0:T(8,128)}', space=vmem, size = 0x30000, scoped, tag = 'scratch operand']
  #allocation4 [shape = 'f32[256,128]{1,0:T(8,128)}', space=vmem, size = 0x20000, scoped, tag = 'scratch operand']
  %s0 = inlined_call_operand.hbm [shape: f32[2,20,16,128], index: 0, kind: input, shape index: {}]
  %s1 = inlined_call_operand.hbm [shape: f32[128,128], index: 1, kind: input, shape index: {}]
  %s2 = inlined_call_operand.vmem [shape: f32[1,128], index: 2, kind: input, shape index: {}]
  %s3 = inlined_call_operand.hbm [shape: f32[9,128], index: 3, kind: input, shape index: {}]
  %s4 = inlined_call_operand.vmem [shape: f32[1,128], index: 4, kind: input, shape index: {}]
  %s5 = inlined_call_operand.hbm [shape: f32[128,128], index: 5, kind: input, shape index: {}]
  %s6 = inlined_call_operand.vmem [shape: f32[1,128], index: 6, kind: input, shape index: {}]
  %s7 = inlined_call_operand.hbm [shape: f32[2,256,128], index: 7, kind: output, shape index: {}]
  %s8 = sld [smem:[#allocation0]]
  $region85: #{tpu_custom_call.1} parent=0
    _
  %s10 = ssub.s32 1, %s8
  %s11 = scalar_select 0, %s10, %s8
  $region1: #{tpu_custom_call.1} parent=0
    #allocation5 [shape = 'u8[327680]{0}', space=vmem, size = 0x50000, scoped, tag = 'input window, operand 0']
    #allocation6 [shape = 's32[2]{0}', space=sflag, size = 0x8, scoped, tag = 'scoped memory for tpu_custom_call.1']
    #allocation7 [shape = 's32[2]{0}', space=sflag, size = 0x8, scoped, tag = 'scoped memory for tpu_custom_call.1']
    #allocation8 [shape = 'u8[65536]{0}', space=vmem, size = 0x10000, scoped, tag = 'input window, operand 1, single buffered']
    #allocation9 [shape = 's32[1]{0}', space=sflag, size = 0x4, scoped, tag = 'scoped memory for tpu_custom_call.1']
    #allocation10 [shape = 'u8[8192]{0}', space=vmem, size = 0x2000, scoped, tag = 'input window, operand 3, single buffered']
    #allocation11 [shape = 'u8[65536]{0}', space=vmem, size = 0x10000, scoped, tag = 'input window, operand 5, single buffered']
    #allocation12 [shape = 's32[1]{0}', space=sflag, size = 0x4, scoped, tag = 'scoped memory for tpu_custom_call.1']
    #allocation13 [shape = 'u8[262144]{0}', space=vmem, size = 0x40000, scoped, tag = 'output window, operand 0']
    %12 = vsyncpa [#allocation6], 0
    %s13 = scalar_lea.sflag [#allocation6], 1
    %14 = vsyncpa %s13, 0
    %15 = vsyncpa [#allocation9], 0
    %16 = vsyncpa [#allocation12], 0
    %17 = vsyncpa [#allocation7], 0
    %s18 = scalar_lea.sflag [#allocation7], 1
    %19 = vsyncpa %s18, 0
    loop: start=0, step=1, limit=4
    $region2: #{tpu_custom_call.1} parent=1 // loop_pre_header
      _
    $region3: #{tpu_custom_call.1} parent=1 // loop_header
      %s21 = sphi 0, %s25
      %p22 = scmp.ge.s32.totalorder %s21, 4
      %s28 = sphi 0, %s40
      %s29 = sphi 0, %s36
      %s30 = sphi 0, %s28
      %s31 = sphi 0, %s29
      %s32 = sphi 0, %s30
      %s33 = sphi 0, %s31
      %s43 = sphi 0, %s45
      %s46 = sphi 0, %s43
      %s47 = sphi 0, %s46
      %s63 = sphi 0, %s47
      %s69 = sphi 0, %s71
      %s72 = sphi 0, %s69
      %s73 = sphi 0, %s72
      %s89 = sphi 0, %s73
      %s95 = sphi 0, %s97
      %s98 = sphi 0, %s95
      %s99 = sphi 0, %s98
      %s115 = sphi 0, %s99
      %s121 = sphi 0, %s123
      %s124 = sphi 0, %s121
      %s125 = sphi 0, %s124
      %s141 = sphi 0, %s125
      %s147 = sphi 0, %s149
      %s150 = sphi 0, %s147
      %s151 = sphi 0, %s150
      %s167 = sphi 0, %s151
      %s173 = sphi 0, %s175
      %s176 = sphi 0, %s173
      %s177 = sphi 0, %s176
      %s193 = sphi 0, %s177
      %s197 = sphi 0, %s197
      %s199 = sphi 0, %s197
      %s200 = sphi 0, %s199
      %s214 = sphi 0, %s200
      %s220 = sphi 0, %s222
      %s223 = sphi 0, %s220
      %s224 = sphi 0, %s223
      %s240 = sphi 0, %s224
    $region4: #{tpu_custom_call.1} parent=1 // loop_header_branch
      %24 = sbr.rel (%p22) target = $region8
    $region5: #{tpu_custom_call.1} parent=1 // loop_body
      %s26 = ssub.s32 %s21, 1
      %s27 = ssub.s32 %s21, 2
      %s34 = sadd.s32 1, %s29
      %p35 = scmp.ge.s32.totalorder %s34, 1
      %s36 = scalar_select %p35, 0, %s34
      %s37 = sadd.s32 1, %s28
      %s38 = scalar_select %p35, %s37, %s28
      %p39 = scmp.ge.s32.totalorder %s38, 2
      %s40 = scalar_select %p39, 0, %s38
      %s41 = ssub.s32 %s28, %s40
      %p42 = scmp.eq.s32.totalorder %s41, 0
      %s44 = sadd.s32 %s43, 1
      %s45 = scalar_select %p42, %s43, %s44
      %p48 = pneg %p42
      %p49 = scmp.eq.s32.totalorder %s21, 1
      %p50 = por %p48, %p49
      %p51 = scmp.ne.s32.totalorder %s43, %s46
      %p52 = scmp.eq.s32.totalorder %s21, 0
      %p53 = por %p51, %p52
      %p54 = scmp.ne.s32.totalorder %s43, %s46
      %p55 = scmp.eq.s32.totalorder %s26, 1
      %p56 = por %p54, %p55
      %p57 = scmp.ne.s32.totalorder %s46, %s47
      %p58 = scmp.eq.s32.totalorder %s26, 0
      %p59 = por %p57, %p58
      %p60 = scmp.ne.s32.totalorder %s46, %s47
      %p61 = scmp.eq.s32.totalorder %s27, 1
      %p62 = por %p60, %p61
      %p64 = scmp.ne.s32.totalorder %s47, %s63
      %p65 = scmp.eq.s32.totalorder %s27, 0
      %p66 = por %p64, %p65
      %s67 = ssub.s32 %s29, %s36
      %p68 = scmp.eq.s32.totalorder %s67, 0
      %s70 = sadd.s32 %s69, 1
      %s71 = scalar_select %p68, %s69, %s70
      %p74 = pneg %p68
      %p75 = scmp.eq.s32.totalorder %s21, 1
      %p76 = por %p74, %p75
      %p77 = scmp.ne.s32.totalorder %s69, %s72
      %p78 = scmp.eq.s32.totalorder %s21, 0
      %p79 = por %p77, %p78
      %p80 = scmp.ne.s32.totalorder %s69, %s72
      %p81 = scmp.eq.s32.totalorder %s26, 1
      %p82 = por %p80, %p81
      %p83 = scmp.ne.s32.totalorder %s72, %s73
      %p84 = scmp.eq.s32.totalorder %s26, 0
      %p85 = por %p83, %p84
      %p86 = scmp.ne.s32.totalorder %s72, %s73
      %p87 = scmp.eq.s32.totalorder %s27, 1
      %p88 = por %p86, %p87
      %p90 = scmp.ne.s32.totalorder %s73, %s89
      %p91 = scmp.eq.s32.totalorder %s27, 0
      %p92 = por %p90, %p91
      %s93 = ssub.s32 %s29, %s36
      %p94 = scmp.eq.s32.totalorder %s93, 0
      %s96 = sadd.s32 %s95, 1
      %s97 = scalar_select %p94, %s95, %s96
      %p100 = pneg %p94
      %p101 = scmp.eq.s32.totalorder %s21, 1
      %p102 = por %p100, %p101
      %p103 = scmp.ne.s32.totalorder %s95, %s98
      %p104 = scmp.eq.s32.totalorder %s21, 0
      %p105 = por %p103, %p104
      %p106 = scmp.ne.s32.totalorder %s95, %s98
      %p107 = scmp.eq.s32.totalorder %s26, 1
      %p108 = por %p106, %p107
      %p109 = scmp.ne.s32.totalorder %s98, %s99
      %p110 = scmp.eq.s32.totalorder %s26, 0
      %p111 = por %p109, %p110
      %p112 = scmp.ne.s32.totalorder %s98, %s99
      %p113 = scmp.eq.s32.totalorder %s27, 1
      %p114 = por %p112, %p113
      %p116 = scmp.ne.s32.totalorder %s99, %s115
      %p117 = scmp.eq.s32.totalorder %s27, 0
      %p118 = por %p116, %p117
      %s119 = ssub.s32 %s29, %s36
      %p120 = scmp.eq.s32.totalorder %s119, 0
      %s122 = sadd.s32 %s121, 1
      %s123 = scalar_select %p120, %s121, %s122
      %p126 = pneg %p120
      %p127 = scmp.eq.s32.totalorder %s21, 1
      %p128 = por %p126, %p127
      %p129 = scmp.ne.s32.totalorder %s121, %s124
      %p130 = scmp.eq.s32.totalorder %s21, 0
      %p131 = por %p129, %p130
      %p132 = scmp.ne.s32.totalorder %s121, %s124
      %p133 = scmp.eq.s32.totalorder %s26, 1
      %p134 = por %p132, %p133
      %p135 = scmp.ne.s32.totalorder %s124, %s125
      %p136 = scmp.eq.s32.totalorder %s26, 0
      %p137 = por %p135, %p136
      %p138 = scmp.ne.s32.totalorder %s124, %s125
      %p139 = scmp.eq.s32.totalorder %s27, 1
      %p140 = por %p138, %p139
      %p142 = scmp.ne.s32.totalorder %s125, %s141
      %p143 = scmp.eq.s32.totalorder %s27, 0
      %p144 = por %p142, %p143
      %s145 = ssub.s32 %s29, %s36
      %p146 = scmp.eq.s32.totalorder %s145, 0
      %s148 = sadd.s32 %s147, 1
      %s149 = scalar_select %p146, %s147, %s148
      %p152 = pneg %p146
      %p153 = scmp.eq.s32.totalorder %s21, 1
      %p154 = por %p152, %p153
      %p155 = scmp.ne.s32.totalorder %s147, %s150
      %p156 = scmp.eq.s32.totalorder %s21, 0
      %p157 = por %p155, %p156
      %p158 = scmp.ne.s32.totalorder %s147, %s150
      %p159 = scmp.eq.s32.totalorder %s26, 1
      %p160 = por %p158, %p159
      %p161 = scmp.ne.s32.totalorder %s150, %s151
      %p162 = scmp.eq.s32.totalorder %s26, 0
      %p163 = por %p161, %p162
      %p164 = scmp.ne.s32.totalorder %s150, %s151
      %p165 = scmp.eq.s32.totalorder %s27, 1
      %p166 = por %p164, %p165
      %p168 = scmp.ne.s32.totalorder %s151, %s167
      %p169 = scmp.eq.s32.totalorder %s27, 0
      %p170 = por %p168, %p169
      %s171 = ssub.s32 %s29, %s36
      %p172 = scmp.eq.s32.totalorder %s171, 0
      %s174 = sadd.s32 %s173, 1
      %s175 = scalar_select %p172, %s173, %s174
      %p178 = pneg %p172
      %p179 = scmp.eq.s32.totalorder %s21, 1
      %p180 = por %p178, %p179
      %p181 = scmp.ne.s32.totalorder %s173, %s176
      %p182 = scmp.eq.s32.totalorder %s21, 0
      %p183 = por %p181, %p182
      %p184 = scmp.ne.s32.totalorder %s173, %s176
      %p185 = scmp.eq.s32.totalorder %s26, 1
      %p186 = por %p184, %p185
      %p187 = scmp.ne.s32.totalorder %s176, %s177
      %p188 = scmp.eq.s32.totalorder %s26, 0
      %p189 = por %p187, %p188
      %p190 = scmp.ne.s32.totalorder %s176, %s177
      %p191 = scmp.eq.s32.totalorder %s27, 1
      %p192 = por %p190, %p191
      %p194 = scmp.ne.s32.totalorder %s177, %s193
      %p195 = scmp.eq.s32.totalorder %s27, 0
      %p196 = por %p194, %p195
      %s198 = sadd.s32 %s197, 1
      %p201 = scmp.eq.s32.totalorder %s21, 1
      %p202 = scmp.ne.s32.totalorder %s197, %s199
      %p203 = scmp.eq.s32.totalorder %s21, 0
      %p204 = por %p202, %p203
      %p205 = scmp.ne.s32.totalorder %s197, %s199
      %p206 = scmp.eq.s32.totalorder %s26, 1
      %p207 = por %p205, %p206
      %p208 = scmp.ne.s32.totalorder %s199, %s200
      %p209 = scmp.eq.s32.totalorder %s26, 0
      %p210 = por %p208, %p209
      %p211 = scmp.ne.s32.totalorder %s199, %s200
      %p212 = scmp.eq.s32.totalorder %s27, 1
      %p213 = por %p211, %p212
      %p215 = scmp.ne.s32.totalorder %s200, %s214
      %p216 = scmp.eq.s32.totalorder %s27, 0
      %p217 = por %p215, %p216
      %s218 = ssub.s32 %s28, %s40
      %p219 = scmp.eq.s32.totalorder %s218, 0
      %s221 = sadd.s32 %s220, 1
      %s222 = scalar_select %p219, %s220, %s221
      %p225 = pneg %p219
      %p226 = scmp.eq.s32.totalorder %s21, 1
      %p227 = por %p225, %p226
      %p228 = scmp.ne.s32.totalorder %s220, %s223
      %p229 = scmp.eq.s32.totalorder %s21, 0
      %p230 = por %p228, %p229
      %p231 = scmp.ne.s32.totalorder %s220, %s223
      %p232 = scmp.eq.s32.totalorder %s26, 1
      %p233 = por %p231, %p232
      %p234 = scmp.ne.s32.totalorder %s223, %s224
      %p235 = scmp.eq.s32.totalorder %s26, 0
      %p236 = por %p234, %p235
      %p237 = scmp.ne.s32.totalorder %s223, %s224
      %p238 = scmp.eq.s32.totalorder %s27, 1
      %p239 = por %p237, %p238
      %p241 = scmp.ne.s32.totalorder %s224, %s240
      %p242 = scmp.eq.s32.totalorder %s27, 0
      %p243 = por %p241, %p242
      %p244 = scmp.le.s32.totalorder 1, %s21
      %p245 = scmp.lt.s32.totalorder %s21, 3
      %p246 = pnand %p244, %p245
      %p247 = pneg %p246
      // Predicated region
      $region9: #{tpu_custom_call.1} parent=5 // pred_check
        _
      $region10: #{tpu_custom_call.1} parent=5 // pred_check_branch
        %249 = sbr.rel (%p246) target = $region12
      $region11: #{tpu_custom_call.1} parent=5 // pred_region
        %s250 = ssub.s32 %s21, 1
        // Predicated region
        $region13: #{tpu_custom_call.1} parent=11 // pred_check
          %p251 = pneg %p85
        $region14: #{tpu_custom_call.1} parent=11 // pred_check_branch
          %253 = sbr.rel (%p251) target = $region16
        $region15: #{tpu_custom_call.1} parent=11 // pred_region
          %255 = vsyncadd [#allocation9], 0
          %s256 = smul.addr %s31, 8
          %s257 = scalar_lea.hbm %s1, %s256
          %s258 = sshll.u32 %s257, 4
          %s259 = int_to_ptr.hbm [resolvable:$true] %s258
          %s260 = sshll.u32 [#allocation8], 4
          %s261 = int_to_ptr.vmem [resolvable:$true] %s260
          %266 = dma.hbm_to_vmem [thread:$0]  %s259, 2048, %s261, [#allocation9], 128, 128, 8
        $region16: #{tpu_custom_call.1} parent=11 // pred_fallthru
          _
        // Predicated region
        $region17: #{tpu_custom_call.1} parent=11 // pred_check
          %p267 = pneg %p111
        $region18: #{tpu_custom_call.1} parent=11 // pred_check_branch
          %269 = sbr.rel (%p267) target = $region20
        $region19: #{tpu_custom_call.1} parent=11 // pred_region
          %p270 = scmp.lt.s32.totalorder %s31, 0
          %s271 = scalar_select %p270, %s31, 0
          %s272 = scalar_lea.vmem %s2, %s271
        $region20: #{tpu_custom_call.1} parent=11 // pred_fallthru
          _
        // Predicated region
        $region21: #{tpu_custom_call.1} parent=11 // pred_check
          %p273 = pneg %p137
        $region22: #{tpu_custom_call.1} parent=11 // pred_check_branch
          %275 = sbr.rel (%p273) target = $region24
        $region23: #{tpu_custom_call.1} parent=11 // pred_region
          %277 = vsyncadd [#allocation9], 0
          %s278 = smul.addr %s31, 8
          %s279 = scalar_lea.hbm %s3, %s278
          %s280 = sshll.u32 %s279, 4
          %s281 = int_to_ptr.hbm [resolvable:$true] %s280
          %s282 = sshll.u32 [#allocation10], 4
          %s283 = int_to_ptr.vmem [resolvable:$true] %s282
          %288 = dma.hbm_to_vmem [thread:$0]  %s281, 256, %s283, [#allocation9], 128, 128, 8
        $region24: #{tpu_custom_call.1} parent=11 // pred_fallthru
          _
        // Predicated region
        $region25: #{tpu_custom_call.1} parent=11 // pred_check
          %p289 = pneg %p163
        $region26: #{tpu_custom_call.1} parent=11 // pred_check_branch
          %291 = sbr.rel (%p289) target = $region28
        $region27: #{tpu_custom_call.1} parent=11 // pred_region
          %p292 = scmp.lt.s32.totalorder %s31, 0
          %s293 = scalar_select %p292, %s31, 0
          %s294 = scalar_lea.vmem %s4, %s293
        $region28: #{tpu_custom_call.1} parent=11 // pred_fallthru
          _
        // Predicated region
        $region29: #{tpu_custom_call.1} parent=11 // pred_check
          %p295 = pneg %p189
        $region30: #{tpu_custom_call.1} parent=11 // pred_check_branch
          %297 = sbr.rel (%p295) target = $region32
        $region31: #{tpu_custom_call.1} parent=11 // pred_region
          %s298 = smul.u32 16, %s31
          %300 = vsyncadd [#allocation12], 0
          %s301 = smul.addr %s298, 8
          %s302 = scalar_lea.hbm %s5, %s301
          %s303 = sshll.u32 %s302, 4
          %s304 = int_to_ptr.hbm [resolvable:$true] %s303
          %s305 = sshll.u32 [#allocation11], 4
          %s306 = int_to_ptr.vmem [resolvable:$true] %s305
          %311 = dma.hbm_to_vmem [thread:$0]  %s304, 2048, %s306, [#allocation12], 128, 128, 8
        $region32: #{tpu_custom_call.1} parent=11 // pred_fallthru
          _
        // Predicated region
        $region33: #{tpu_custom_call.1} parent=11 // pred_check
          %p312 = pneg %p210
        $region34: #{tpu_custom_call.1} parent=11 // pred_check_branch
          %314 = sbr.rel (%p312) target = $region36
        $region35: #{tpu_custom_call.1} parent=11 // pred_region
          _
        $region36: #{tpu_custom_call.1} parent=11 // pred_fallthru
          _
      $region12: #{tpu_custom_call.1} parent=5 // pred_fallthru
        _
      %p315 = scmp.lt.s32.totalorder %s21, 2
      // Predicated region
      $region37: #{tpu_custom_call.1} parent=5 // pred_check
        %p316 = pneg %p315
      $region38: #{tpu_custom_call.1} parent=5 // pred_check_branch
        %318 = sbr.rel (%p316) target = $region40
      $region39: #{tpu_custom_call.1} parent=5 // pred_region
        // Predicated region
        $region41: #{tpu_custom_call.1} parent=39 // pred_check
          %p319 = pneg %p53
        $region42: #{tpu_custom_call.1} parent=39 // pred_check_branch
          %321 = sbr.rel (%p319) target = $region44
        $region43: #{tpu_custom_call.1} parent=39 // pred_region
          %s322 = sand.u32 %s43, 1
          %s323 = scalar_lea.sflag [#allocation6], %s322
          %s324 = sand.u32 %s43, 1
          %s325 = smul.addr %s324, 320
          %s326 = scalar_lea.vmem [#allocation5], %s325
          %328 = vsyncadd %s323, 0
          %s329 = smul.addr %s28, 40
          %s330 = smul.addr %s329, 8
          %s331 = scalar_lea.hbm %s0, %s330
          %s332 = sshll.u32 %s331, 4
          %s333 = int_to_ptr.hbm [resolvable:$true] %s332
          %s334 = sshll.u32 %s326, 4
          %s335 = int_to_ptr.vmem [resolvable:$true] %s334
          %340 = dma.hbm_to_vmem [thread:$0]  %s333, 5120, %s335, %s323, 128, 128, 8
        $region44: #{tpu_custom_call.1} parent=39 // pred_fallthru
          _
      $region40: #{tpu_custom_call.1} parent=5 // pred_fallthru
        _
      %p341 = scmp.le.s32.totalorder 1, %s21
      %p342 = scmp.lt.s32.totalorder %s21, 3
      %p343 = pnand %p341, %p342
      %p344 = pneg %p343
      // Predicated region
      $region45: #{tpu_custom_call.1} parent=5 // pred_check
        _
      $region46: #{tpu_custom_call.1} parent=5 // pred_check_branch
        %346 = sbr.rel (%p343) target = $region48
      $region47: #{tpu_custom_call.1} parent=5 // pred_region
        %s347 = ssub.s32 %s21, 1
        %s348 = sand.u32 %s46, 1
        %s349 = scalar_lea.sflag [#allocation6], %s348
        %s350 = sand.u32 %s46, 1
        %s351 = smul.addr %s350, 320
        %s352 = scalar_lea.vmem [#allocation5], %s351
        // Predicated region
        $region49: #{tpu_custom_call.1} parent=47 // pred_check
          %p353 = pneg %p59
        $region50: #{tpu_custom_call.1} parent=47 // pred_check_branch
          %355 = sbr.rel (%p353) target = $region52
        $region51: #{tpu_custom_call.1} parent=47 // pred_region
          %357 = dma.done %s349, 5120
        $region52: #{tpu_custom_call.1} parent=47 // pred_fallthru
          _
        // Predicated region
        $region53: #{tpu_custom_call.1} parent=47 // pred_check
          %p358 = pneg %p85
        $region54: #{tpu_custom_call.1} parent=47 // pred_check_branch
          %360 = sbr.rel (%p358) target = $region56
        $region55: #{tpu_custom_call.1} parent=47 // pred_region
          %362 = dma.done [#allocation9], 2048
        $region56: #{tpu_custom_call.1} parent=47 // pred_fallthru
          _
        // Predicated region
        $region57: #{tpu_custom_call.1} parent=47 // pred_check
          %p363 = pneg %p137
        $region58: #{tpu_custom_call.1} parent=47 // pred_check_branch
          %365 = sbr.rel (%p363) target = $region60
        $region59: #{tpu_custom_call.1} parent=47 // pred_region
          %367 = dma.done [#allocation9], 256
        $region60: #{tpu_custom_call.1} parent=47 // pred_fallthru
          _
        // Predicated region
        $region61: #{tpu_custom_call.1} parent=47 // pred_check
          %p368 = pneg %p189
        $region62: #{tpu_custom_call.1} parent=47 // pred_check_branch
          %370 = sbr.rel (%p368) target = $region64
        $region63: #{tpu_custom_call.1} parent=47 // pred_region
          %372 = dma.done [#allocation12], 2048
        $region64: #{tpu_custom_call.1} parent=47 // pred_fallthru
          _
        %s373 = sand.u32 %s46, 1
        %s374 = scalar_lea.sflag [#allocation6], %s373
        %s375 = sand.u32 %s46, 1
        %s376 = smul.addr %s375, 320
        %s377 = scalar_lea.vmem [#allocation5], %s376
        %p378 = pneg %p59
        %p379 = pneg %p56
        %p380 = pneg %p85
        %p381 = pneg %p82
        %p382 = scmp.lt.s32.totalorder %s31, 0
        %s383 = scalar_select %p382, %s31, 0
        %s384 = scalar_lea.vmem %s2, %s383
        %p385 = pneg %p111
        %p386 = pneg %p108
        %p387 = pneg %p137
        %p388 = pneg %p134
        %p389 = scmp.lt.s32.totalorder %s31, 0
        %s390 = scalar_select %p389, %s31, 0
        %s391 = scalar_lea.vmem %s4, %s390
        %p392 = pneg %p163
        %p393 = pneg %p160
        %p394 = pneg %p189
        %p395 = pneg %p186
        %p396 = pneg %p210
        %p397 = pneg %p207
        %p398 = pneg %p236
        %p399 = pneg %p233
        %s400 = sand.u32 %s223, 1
        %s401 = scalar_lea.sflag [#allocation7], %s400
        %s402 = sand.u32 %s223, 1
        %s403 = smul.addr %s402, 256
        %s404 = scalar_lea.vmem [#allocation13], %s403
        %p405 = scmp.lt.s32.totalorder %s31, 0
        %s406 = scalar_select %p405, %s31, 0
        %s407 = scalar_lea.vmem %s2, %s406
        %p408 = scmp.lt.s32.totalorder %s31, 0
        %s409 = scalar_select %p408, %s31, 0
        %s410 = scalar_lea.vmem %s4, %s409
        %s411 = smul.u32 16, %s31
        %p412 = scmp.eq.s32.totalorder %s31, 0
        // Predicated region
        $region65: #{tpu_custom_call.1} parent=47 // pred_check
          %p413 = pneg %p412
        $region66: #{tpu_custom_call.1} parent=47 // pred_check_branch
          %415 = sbr.rel (%p413) target = $region68
        $region67: #{tpu_custom_call.1} parent=47 // pred_region
          %416 = vst [vmem:[#allocation2] sm:$0xff] 0.0
          %417 = vst [vmem:[#allocation2 + $0x8] sm:$0xff] 0.0
          %418 = vst [vmem:[#allocation2 + $0x10] sm:$0x3] 0.0
          %419 = vst [vmem:[#allocation2 + $0x18] sm:$0xff] 0.0
          %420 = vst [vmem:[#allocation2 + $0x20] sm:$0xff] 0.0
          %421 = vst [vmem:[#allocation2 + $0x28] sm:$0x3] 0.0
          %422 = vst [vmem:[#allocation2 + $0x30] sm:$0xff] 0.0
          %423 = vst [vmem:[#allocation2 + $0x38] sm:$0xff] 0.0
          %424 = vst [vmem:[#allocation2 + $0x40] sm:$0x3] 0.0
          %425 = vst [vmem:[#allocation2 + $0x48] sm:$0xff] 0.0
          %426 = vst [vmem:[#allocation2 + $0x50] sm:$0xff] 0.0
          %427 = vst [vmem:[#allocation2 + $0x58] sm:$0x3] 0.0
          %428 = vst [vmem:[#allocation2 + $0x60] sm:$0xff] 0.0
          %429 = vst [vmem:[#allocation2 + $0x68] sm:$0xff] 0.0
          %430 = vst [vmem:[#allocation2 + $0x70] sm:$0x3] 0.0
          %431 = vst [vmem:[#allocation2 + $0x78] sm:$0xff] 0.0
          %432 = vst [vmem:[#allocation2 + $0x80] sm:$0xff] 0.0
          %433 = vst [vmem:[#allocation2 + $0x88] sm:$0x3] 0.0
          %434 = vst [vmem:[#allocation2 + $0x90] sm:$0xff] 0.0
          %435 = vst [vmem:[#allocation2 + $0x98] sm:$0xff] 0.0
          %436 = vst [vmem:[#allocation2 + $0xa0] sm:$0x3] 0.0
          %437 = vst [vmem:[#allocation2 + $0xa8] sm:$0xff] 0.0
          %438 = vst [vmem:[#allocation2 + $0xb0] sm:$0xff] 0.0
          %439 = vst [vmem:[#allocation2 + $0xb8] sm:$0x3] 0.0
          %440 = vst [vmem:[#allocation2 + $0xc0] sm:$0xff] 0.0
          %441 = vst [vmem:[#allocation2 + $0xc8] sm:$0xff] 0.0
          %442 = vst [vmem:[#allocation2 + $0xd0] sm:$0x3] 0.0
          %443 = vst [vmem:[#allocation2 + $0xd8] sm:$0xff] 0.0
          %444 = vst [vmem:[#allocation2 + $0xe0] sm:$0xff] 0.0
          %445 = vst [vmem:[#allocation2 + $0xe8] sm:$0x3] 0.0
          %446 = vst [vmem:[#allocation2 + $0xf0] sm:$0xff] 0.0
          %447 = vst [vmem:[#allocation2 + $0xf8] sm:$0xff] 0.0
          %448 = vst [vmem:[#allocation2 + $0x100] sm:$0x3] 0.0
          %449 = vst [vmem:[#allocation2 + $0x108] sm:$0xff] 0.0
          %450 = vst [vmem:[#allocation2 + $0x110] sm:$0xff] 0.0
          %451 = vst [vmem:[#allocation2 + $0x118] sm:$0x3] 0.0
          %452 = vst [vmem:[#allocation2 + $0x120] sm:$0xff] 0.0
          %453 = vst [vmem:[#allocation2 + $0x128] sm:$0xff] 0.0
          %454 = vst [vmem:[#allocation2 + $0x130] sm:$0x3] 0.0
          %455 = vst [vmem:[#allocation2 + $0x138] sm:$0xff] 0.0
          %456 = vst [vmem:[#allocation2 + $0x140] sm:$0xff] 0.0
          %457 = vst [vmem:[#allocation2 + $0x148] sm:$0x3] 0.0
          %458 = vst [vmem:[#allocation2 + $0x150] sm:$0xff] 0.0
          %459 = vst [vmem:[#allocation2 + $0x158] sm:$0xff] 0.0
          %460 = vst [vmem:[#allocation2 + $0x160] sm:$0x3] 0.0
          %461 = vst [vmem:[#allocation2 + $0x168] sm:$0xff] 0.0
          %462 = vst [vmem:[#allocation2 + $0x170] sm:$0xff] 0.0
          %463 = vst [vmem:[#allocation2 + $0x178] sm:$0x3] 0.0
          %464 = vst [vmem:[#allocation2 + $0x180] sm:$0xff] 0.0
          %465 = vst [vmem:[#allocation2 + $0x188] sm:$0xff] 0.0
          %466 = vst [vmem:[#allocation2 + $0x190] sm:$0x3] 0.0
          %467 = vst [vmem:[#allocation2 + $0x198] sm:$0xff] 0.0
          %468 = vst [vmem:[#allocation2 + $0x1a0] sm:$0xff] 0.0
          %469 = vst [vmem:[#allocation2 + $0x1a8] sm:$0x3] 0.0
          %470 = vst [vmem:[#allocation3] sm:$0xff] 0.0
          %471 = vst [vmem:[#allocation3 + $0x8] sm:$0xff] 0.0
          %472 = vst [vmem:[#allocation3 + $0x10] sm:$0xf] 0.0
          %473 = vst [vmem:[#allocation3 + $0x18] sm:$0xff] 0.0
          %474 = vst [vmem:[#allocation3 + $0x20] sm:$0xff] 0.0
          %475 = vst [vmem:[#allocation3 + $0x28] sm:$0xf] 0.0
          %476 = vst [vmem:[#allocation3 + $0x30] sm:$0xff] 0.0
          %477 = vst [vmem:[#allocation3 + $0x38] sm:$0xff] 0.0
          %478 = vst [vmem:[#allocation3 + $0x40] sm:$0xf] 0.0
          %479 = vst [vmem:[#allocation3 + $0x48] sm:$0xff] 0.0
          %480 = vst [vmem:[#allocation3 + $0x50] sm:$0xff] 0.0
          %481 = vst [vmem:[#allocation3 + $0x58] sm:$0xf] 0.0
          %482 = vst [vmem:[#allocation3 + $0x60] sm:$0xff] 0.0
          %483 = vst [vmem:[#allocation3 + $0x68] sm:$0xff] 0.0
          %484 = vst [vmem:[#allocation3 + $0x70] sm:$0xf] 0.0
          %485 = vst [vmem:[#allocation3 + $0x78] sm:$0xff] 0.0
          %486 = vst [vmem:[#allocation3 + $0x80] sm:$0xff] 0.0
          %487 = vst [vmem:[#allocation3 + $0x88] sm:$0xf] 0.0
          %488 = vst [vmem:[#allocation3 + $0x90] sm:$0xff] 0.0
          %489 = vst [vmem:[#allocation3 + $0x98] sm:$0xff] 0.0
          %490 = vst [vmem:[#allocation3 + $0xa0] sm:$0xf] 0.0
          %491 = vst [vmem:[#allocation3 + $0xa8] sm:$0xff] 0.0
          %492 = vst [vmem:[#allocation3 + $0xb0] sm:$0xff] 0.0
          %493 = vst [vmem:[#allocation3 + $0xb8] sm:$0xf] 0.0
          %494 = vst [vmem:[#allocation3 + $0xc0] sm:$0xff] 0.0
          %495 = vst [vmem:[#allocation3 + $0xc8] sm:$0xff] 0.0
          %496 = vst [vmem:[#allocation3 + $0xd0] sm:$0xf] 0.0
          %497 = vst [vmem:[#allocation3 + $0xd8] sm:$0xff] 0.0
          %498 = vst [vmem:[#allocation3 + $0xe0] sm:$0xff] 0.0
          %499 = vst [vmem:[#allocation3 + $0xe8] sm:$0xf] 0.0
          %500 = vst [vmem:[#allocation3 + $0xf0] sm:$0xff] 0.0
          %501 = vst [vmem:[#allocation3 + $0xf8] sm:$0xff] 0.0
          %502 = vst [vmem:[#allocation3 + $0x100] sm:$0xf] 0.0
          %503 = vst [vmem:[#allocation3 + $0x108] sm:$0xff] 0.0
          %504 = vst [vmem:[#allocation3 + $0x110] sm:$0xff] 0.0
          %505 = vst [vmem:[#allocation3 + $0x118] sm:$0xf] 0.0
          %506 = vst [vmem:[#allocation3 + $0x120] sm:$0xff] 0.0
          %507 = vst [vmem:[#allocation3 + $0x128] sm:$0xff] 0.0
          %508 = vst [vmem:[#allocation3 + $0x130] sm:$0xf] 0.0
          %509 = vst [vmem:[#allocation3 + $0x138] sm:$0xff] 0.0
          %510 = vst [vmem:[#allocation3 + $0x140] sm:$0xff] 0.0
          %511 = vst [vmem:[#allocation3 + $0x148] sm:$0xf] 0.0
          %512 = vst [vmem:[#allocation3 + $0x150] sm:$0xff] 0.0
          %513 = vst [vmem:[#allocation3 + $0x158] sm:$0xff] 0.0
          %514 = vst [vmem:[#allocation3 + $0x160] sm:$0xf] 0.0
          %515 = vst [vmem:[#allocation3 + $0x168] sm:$0xff] 0.0
          %516 = vst [vmem:[#allocation3 + $0x170] sm:$0xff] 0.0
          %517 = vst [vmem:[#allocation3 + $0x178] sm:$0xf] 0.0
          %518 = vst [vmem:[#allocation4] sm:$0xff] 0.0
          %519 = vst [vmem:[#allocation4 + $0x8] sm:$0xff] 0.0
          %520 = vst [vmem:[#allocation4 + $0x10] sm:$0xff] 0.0
          %521 = vst [vmem:[#allocation4 + $0x18] sm:$0xff] 0.0
          %522 = vst [vmem:[#allocation4 + $0x20] sm:$0xff] 0.0
          %523 = vst [vmem:[#allocation4 + $0x28] sm:$0xff] 0.0
          %524 = vst [vmem:[#allocation4 + $0x30] sm:$0xff] 0.0
          %525 = vst [vmem:[#allocation4 + $0x38] sm:$0xff] 0.0
          %526 = vst [vmem:[#allocation4 + $0x40] sm:$0xff] 0.0
          %527 = vst [vmem:[#allocation4 + $0x48] sm:$0xff] 0.0
          %528 = vst [vmem:[#allocation4 + $0x50] sm:$0xff] 0.0
          %529 = vst [vmem:[#allocation4 + $0x58] sm:$0xff] 0.0
          %530 = vst [vmem:[#allocation4 + $0x60] sm:$0xff] 0.0
          %531 = vst [vmem:[#allocation4 + $0x68] sm:$0xff] 0.0
          %532 = vst [vmem:[#allocation4 + $0x70] sm:$0xff] 0.0
          %533 = vst [vmem:[#allocation4 + $0x78] sm:$0xff] 0.0
          %534 = vst [vmem:[#allocation4 + $0x80] sm:$0xff] 0.0
          %535 = vst [vmem:[#allocation4 + $0x88] sm:$0xff] 0.0
          %536 = vst [vmem:[#allocation4 + $0x90] sm:$0xff] 0.0
          %537 = vst [vmem:[#allocation4 + $0x98] sm:$0xff] 0.0
          %538 = vst [vmem:[#allocation4 + $0xa0] sm:$0xff] 0.0
          %539 = vst [vmem:[#allocation4 + $0xa8] sm:$0xff] 0.0
          %540 = vst [vmem:[#allocation4 + $0xb0] sm:$0xff] 0.0
          %541 = vst [vmem:[#allocation4 + $0xb8] sm:$0xff] 0.0
          %542 = vst [vmem:[#allocation4 + $0xc0] sm:$0xff] 0.0
          %543 = vst [vmem:[#allocation4 + $0xc8] sm:$0xff] 0.0
          %544 = vst [vmem:[#allocation4 + $0xd0] sm:$0xff] 0.0
          %545 = vst [vmem:[#allocation4 + $0xd8] sm:$0xff] 0.0
          %546 = vst [vmem:[#allocation4 + $0xe0] sm:$0xff] 0.0
          %547 = vst [vmem:[#allocation4 + $0xe8] sm:$0xff] 0.0
          %548 = vst [vmem:[#allocation4 + $0xf0] sm:$0xff] 0.0
          %549 = vst [vmem:[#allocation4 + $0xf8] sm:$0xff] 0.0
        $region68: #{tpu_custom_call.1} parent=47 // pred_fallthru
          _
        %v550 = vld [vmem:[%s352] sm:$0xff]
        %v551 = vld [vmem:[%s352 + $0x8] sm:$0xff]
        %v552 = vld [vmem:[%s352 + $0x10] sm:$0xff]
        %v553 = vld [vmem:[%s352 + $0x18] sm:$0xff]
        %v554 = vld [vmem:[%s352 + $0x20] sm:$0xff]
        %v555 = vld [vmem:[%s352 + $0x28] sm:$0xff]
        %v556 = vld [vmem:[%s352 + $0x30] sm:$0xff]
        %v557 = vld [vmem:[%s352 + $0x38] sm:$0xff]
        %v558 = vld [vmem:[%s352 + $0x40] sm:$0xff]
        %v559 = vld [vmem:[%s352 + $0x48] sm:$0xff]
        %v560 = vld [vmem:[%s352 + $0x50] sm:$0xff]
        %v561 = vld [vmem:[%s352 + $0x58] sm:$0xff]
        %v562 = vld [vmem:[%s352 + $0x60] sm:$0xff]
        %v563 = vld [vmem:[%s352 + $0x68] sm:$0xff]
        %v564 = vld [vmem:[%s352 + $0x70] sm:$0xff]
        %v565 = vld [vmem:[%s352 + $0x78] sm:$0xff]
        %v566 = vld [vmem:[%s352 + $0x80] sm:$0xff]
        %v567 = vld [vmem:[%s352 + $0x88] sm:$0xff]
        %v568 = vld [vmem:[%s352 + $0x90] sm:$0xff]
        %v569 = vld [vmem:[%s352 + $0x98] sm:$0xff]
        %v570 = vld [vmem:[%s352 + $0xa0] sm:$0xff]
        %v571 = vld [vmem:[%s352 + $0xa8] sm:$0xff]
        %v572 = vld [vmem:[%s352 + $0xb0] sm:$0xff]
        %v573 = vld [vmem:[%s352 + $0xb8] sm:$0xff]
        %v574 = vld [vmem:[%s352 + $0xc0] sm:$0xff]
        %v575 = vld [vmem:[%s352 + $0xc8] sm:$0xff]
        %v576 = vld [vmem:[%s352 + $0xd0] sm:$0xff]
        %v577 = vld [vmem:[%s352 + $0xd8] sm:$0xff]
        %v578 = vld [vmem:[%s352 + $0xe0] sm:$0xff]
        %v579 = vld [vmem:[%s352 + $0xe8] sm:$0xff]
        %v580 = vld [vmem:[%s352 + $0xf0] sm:$0xff]
        %v581 = vld [vmem:[%s352 + $0xf8] sm:$0xff]
        %v582 = vld [vmem:[%s352 + $0x100] sm:$0xff]
        %v583 = vld [vmem:[%s352 + $0x108] sm:$0xff]
        %v584 = vld [vmem:[%s352 + $0x110] sm:$0xff]
        %v585 = vld [vmem:[%s352 + $0x118] sm:$0xff]
        %v586 = vld [vmem:[%s352 + $0x120] sm:$0xff]
        %v587 = vld [vmem:[%s352 + $0x128] sm:$0xff]
        %v588 = vld [vmem:[%s352 + $0x130] sm:$0xff]
        %v589 = vld [vmem:[%s352 + $0x138] sm:$0xff]
        %v590 = vlaneseq
        %v591 = vand.u32 %v590, 127
        %vm592 = vcmp.ge.s32.totalorder %v591, 0
        %vm593 = vcmp.lt.s32.totalorder %v591, 4
        %vm594 = vmand %vm592, %vm593
        %v595 = vsel %vm594, 1, 0
        %vm596 = vcmp.eq.s32.totalorder %v595, 1
        %v597 = vsel %vm596, %v558, 0.0
        %v598 = vsel %vm596, %v559, 0.0
        %v599 = vsel %vm596, %v560, 0.0
        %v600 = vsel %vm596, %v561, 0.0
        %v601 = vsel %vm596, %v562, 0.0
        %v602 = vsel %vm596, %v563, 0.0
        %v603 = vsel %vm596, %v564, 0.0
        %v604 = vsel %vm596, %v565, 0.0
        %v605 = vsel %vm596, %v566, 0.0
        %v606 = vsel %vm596, %v567, 0.0
        %v607 = vsel %vm596, %v568, 0.0
        %v608 = vsel %vm596, %v569, 0.0
        %v609 = vsel %vm596, %v570, 0.0
        %v610 = vsel %vm596, %v571, 0.0
        %v611 = vsel %vm596, %v572, 0.0
        %v612 = vsel %vm596, %v573, 0.0
        %v613 = vsel %vm596, %v574, 0.0
        %v614 = vsel %vm596, %v575, 0.0
        %v615 = vsel %vm596, %v576, 0.0
        %v616 = vsel %vm596, %v577, 0.0
        %v617 = vsel %vm596, %v578, 0.0
        %v618 = vsel %vm596, %v579, 0.0
        %v619 = vsel %vm596, %v580, 0.0
        %v620 = vsel %vm596, %v581, 0.0
        %v621 = vsel %vm596, %v582, 0.0
        %v622 = vsel %vm596, %v583, 0.0
        %v623 = vsel %vm596, %v584, 0.0
        %v624 = vsel %vm596, %v585, 0.0
        %v625 = vsel %vm596, %v586, 0.0
        %v626 = vsel %vm596, %v587, 0.0
        %v627 = vsel %vm596, %v588, 0.0
        %v628 = vsel %vm596, %v589, 0.0
        %vm629 = vcmp.ge.s32.totalorder %v591, 4
        %vm630 = vcmp.lt.s32.totalorder %v591, 8
        %vm631 = vmand %vm629, %vm630
        %v632 = vsel %vm631, 1, 0
        %vm633 = vcmp.eq.s32.totalorder %v632, 1
        %v634 = vsel %vm633, %v556, %v597
        %v635 = vsel %vm633, %v557, %v598
        %v636 = vsel %vm633, %v558, %v599
        %v637 = vsel %vm633, %v559, %v600
        %v638 = vsel %vm633, %v560, %v601
        %v639 = vsel %vm633, %v561, %v602
        %v640 = vsel %vm633, %v562, %v603
        %v641 = vsel %vm633, %v563, %v604
        %v642 = vsel %vm633, %v564, %v605
        %v643 = vsel %vm633, %v565, %v606
        %v644 = vsel %vm633, %v566, %v607
        %v645 = vsel %vm633, %v567, %v608
        %v646 = vsel %vm633, %v568, %v609
        %v647 = vsel %vm633, %v569, %v610
        %v648 = vsel %vm633, %v570, %v611
        %v649 = vsel %vm633, %v571, %v612
        %v650 = vsel %vm633, %v572, %v613
        %v651 = vsel %vm633, %v573, %v614
        %v652 = vsel %vm633, %v574, %v615
        %v653 = vsel %vm633, %v575, %v616
        %v654 = vsel %vm633, %v576, %v617
        %v655 = vsel %vm633, %v577, %v618
        %v656 = vsel %vm633, %v578, %v619
        %v657 = vsel %vm633, %v579, %v620
        %v658 = vsel %vm633, %v580, %v621
        %v659 = vsel %vm633, %v581, %v622
        %v660 = vsel %vm633, %v582, %v623
        %v661 = vsel %vm633, %v583, %v624
        %v662 = vsel %vm633, %v584, %v625
        %v663 = vsel %vm633, %v585, %v626
        %v664 = vsel %vm633, %v586, %v627
        %v665 = vsel %vm633, %v587, %v628
        %vm666 = vcmp.ge.s32.totalorder %v591, 8
        %vm667 = vcmp.lt.s32.totalorder %v591, 12
        %vm668 = vmand %vm666, %vm667
        %v669 = vsel %vm668, 1, 0
        %vm670 = vcmp.eq.s32.totalorder %v669, 1
        %v671 = vsel %vm670, %v554, %v634
        %v672 = vsel %vm670, %v555, %v635
        %v673 = vsel %vm670, %v556, %v636
        %v674 = vsel %vm670, %v557, %v637
        %v675 = vsel %vm670, %v558, %v638
        %v676 = vsel %vm670, %v559, %v639
        %v677 = vsel %vm670, %v560, %v640
        %v678 = vsel %vm670, %v561, %v641
        %v679 = vsel %vm670, %v562, %v642
        %v680 = vsel %vm670, %v563, %v643
        %v681 = vsel %vm670, %v564, %v644
        %v682 = vsel %vm670, %v565, %v645
        %v683 = vsel %vm670, %v566, %v646
        %v684 = vsel %vm670, %v567, %v647
        %v685 = vsel %vm670, %v568, %v648
        %v686 = vsel %vm670, %v569, %v649
        %v687 = vsel %vm670, %v570, %v650
        %v688 = vsel %vm670, %v571, %v651
        %v689 = vsel %vm670, %v572, %v652
        %v690 = vsel %vm670, %v573, %v653
        %v691 = vsel %vm670, %v574, %v654
        %v692 = vsel %vm670, %v575, %v655
        %v693 = vsel %vm670, %v576, %v656
        %v694 = vsel %vm670, %v577, %v657
        %v695 = vsel %vm670, %v578, %v658
        %v696 = vsel %vm670, %v579, %v659
        %v697 = vsel %vm670, %v580, %v660
        %v698 = vsel %vm670, %v581, %v661
        %v699 = vsel %vm670, %v582, %v662
        %v700 = vsel %vm670, %v583, %v663
        %v701 = vsel %vm670, %v584, %v664
        %v702 = vsel %vm670, %v585, %v665
        %vm703 = vcmp.ge.s32.totalorder %v591, 12
        %vm704 = vcmp.lt.s32.totalorder %v591, 16
        %vm705 = vmand %vm703, %vm704
        %v706 = vsel %vm705, 1, 0
        %vm707 = vcmp.eq.s32.totalorder %v706, 1
        %v708 = vsel %vm707, %v552, %v671
        %v709 = vsel %vm707, %v553, %v672
        %v710 = vsel %vm707, %v554, %v673
        %v711 = vsel %vm707, %v555, %v674
        %v712 = vsel %vm707, %v556, %v675
        %v713 = vsel %vm707, %v557, %v676
        %v714 = vsel %vm707, %v558, %v677
        %v715 = vsel %vm707, %v559, %v678
        %v716 = vsel %vm707, %v560, %v679
        %v717 = vsel %vm707, %v561, %v680
        %v718 = vsel %vm707, %v562, %v681
        %v719 = vsel %vm707, %v563, %v682
        %v720 = vsel %vm707, %v564, %v683
        %v721 = vsel %vm707, %v565, %v684
        %v722 = vsel %vm707, %v566, %v685
        %v723 = vsel %vm707, %v567, %v686
        %v724 = vsel %vm707, %v568, %v687
        %v725 = vsel %vm707, %v569, %v688
        %v726 = vsel %vm707, %v570, %v689
        %v727 = vsel %vm707, %v571, %v690
        %v728 = vsel %vm707, %v572, %v691
        %v729 = vsel %vm707, %v573, %v692
        %v730 = vsel %vm707, %v574, %v693
        %v731 = vsel %vm707, %v575, %v694
        %v732 = vsel %vm707, %v576, %v695
        %v733 = vsel %vm707, %v577, %v696
        %v734 = vsel %vm707, %v578, %v697
        %v735 = vsel %vm707, %v579, %v698
        %v736 = vsel %vm707, %v580, %v699
        %v737 = vsel %vm707, %v581, %v700
        %v738 = vsel %vm707, %v582, %v701
        %v739 = vsel %vm707, %v583, %v702
        %vm740 = vcmp.ge.s32.totalorder %v591, 16
        %vm741 = vcmp.lt.s32.totalorder %v591, 20
        %vm742 = vmand %vm740, %vm741
        %v743 = vsel %vm742, 1, 0
        %vm744 = vcmp.eq.s32.totalorder %v743, 1
        %v745 = vsel %vm744, %v550, %v708
        %v746 = vsel %vm744, %v551, %v709
        %v747 = vsel %vm744, %v552, %v710
        %v748 = vsel %vm744, %v553, %v711
        %v749 = vsel %vm744, %v554, %v712
        %v750 = vsel %vm744, %v555, %v713
        %v751 = vsel %vm744, %v556, %v714
        %v752 = vsel %vm744, %v557, %v715
        %v753 = vsel %vm744, %v558, %v716
        %v754 = vsel %vm744, %v559, %v717
        %v755 = vsel %vm744, %v560, %v718
        %v756 = vsel %vm744, %v561, %v719
        %v757 = vsel %vm744, %v562, %v720
        %v758 = vsel %vm744, %v563, %v721
        %v759 = vsel %vm744, %v564, %v722
        %v760 = vsel %vm744, %v565, %v723
        %v761 = vsel %vm744, %v566, %v724
        %v762 = vsel %vm744, %v567, %v725
        %v763 = vsel %vm744, %v568, %v726
        %v764 = vsel %vm744, %v569, %v727
        %v765 = vsel %vm744, %v570, %v728
        %v766 = vsel %vm744, %v571, %v729
        %v767 = vsel %vm744, %v572, %v730
        %v768 = vsel %vm744, %v573, %v731
        %v769 = vsel %vm744, %v574, %v732
        %v770 = vsel %vm744, %v575, %v733
        %v771 = vsel %vm744, %v576, %v734
        %v772 = vsel %vm744, %v577, %v735
        %v773 = vsel %vm744, %v578, %v736
        %v774 = vsel %vm744, %v579, %v737
        %v775 = vsel %vm744, %v580, %v738
        %v776 = vsel %vm744, %v581, %v739
        %v777 = vld [vmem:[#allocation8] sm:$0xff]
        %v778 = vld [vmem:[#allocation8 + $0x8] sm:$0xff]
        %v779 = vld [vmem:[#allocation8 + $0x10] sm:$0xff]
        %v780 = vld [vmem:[#allocation8 + $0x18] sm:$0xff]
        %v781 = vld [vmem:[#allocation8 + $0x20] sm:$0xff]
        %v782 = vld [vmem:[#allocation8 + $0x28] sm:$0xff]
        %v783 = vld [vmem:[#allocation8 + $0x30] sm:$0xff]
        %v784 = vld [vmem:[#allocation8 + $0x38] sm:$0xff]
        %v785 = vld [vmem:[#allocation8 + $0x40] sm:$0xff]
        %v786 = vld [vmem:[#allocation8 + $0x48] sm:$0xff]
        %v787 = vld [vmem:[#allocation8 + $0x50] sm:$0xff]
        %v788 = vld [vmem:[#allocation8 + $0x58] sm:$0xff]
        %v789 = vld [vmem:[#allocation8 + $0x60] sm:$0xff]
        %v790 = vld [vmem:[#allocation8 + $0x68] sm:$0xff]
        %v791 = vld [vmem:[#allocation8 + $0x70] sm:$0xff]
        %v792 = vld [vmem:[#allocation8 + $0x78] sm:$0xff]
        %v793 = vld [vmem:[%s407] sm:$0x1]
        %v795 = vperm.slane %v793, 0
        %797 = vmatpush.msra.mxu0 %v792
        %798 = vmatpush.msra.mxu0 %v791
        %799 = vmatpush.msra.mxu0 %v790
        %800 = vmatpush.msra.mxu0 %v789
        %801 = vmatpush.msra.mxu0 %v788
        %802 = vmatpush.msra.mxu0 %v787
        %803 = vmatpush.msra.mxu0 %v786
        %804 = vmatpush.msra.mxu0 %v785
        %805 = vmatpush.msra.mxu0 %v784
        %806 = vmatpush.msra.mxu0 %v783
        %807 = vmatpush.msra.mxu0 %v782
        %808 = vmatpush.msra.mxu0 %v781
        %809 = vmatpush.msra.mxu0 %v780
        %810 = vmatpush.msra.mxu0 %v779
        %811 = vmatpush.msra.mxu0 %v778
        %812 = vmatpush.msra.mxu0 %v777
        %813 = vmatmul.f32.gmra.mxu0 %v745
        %v814 = vpop.f32.mrf.mxu0
        %v815 = vadd.f32 %v795, %v814
        %816 = vmatmul.f32.gmra.mxu0 %v746
        %v817 = vpop.f32.mrf.mxu0
        %v818 = vadd.f32 %v795, %v817
        %819 = vmatmul.f32.gmra.mxu0 %v747
        %v820 = vpop.f32.mrf.mxu0
        %v821 = vadd.f32 %v795, %v820
        %822 = vmatmul.f32.gmra.mxu0 %v748
        %v823 = vpop.f32.mrf.mxu0
        %v824 = vadd.f32 %v795, %v823
        %825 = vmatmul.f32.gmra.mxu0 %v749
        %v826 = vpop.f32.mrf.mxu0
        %v827 = vadd.f32 %v795, %v826
        %828 = vmatmul.f32.gmra.mxu0 %v750
        %v829 = vpop.f32.mrf.mxu0
        %v830 = vadd.f32 %v795, %v829
        %831 = vmatmul.f32.gmra.mxu0 %v751
        %v832 = vpop.f32.mrf.mxu0
        %v833 = vadd.f32 %v795, %v832
        %834 = vmatmul.f32.gmra.mxu0 %v752
        %v835 = vpop.f32.mrf.mxu0
        %v836 = vadd.f32 %v795, %v835
        %837 = vmatmul.f32.gmra.mxu0 %v753
        %v838 = vpop.f32.mrf.mxu0
        %v839 = vadd.f32 %v795, %v838
        %840 = vmatmul.f32.gmra.mxu0 %v754
        %v841 = vpop.f32.mrf.mxu0
        %v842 = vadd.f32 %v795, %v841
        %843 = vmatmul.f32.gmra.mxu0 %v755
        %v844 = vpop.f32.mrf.mxu0
        %v845 = vadd.f32 %v795, %v844
        %846 = vmatmul.f32.gmra.mxu0 %v756
        %v847 = vpop.f32.mrf.mxu0
        %v848 = vadd.f32 %v795, %v847
        %849 = vmatmul.f32.gmra.mxu0 %v757
        %v850 = vpop.f32.mrf.mxu0
        %v851 = vadd.f32 %v795, %v850
        %852 = vmatmul.f32.gmra.mxu0 %v758
        %v853 = vpop.f32.mrf.mxu0
        %v854 = vadd.f32 %v795, %v853
        %855 = vmatmul.f32.gmra.mxu0 %v759
        %v856 = vpop.f32.mrf.mxu0
        %v857 = vadd.f32 %v795, %v856
        %858 = vmatmul.f32.gmra.mxu0 %v760
        %v859 = vpop.f32.mrf.mxu0
        %v860 = vadd.f32 %v795, %v859
        %861 = vmatmul.f32.gmra.mxu0 %v761
        %v862 = vpop.f32.mrf.mxu0
        %v863 = vadd.f32 %v795, %v862
        %864 = vmatmul.f32.gmra.mxu0 %v762
        %v865 = vpop.f32.mrf.mxu0
        %v866 = vadd.f32 %v795, %v865
        %867 = vmatmul.f32.gmra.mxu0 %v763
        %v868 = vpop.f32.mrf.mxu0
        %v869 = vadd.f32 %v795, %v868
        %870 = vmatmul.f32.gmra.mxu0 %v764
        %v871 = vpop.f32.mrf.mxu0
        %v872 = vadd.f32 %v795, %v871
        %873 = vmatmul.f32.gmra.mxu0 %v765
        %v874 = vpop.f32.mrf.mxu0
        %v875 = vadd.f32 %v795, %v874
        %876 = vmatmul.f32.gmra.mxu0 %v766
        %v877 = vpop.f32.mrf.mxu0
        %v878 = vadd.f32 %v795, %v877
        %879 = vmatmul.f32.gmra.mxu0 %v767
        %v880 = vpop.f32.mrf.mxu0
        %v881 = vadd.f32 %v795, %v880
        %882 = vmatmul.f32.gmra.mxu0 %v768
        %v883 = vpop.f32.mrf.mxu0
        %v884 = vadd.f32 %v795, %v883
        %885 = vmatmul.f32.gmra.mxu0 %v769
        %v886 = vpop.f32.mrf.mxu0
        %v887 = vadd.f32 %v795, %v886
        %888 = vmatmul.f32.gmra.mxu0 %v770
        %v889 = vpop.f32.mrf.mxu0
        %v890 = vadd.f32 %v795, %v889
        %891 = vmatmul.f32.gmra.mxu0 %v771
        %v892 = vpop.f32.mrf.mxu0
        %v893 = vadd.f32 %v795, %v892
        %894 = vmatmul.f32.gmra.mxu0 %v772
        %v895 = vpop.f32.mrf.mxu0
        %v896 = vadd.f32 %v795, %v895
        %897 = vmatmul.f32.gmra.mxu0 %v773
        %v898 = vpop.f32.mrf.mxu0
        %v899 = vadd.f32 %v795, %v898
        %900 = vmatmul.f32.gmra.mxu0 %v774
        %v901 = vpop.f32.mrf.mxu0
        %v902 = vadd.f32 %v795, %v901
        %903 = vmatmul.f32.gmra.mxu0 %v775
        %v904 = vpop.f32.mrf.mxu0
        %v905 = vadd.f32 %v795, %v904
        %906 = vmatmul.f32.gmra.mxu0 %v776
        %v907 = vpop.f32.mrf.mxu0
        %v908 = vadd.f32 %v795, %v907
        %909 = vdwg.mxu0
        %s910 = scalar_lea.vmem [#allocation2], 24
        %911 = vst [vmem:[%s910 + $0x1] sm:$0xff] %v815
        %912 = vst [vmem:[%s910 + $0x9] sm:$0xff] %v818
        %913 = vst [vmem:[%s910 + $0x19] sm:$0xff] %v821
        %914 = vst [vmem:[%s910 + $0x21] sm:$0xff] %v824
        %915 = vst [vmem:[%s910 + $0x31] sm:$0xff] %v827
        %916 = vst [vmem:[%s910 + $0x39] sm:$0xff] %v830
        %917 = vst [vmem:[%s910 + $0x49] sm:$0xff] %v833
        %918 = vst [vmem:[%s910 + $0x51] sm:$0xff] %v836
        %919 = vst [vmem:[%s910 + $0x61] sm:$0xff] %v839
        %920 = vst [vmem:[%s910 + $0x69] sm:$0xff] %v842
        %921 = vst [vmem:[%s910 + $0x79] sm:$0xff] %v845
        %922 = vst [vmem:[%s910 + $0x81] sm:$0xff] %v848
        %923 = vst [vmem:[%s910 + $0x91] sm:$0xff] %v851
        %924 = vst [vmem:[%s910 + $0x99] sm:$0xff] %v854
        %925 = vst [vmem:[%s910 + $0xa9] sm:$0xff] %v857
        %926 = vst [vmem:[%s910 + $0xb1] sm:$0xff] %v860
        %927 = vst [vmem:[%s910 + $0xc1] sm:$0xff] %v863
        %928 = vst [vmem:[%s910 + $0xc9] sm:$0xff] %v866
        %929 = vst [vmem:[%s910 + $0xd9] sm:$0xff] %v869
        %930 = vst [vmem:[%s910 + $0xe1] sm:$0xff] %v872
        %931 = vst [vmem:[%s910 + $0xf1] sm:$0xff] %v875
        %932 = vst [vmem:[%s910 + $0xf9] sm:$0xff] %v878
        %933 = vst [vmem:[%s910 + $0x109] sm:$0xff] %v881
        %934 = vst [vmem:[%s910 + $0x111] sm:$0xff] %v884
        %935 = vst [vmem:[%s910 + $0x121] sm:$0xff] %v887
        %936 = vst [vmem:[%s910 + $0x129] sm:$0xff] %v890
        %937 = vst [vmem:[%s910 + $0x139] sm:$0xff] %v893
        %938 = vst [vmem:[%s910 + $0x141] sm:$0xff] %v896
        %939 = vst [vmem:[%s910 + $0x151] sm:$0xff] %v899
        %940 = vst [vmem:[%s910 + $0x159] sm:$0xff] %v902
        %941 = vst [vmem:[%s910 + $0x169] sm:$0xff] %v905
        %942 = vst [vmem:[%s910 + $0x171] sm:$0xff] %v908
        %v943 = vld [vmem:[#allocation2] sm:$0xff]
        %v944 = vld [vmem:[#allocation2 + $0x8] sm:$0xff]
        %v945 = vld [vmem:[#allocation2 + $0x18] sm:$0xff]
        %v946 = vld [vmem:[#allocation2 + $0x20] sm:$0xff]
        %v947 = vld [vmem:[#allocation2 + $0x30] sm:$0xff]
        %v948 = vld [vmem:[#allocation2 + $0x38] sm:$0xff]
        %v949 = vld [vmem:[#allocation2 + $0x48] sm:$0xff]
        %v950 = vld [vmem:[#allocation2 + $0x50] sm:$0xff]
        %v951 = vld [vmem:[#allocation2 + $0x60] sm:$0xff]
        %v952 = vld [vmem:[#allocation2 + $0x68] sm:$0xff]
        %v953 = vld [vmem:[#allocation2 + $0x78] sm:$0xff]
        %v954 = vld [vmem:[#allocation2 + $0x80] sm:$0xff]
        %v955 = vld [vmem:[#allocation2 + $0x90] sm:$0xff]
        %v956 = vld [vmem:[#allocation2 + $0x98] sm:$0xff]
        %v957 = vld [vmem:[#allocation2 + $0xa8] sm:$0xff]
        %v958 = vld [vmem:[#allocation2 + $0xb0] sm:$0xff]
        %v959 = vld [vmem:[#allocation2 + $0xc0] sm:$0xff]
        %v960 = vld [vmem:[#allocation2 + $0xc8] sm:$0xff]
        %v961 = vld [vmem:[#allocation2 + $0xd8] sm:$0xff]
        %v962 = vld [vmem:[#allocation2 + $0xe0] sm:$0xff]
        %v963 = vld [vmem:[#allocation2 + $0xf0] sm:$0xff]
        %v964 = vld [vmem:[#allocation2 + $0xf8] sm:$0xff]
        %v965 = vld [vmem:[#allocation2 + $0x108] sm:$0xff]
        %v966 = vld [vmem:[#allocation2 + $0x110] sm:$0xff]
        %v967 = vld [vmem:[#allocation2 + $0x120] sm:$0xff]
        %v968 = vld [vmem:[#allocation2 + $0x128] sm:$0xff]
        %v969 = vld [vmem:[#allocation2 + $0x138] sm:$0xff]
        %v970 = vld [vmem:[#allocation2 + $0x140] sm:$0xff]
        %v971 = vld [vmem:[#allocation2 + $0x150] sm:$0xff]
        %v972 = vld [vmem:[#allocation2 + $0x158] sm:$0xff]
        %v973 = vld [vmem:[#allocation2 + $0x168] sm:$0xff]
        %v974 = vld [vmem:[#allocation2 + $0x170] sm:$0xff]
        %v975 = vld [vmem:[#allocation10] sm:$0x1]
        %v976 = vperm.slane %v975, 0
        %v977 = vmul.f32 %v943, %v976
        %v978 = vmul.f32 %v944, %v976
        %v979 = vmul.f32 %v945, %v976
        %v980 = vmul.f32 %v946, %v976
        %v981 = vmul.f32 %v947, %v976
        %v982 = vmul.f32 %v948, %v976
        %v983 = vmul.f32 %v949, %v976
        %v984 = vmul.f32 %v950, %v976
        %v985 = vmul.f32 %v951, %v976
        %v986 = vmul.f32 %v952, %v976
        %v987 = vmul.f32 %v953, %v976
        %v988 = vmul.f32 %v954, %v976
        %v989 = vmul.f32 %v955, %v976
        %v990 = vmul.f32 %v956, %v976
        %v991 = vmul.f32 %v957, %v976
        %v992 = vmul.f32 %v958, %v976
        %v993 = vmul.f32 %v959, %v976
        %v994 = vmul.f32 %v960, %v976
        %v995 = vmul.f32 %v961, %v976
        %v996 = vmul.f32 %v962, %v976
        %v997 = vmul.f32 %v963, %v976
        %v998 = vmul.f32 %v964, %v976
        %v999 = vmul.f32 %v965, %v976
        %v1000 = vmul.f32 %v966, %v976
        %v1001 = vmul.f32 %v967, %v976
        %v1002 = vmul.f32 %v968, %v976
        %v1003 = vmul.f32 %v969, %v976
        %v1004 = vmul.f32 %v970, %v976
        %v1005 = vmul.f32 %v971, %v976
        %v1006 = vmul.f32 %v972, %v976
        %v1007 = vmul.f32 %v973, %v976
        %v1008 = vmul.f32 %v974, %v976
        %v1009 = vadd.f32 %v977, 0.0
        %v1010 = vadd.f32 %v978, 0.0
        %v1011 = vadd.f32 %v979, 0.0
        %v1012 = vadd.f32 %v980, 0.0
        %v1013 = vadd.f32 %v981, 0.0
        %v1014 = vadd.f32 %v982, 0.0
        %v1015 = vadd.f32 %v983, 0.0
        %v1016 = vadd.f32 %v984, 0.0
        %v1017 = vadd.f32 %v985, 0.0
        %v1018 = vadd.f32 %v986, 0.0
        %v1019 = vadd.f32 %v987, 0.0
        %v1020 = vadd.f32 %v988, 0.0
        %v1021 = vadd.f32 %v989, 0.0
        %v1022 = vadd.f32 %v990, 0.0
        %v1023 = vadd.f32 %v991, 0.0
        %v1024 = vadd.f32 %v992, 0.0
        %v1025 = vadd.f32 %v993, 0.0
        %v1026 = vadd.f32 %v994, 0.0
        %v1027 = vadd.f32 %v995, 0.0
        %v1028 = vadd.f32 %v996, 0.0
        %v1029 = vadd.f32 %v997, 0.0
        %v1030 = vadd.f32 %v998, 0.0
        %v1031 = vadd.f32 %v999, 0.0
        %v1032 = vadd.f32 %v1000, 0.0
        %v1033 = vadd.f32 %v1001, 0.0
        %v1034 = vadd.f32 %v1002, 0.0
        %v1035 = vadd.f32 %v1003, 0.0
        %v1036 = vadd.f32 %v1004, 0.0
        %v1037 = vadd.f32 %v1005, 0.0
        %v1038 = vadd.f32 %v1006, 0.0
        %v1039 = vadd.f32 %v1007, 0.0
        %v1040 = vadd.f32 %v1008, 0.0
        %v1041 = vld [vmem:[#allocation2 + $0x1] sm:$0xff]
        %v1042 = vld [vmem:[#allocation2 + $0x9] sm:$0xff]
        %v1043 = vld [vmem:[#allocation2 + $0x19] sm:$0xff]
        %v1044 = vld [vmem:[#allocation2 + $0x21] sm:$0xff]
        %v1045 = vld [vmem:[#allocation2 + $0x31] sm:$0xff]
        %v1046 = vld [vmem:[#allocation2 + $0x39] sm:$0xff]
        %v1047 = vld [vmem:[#allocation2 + $0x49] sm:$0xff]
        %v1048 = vld [vmem:[#allocation2 + $0x51] sm:$0xff]
        %v1049 = vld [vmem:[#allocation2 + $0x61] sm:$0xff]
        %v1050 = vld [vmem:[#allocation2 + $0x69] sm:$0xff]
        %v1051 = vld [vmem:[#allocation2 + $0x79] sm:$0xff]
        %v1052 = vld [vmem:[#allocation2 + $0x81] sm:$0xff]
        %v1053 = vld [vmem:[#allocation2 + $0x91] sm:$0xff]
        %v1054 = vld [vmem:[#allocation2 + $0x99] sm:$0xff]
        %v1055 = vld [vmem:[#allocation2 + $0xa9] sm:$0xff]
        %v1056 = vld [vmem:[#allocation2 + $0xb1] sm:$0xff]
        %v1057 = vld [vmem:[#allocation2 + $0xc1] sm:$0xff]
        %v1058 = vld [vmem:[#allocation2 + $0xc9] sm:$0xff]
        %v1059 = vld [vmem:[#allocation2 + $0xd9] sm:$0xff]
        %v1060 = vld [vmem:[#allocation2 + $0xe1] sm:$0xff]
        %v1061 = vld [vmem:[#allocation2 + $0xf1] sm:$0xff]
        %v1062 = vld [vmem:[#allocation2 + $0xf9] sm:$0xff]
        %v1063 = vld [vmem:[#allocation2 + $0x109] sm:$0xff]
        %v1064 = vld [vmem:[#allocation2 + $0x111] sm:$0xff]
        %v1065 = vld [vmem:[#allocation2 + $0x121] sm:$0xff]
        %v1066 = vld [vmem:[#allocation2 + $0x129] sm:$0xff]
        %v1067 = vld [vmem:[#allocation2 + $0x139] sm:$0xff]
        %v1068 = vld [vmem:[#allocation2 + $0x141] sm:$0xff]
        %v1069 = vld [vmem:[#allocation2 + $0x151] sm:$0xff]
        %v1070 = vld [vmem:[#allocation2 + $0x159] sm:$0xff]
        %v1071 = vld [vmem:[#allocation2 + $0x169] sm:$0xff]
        %v1072 = vld [vmem:[#allocation2 + $0x171] sm:$0xff]
        %v1073 = vld [vmem:[#allocation10 + $0x1] sm:$0x1]
        %v1074 = vperm.slane %v1073, 0
        %v1075 = vmul.f32 %v1041, %v1074
        %v1076 = vmul.f32 %v1042, %v1074
        %v1077 = vmul.f32 %v1043, %v1074
        %v1078 = vmul.f32 %v1044, %v1074
        %v1079 = vmul.f32 %v1045, %v1074
        %v1080 = vmul.f32 %v1046, %v1074
        %v1081 = vmul.f32 %v1047, %v1074
        %v1082 = vmul.f32 %v1048, %v1074
        %v1083 = vmul.f32 %v1049, %v1074
        %v1084 = vmul.f32 %v1050, %v1074
        %v1085 = vmul.f32 %v1051, %v1074
        %v1086 = vmul.f32 %v1052, %v1074
        %v1087 = vmul.f32 %v1053, %v1074
        %v1088 = vmul.f32 %v1054, %v1074
        %v1089 = vmul.f32 %v1055, %v1074
        %v1090 = vmul.f32 %v1056, %v1074
        %v1091 = vmul.f32 %v1057, %v1074
        %v1092 = vmul.f32 %v1058, %v1074
        %v1093 = vmul.f32 %v1059, %v1074
        %v1094 = vmul.f32 %v1060, %v1074
        %v1095 = vmul.f32 %v1061, %v1074
        %v1096 = vmul.f32 %v1062, %v1074
        %v1097 = vmul.f32 %v1063, %v1074
        %v1098 = vmul.f32 %v1064, %v1074
        %v1099 = vmul.f32 %v1065, %v1074
        %v1100 = vmul.f32 %v1066, %v1074
        %v1101 = vmul.f32 %v1067, %v1074
        %v1102 = vmul.f32 %v1068, %v1074
        %v1103 = vmul.f32 %v1069, %v1074
        %v1104 = vmul.f32 %v1070, %v1074
        %v1105 = vmul.f32 %v1071, %v1074
        %v1106 = vmul.f32 %v1072, %v1074
        %v1107 = vadd.f32 %v1009, %v1075
        %v1108 = vadd.f32 %v1010, %v1076
        %v1109 = vadd.f32 %v1011, %v1077
        %v1110 = vadd.f32 %v1012, %v1078
        %v1111 = vadd.f32 %v1013, %v1079
        %v1112 = vadd.f32 %v1014, %v1080
        %v1113 = vadd.f32 %v1015, %v1081
        %v1114 = vadd.f32 %v1016, %v1082
        %v1115 = vadd.f32 %v1017, %v1083
        %v1116 = vadd.f32 %v1018, %v1084
        %v1117 = vadd.f32 %v1019, %v1085
        %v1118 = vadd.f32 %v1020, %v1086
        %v1119 = vadd.f32 %v1021, %v1087
        %v1120 = vadd.f32 %v1022, %v1088
        %v1121 = vadd.f32 %v1023, %v1089
        %v1122 = vadd.f32 %v1024, %v1090
        %v1123 = vadd.f32 %v1025, %v1091
        %v1124 = vadd.f32 %v1026, %v1092
        %v1125 = vadd.f32 %v1027, %v1093
        %v1126 = vadd.f32 %v1028, %v1094
        %v1127 = vadd.f32 %v1029, %v1095
        %v1128 = vadd.f32 %v1030, %v1096
        %v1129 = vadd.f32 %v1031, %v1097
        %v1130 = vadd.f32 %v1032, %v1098
        %v1131 = vadd.f32 %v1033, %v1099
        %v1132 = vadd.f32 %v1034, %v1100
        %v1133 = vadd.f32 %v1035, %v1101
        %v1134 = vadd.f32 %v1036, %v1102
        %v1135 = vadd.f32 %v1037, %v1103
        %v1136 = vadd.f32 %v1038, %v1104
        %v1137 = vadd.f32 %v1039, %v1105
        %v1138 = vadd.f32 %v1040, %v1106
        %v1139 = vld [vmem:[#allocation2 + $0x2] sm:$0xff]
        %v1140 = vld [vmem:[#allocation2 + $0xa] sm:$0xff]
        %v1141 = vld [vmem:[#allocation2 + $0x1a] sm:$0xff]
        %v1142 = vld [vmem:[#allocation2 + $0x22] sm:$0xff]
        %v1143 = vld [vmem:[#allocation2 + $0x32] sm:$0xff]
        %v1144 = vld [vmem:[#allocation2 + $0x3a] sm:$0xff]
        %v1145 = vld [vmem:[#allocation2 + $0x4a] sm:$0xff]
        %v1146 = vld [vmem:[#allocation2 + $0x52] sm:$0xff]
        %v1147 = vld [vmem:[#allocation2 + $0x62] sm:$0xff]
        %v1148 = vld [vmem:[#allocation2 + $0x6a] sm:$0xff]
        %v1149 = vld [vmem:[#allocation2 + $0x7a] sm:$0xff]
        %v1150 = vld [vmem:[#allocation2 + $0x82] sm:$0xff]
        %v1151 = vld [vmem:[#allocation2 + $0x92] sm:$0xff]
        %v1152 = vld [vmem:[#allocation2 + $0x9a] sm:$0xff]
        %v1153 = vld [vmem:[#allocation2 + $0xaa] sm:$0xff]
        %v1154 = vld [vmem:[#allocation2 + $0xb2] sm:$0xff]
        %v1155 = vld [vmem:[#allocation2 + $0xc2] sm:$0xff]
        %v1156 = vld [vmem:[#allocation2 + $0xca] sm:$0xff]
        %v1157 = vld [vmem:[#allocation2 + $0xda] sm:$0xff]
        %v1158 = vld [vmem:[#allocation2 + $0xe2] sm:$0xff]
        %v1159 = vld [vmem:[#allocation2 + $0xf2] sm:$0xff]
        %v1160 = vld [vmem:[#allocation2 + $0xfa] sm:$0xff]
        %v1161 = vld [vmem:[#allocation2 + $0x10a] sm:$0xff]
        %v1162 = vld [vmem:[#allocation2 + $0x112] sm:$0xff]
        %v1163 = vld [vmem:[#allocation2 + $0x122] sm:$0xff]
        %v1164 = vld [vmem:[#allocation2 + $0x12a] sm:$0xff]
        %v1165 = vld [vmem:[#allocation2 + $0x13a] sm:$0xff]
        %v1166 = vld [vmem:[#allocation2 + $0x142] sm:$0xff]
        %v1167 = vld [vmem:[#allocation2 + $0x152] sm:$0xff]
        %v1168 = vld [vmem:[#allocation2 + $0x15a] sm:$0xff]
        %v1169 = vld [vmem:[#allocation2 + $0x16a] sm:$0xff]
        %v1170 = vld [vmem:[#allocation2 + $0x172] sm:$0xff]
        %v1171 = vld [vmem:[#allocation10 + $0x2] sm:$0x1]
        %v1172 = vperm.slane %v1171, 0
        %v1173 = vmul.f32 %v1139, %v1172
        %v1174 = vmul.f32 %v1140, %v1172
        %v1175 = vmul.f32 %v1141, %v1172
        %v1176 = vmul.f32 %v1142, %v1172
        %v1177 = vmul.f32 %v1143, %v1172
        %v1178 = vmul.f32 %v1144, %v1172
        %v1179 = vmul.f32 %v1145, %v1172
        %v1180 = vmul.f32 %v1146, %v1172
        %v1181 = vmul.f32 %v1147, %v1172
        %v1182 = vmul.f32 %v1148, %v1172
        %v1183 = vmul.f32 %v1149, %v1172
        %v1184 = vmul.f32 %v1150, %v1172
        %v1185 = vmul.f32 %v1151, %v1172
        %v1186 = vmul.f32 %v1152, %v1172
        %v1187 = vmul.f32 %v1153, %v1172
        %v1188 = vmul.f32 %v1154, %v1172
        %v1189 = vmul.f32 %v1155, %v1172
        %v1190 = vmul.f32 %v1156, %v1172
        %v1191 = vmul.f32 %v1157, %v1172
        %v1192 = vmul.f32 %v1158, %v1172
        %v1193 = vmul.f32 %v1159, %v1172
        %v1194 = vmul.f32 %v1160, %v1172
        %v1195 = vmul.f32 %v1161, %v1172
        %v1196 = vmul.f32 %v1162, %v1172
        %v1197 = vmul.f32 %v1163, %v1172
        %v1198 = vmul.f32 %v1164, %v1172
        %v1199 = vmul.f32 %v1165, %v1172
        %v1200 = vmul.f32 %v1166, %v1172
        %v1201 = vmul.f32 %v1167, %v1172
        %v1202 = vmul.f32 %v1168, %v1172
        %v1203 = vmul.f32 %v1169, %v1172
        %v1204 = vmul.f32 %v1170, %v1172
        %v1205 = vadd.f32 %v1107, %v1173
        %v1206 = vadd.f32 %v1108, %v1174
        %v1207 = vadd.f32 %v1109, %v1175
        %v1208 = vadd.f32 %v1110, %v1176
        %v1209 = vadd.f32 %v1111, %v1177
        %v1210 = vadd.f32 %v1112, %v1178
        %v1211 = vadd.f32 %v1113, %v1179
        %v1212 = vadd.f32 %v1114, %v1180
        %v1213 = vadd.f32 %v1115, %v1181
        %v1214 = vadd.f32 %v1116, %v1182
        %v1215 = vadd.f32 %v1117, %v1183
        %v1216 = vadd.f32 %v1118, %v1184
        %v1217 = vadd.f32 %v1119, %v1185
        %v1218 = vadd.f32 %v1120, %v1186
        %v1219 = vadd.f32 %v1121, %v1187
        %v1220 = vadd.f32 %v1122, %v1188
        %v1221 = vadd.f32 %v1123, %v1189
        %v1222 = vadd.f32 %v1124, %v1190
        %v1223 = vadd.f32 %v1125, %v1191
        %v1224 = vadd.f32 %v1126, %v1192
        %v1225 = vadd.f32 %v1127, %v1193
        %v1226 = vadd.f32 %v1128, %v1194
        %v1227 = vadd.f32 %v1129, %v1195
        %v1228 = vadd.f32 %v1130, %v1196
        %v1229 = vadd.f32 %v1131, %v1197
        %v1230 = vadd.f32 %v1132, %v1198
        %v1231 = vadd.f32 %v1133, %v1199
        %v1232 = vadd.f32 %v1134, %v1200
        %v1233 = vadd.f32 %v1135, %v1201
        %v1234 = vadd.f32 %v1136, %v1202
        %v1235 = vadd.f32 %v1137, %v1203
        %v1236 = vadd.f32 %v1138, %v1204
        %v1237 = vld [vmem:[%s910] sm:$0xff]
        %v1238 = vld [vmem:[%s910 + $0x8] sm:$0xff]
        %v1239 = vld [vmem:[%s910 + $0x18] sm:$0xff]
        %v1240 = vld [vmem:[%s910 + $0x20] sm:$0xff]
        %v1241 = vld [vmem:[%s910 + $0x30] sm:$0xff]
        %v1242 = vld [vmem:[%s910 + $0x38] sm:$0xff]
        %v1243 = vld [vmem:[%s910 + $0x48] sm:$0xff]
        %v1244 = vld [vmem:[%s910 + $0x50] sm:$0xff]
        %v1245 = vld [vmem:[%s910 + $0x60] sm:$0xff]
        %v1246 = vld [vmem:[%s910 + $0x68] sm:$0xff]
        %v1247 = vld [vmem:[%s910 + $0x78] sm:$0xff]
        %v1248 = vld [vmem:[%s910 + $0x80] sm:$0xff]
        %v1249 = vld [vmem:[%s910 + $0x90] sm:$0xff]
        %v1250 = vld [vmem:[%s910 + $0x98] sm:$0xff]
        %v1251 = vld [vmem:[%s910 + $0xa8] sm:$0xff]
        %v1252 = vld [vmem:[%s910 + $0xb0] sm:$0xff]
        %v1253 = vld [vmem:[%s910 + $0xc0] sm:$0xff]
        %v1254 = vld [vmem:[%s910 + $0xc8] sm:$0xff]
        %v1255 = vld [vmem:[%s910 + $0xd8] sm:$0xff]
        %v1256 = vld [vmem:[%s910 + $0xe0] sm:$0xff]
        %v1257 = vld [vmem:[%s910 + $0xf0] sm:$0xff]
        %v1258 = vld [vmem:[%s910 + $0xf8] sm:$0xff]
        %v1259 = vld [vmem:[%s910 + $0x108] sm:$0xff]
        %v1260 = vld [vmem:[%s910 + $0x110] sm:$0xff]
        %v1261 = vld [vmem:[%s910 + $0x120] sm:$0xff]
        %v1262 = vld [vmem:[%s910 + $0x128] sm:$0xff]
        %v1263 = vld [vmem:[%s910 + $0x138] sm:$0xff]
        %v1264 = vld [vmem:[%s910 + $0x140] sm:$0xff]
        %v1265 = vld [vmem:[%s910 + $0x150] sm:$0xff]
        %v1266 = vld [vmem:[%s910 + $0x158] sm:$0xff]
        %v1267 = vld [vmem:[%s910 + $0x168] sm:$0xff]
        %v1268 = vld [vmem:[%s910 + $0x170] sm:$0xff]
        %v1269 = vld [vmem:[#allocation10 + $0x3] sm:$0x1]
        %v1270 = vperm.slane %v1269, 0
        %v1271 = vmul.f32 %v1237, %v1270
        %v1272 = vmul.f32 %v1238, %v1270
        %v1273 = vmul.f32 %v1239, %v1270
        %v1274 = vmul.f32 %v1240, %v1270
        %v1275 = vmul.f32 %v1241, %v1270
        %v1276 = vmul.f32 %v1242, %v1270
        %v1277 = vmul.f32 %v1243, %v1270
        %v1278 = vmul.f32 %v1244, %v1270
        %v1279 = vmul.f32 %v1245, %v1270
        %v1280 = vmul.f32 %v1246, %v1270
        %v1281 = vmul.f32 %v1247, %v1270
        %v1282 = vmul.f32 %v1248, %v1270
        %v1283 = vmul.f32 %v1249, %v1270
        %v1284 = vmul.f32 %v1250, %v1270
        %v1285 = vmul.f32 %v1251, %v1270
        %v1286 = vmul.f32 %v1252, %v1270
        %v1287 = vmul.f32 %v1253, %v1270
        %v1288 = vmul.f32 %v1254, %v1270
        %v1289 = vmul.f32 %v1255, %v1270
        %v1290 = vmul.f32 %v1256, %v1270
        %v1291 = vmul.f32 %v1257, %v1270
        %v1292 = vmul.f32 %v1258, %v1270
        %v1293 = vmul.f32 %v1259, %v1270
        %v1294 = vmul.f32 %v1260, %v1270
        %v1295 = vmul.f32 %v1261, %v1270
        %v1296 = vmul.f32 %v1262, %v1270
        %v1297 = vmul.f32 %v1263, %v1270
        %v1298 = vmul.f32 %v1264, %v1270
        %v1299 = vmul.f32 %v1265, %v1270
        %v1300 = vmul.f32 %v1266, %v1270
        %v1301 = vmul.f32 %v1267, %v1270
        %v1302 = vmul.f32 %v1268, %v1270
        %v1303 = vadd.f32 %v1205, %v1271
        %v1304 = vadd.f32 %v1206, %v1272
        %v1305 = vadd.f32 %v1207, %v1273
        %v1306 = vadd.f32 %v1208, %v1274
        %v1307 = vadd.f32 %v1209, %v1275
        %v1308 = vadd.f32 %v1210, %v1276
        %v1309 = vadd.f32 %v1211, %v1277
        %v1310 = vadd.f32 %v1212, %v1278
        %v1311 = vadd.f32 %v1213, %v1279
        %v1312 = vadd.f32 %v1214, %v1280
        %v1313 = vadd.f32 %v1215, %v1281
        %v1314 = vadd.f32 %v1216, %v1282
        %v1315 = vadd.f32 %v1217, %v1283
        %v1316 = vadd.f32 %v1218, %v1284
        %v1317 = vadd.f32 %v1219, %v1285
        %v1318 = vadd.f32 %v1220, %v1286
        %v1319 = vadd.f32 %v1221, %v1287
        %v1320 = vadd.f32 %v1222, %v1288
        %v1321 = vadd.f32 %v1223, %v1289
        %v1322 = vadd.f32 %v1224, %v1290
        %v1323 = vadd.f32 %v1225, %v1291
        %v1324 = vadd.f32 %v1226, %v1292
        %v1325 = vadd.f32 %v1227, %v1293
        %v1326 = vadd.f32 %v1228, %v1294
        %v1327 = vadd.f32 %v1229, %v1295
        %v1328 = vadd.f32 %v1230, %v1296
        %v1329 = vadd.f32 %v1231, %v1297
        %v1330 = vadd.f32 %v1232, %v1298
        %v1331 = vadd.f32 %v1233, %v1299
        %v1332 = vadd.f32 %v1234, %v1300
        %v1333 = vadd.f32 %v1235, %v1301
        %v1334 = vadd.f32 %v1236, %v1302
        %v1335 = vld [vmem:[%s910 + $0x1] sm:$0xff]
        %v1336 = vld [vmem:[%s910 + $0x9] sm:$0xff]
        %v1337 = vld [vmem:[%s910 + $0x19] sm:$0xff]
        %v1338 = vld [vmem:[%s910 + $0x21] sm:$0xff]
        %v1339 = vld [vmem:[%s910 + $0x31] sm:$0xff]
        %v1340 = vld [vmem:[%s910 + $0x39] sm:$0xff]
        %v1341 = vld [vmem:[%s910 + $0x49] sm:$0xff]
        %v1342 = vld [vmem:[%s910 + $0x51] sm:$0xff]
        %v1343 = vld [vmem:[%s910 + $0x61] sm:$0xff]
        %v1344 = vld [vmem:[%s910 + $0x69] sm:$0xff]
        %v1345 = vld [vmem:[%s910 + $0x79] sm:$0xff]
        %v1346 = vld [vmem:[%s910 + $0x81] sm:$0xff]
        %v1347 = vld [vmem:[%s910 + $0x91] sm:$0xff]
        %v1348 = vld [vmem:[%s910 + $0x99] sm:$0xff]
        %v1349 = vld [vmem:[%s910 + $0xa9] sm:$0xff]
        %v1350 = vld [vmem:[%s910 + $0xb1] sm:$0xff]
        %v1351 = vld [vmem:[%s910 + $0xc1] sm:$0xff]
        %v1352 = vld [vmem:[%s910 + $0xc9] sm:$0xff]
        %v1353 = vld [vmem:[%s910 + $0xd9] sm:$0xff]
        %v1354 = vld [vmem:[%s910 + $0xe1] sm:$0xff]
        %v1355 = vld [vmem:[%s910 + $0xf1] sm:$0xff]
        %v1356 = vld [vmem:[%s910 + $0xf9] sm:$0xff]
        %v1357 = vld [vmem:[%s910 + $0x109] sm:$0xff]
        %v1358 = vld [vmem:[%s910 + $0x111] sm:$0xff]
        %v1359 = vld [vmem:[%s910 + $0x121] sm:$0xff]
        %v1360 = vld [vmem:[%s910 + $0x129] sm:$0xff]
        %v1361 = vld [vmem:[%s910 + $0x139] sm:$0xff]
        %v1362 = vld [vmem:[%s910 + $0x141] sm:$0xff]
        %v1363 = vld [vmem:[%s910 + $0x151] sm:$0xff]
        %v1364 = vld [vmem:[%s910 + $0x159] sm:$0xff]
        %v1365 = vld [vmem:[%s910 + $0x169] sm:$0xff]
        %v1366 = vld [vmem:[%s910 + $0x171] sm:$0xff]
        %v1367 = vld [vmem:[#allocation10 + $0x4] sm:$0x1]
        %v1368 = vperm.slane %v1367, 0
        %v1369 = vmul.f32 %v1335, %v1368
        %v1370 = vmul.f32 %v1336, %v1368
        %v1371 = vmul.f32 %v1337, %v1368
        %v1372 = vmul.f32 %v1338, %v1368
        %v1373 = vmul.f32 %v1339, %v1368
        %v1374 = vmul.f32 %v1340, %v1368
        %v1375 = vmul.f32 %v1341, %v1368
        %v1376 = vmul.f32 %v1342, %v1368
        %v1377 = vmul.f32 %v1343, %v1368
        %v1378 = vmul.f32 %v1344, %v1368
        %v1379 = vmul.f32 %v1345, %v1368
        %v1380 = vmul.f32 %v1346, %v1368
        %v1381 = vmul.f32 %v1347, %v1368
        %v1382 = vmul.f32 %v1348, %v1368
        %v1383 = vmul.f32 %v1349, %v1368
        %v1384 = vmul.f32 %v1350, %v1368
        %v1385 = vmul.f32 %v1351, %v1368
        %v1386 = vmul.f32 %v1352, %v1368
        %v1387 = vmul.f32 %v1353, %v1368
        %v1388 = vmul.f32 %v1354, %v1368
        %v1389 = vmul.f32 %v1355, %v1368
        %v1390 = vmul.f32 %v1356, %v1368
        %v1391 = vmul.f32 %v1357, %v1368
        %v1392 = vmul.f32 %v1358, %v1368
        %v1393 = vmul.f32 %v1359, %v1368
        %v1394 = vmul.f32 %v1360, %v1368
        %v1395 = vmul.f32 %v1361, %v1368
        %v1396 = vmul.f32 %v1362, %v1368
        %v1397 = vmul.f32 %v1363, %v1368
        %v1398 = vmul.f32 %v1364, %v1368
        %v1399 = vmul.f32 %v1365, %v1368
        %v1400 = vmul.f32 %v1366, %v1368
        %v1401 = vadd.f32 %v1303, %v1369
        %v1402 = vadd.f32 %v1304, %v1370
        %v1403 = vadd.f32 %v1305, %v1371
        %v1404 = vadd.f32 %v1306, %v1372
        %v1405 = vadd.f32 %v1307, %v1373
        %v1406 = vadd.f32 %v1308, %v1374
        %v1407 = vadd.f32 %v1309, %v1375
        %v1408 = vadd.f32 %v1310, %v1376
        %v1409 = vadd.f32 %v1311, %v1377
        %v1410 = vadd.f32 %v1312, %v1378
        %v1411 = vadd.f32 %v1313, %v1379
        %v1412 = vadd.f32 %v1314, %v1380
        %v1413 = vadd.f32 %v1315, %v1381
        %v1414 = vadd.f32 %v1316, %v1382
        %v1415 = vadd.f32 %v1317, %v1383
        %v1416 = vadd.f32 %v1318, %v1384
        %v1417 = vadd.f32 %v1319, %v1385
        %v1418 = vadd.f32 %v1320, %v1386
        %v1419 = vadd.f32 %v1321, %v1387
        %v1420 = vadd.f32 %v1322, %v1388
        %v1421 = vadd.f32 %v1323, %v1389
        %v1422 = vadd.f32 %v1324, %v1390
        %v1423 = vadd.f32 %v1325, %v1391
        %v1424 = vadd.f32 %v1326, %v1392
        %v1425 = vadd.f32 %v1327, %v1393
        %v1426 = vadd.f32 %v1328, %v1394
        %v1427 = vadd.f32 %v1329, %v1395
        %v1428 = vadd.f32 %v1330, %v1396
        %v1429 = vadd.f32 %v1331, %v1397
        %v1430 = vadd.f32 %v1332, %v1398
        %v1431 = vadd.f32 %v1333, %v1399
        %v1432 = vadd.f32 %v1334, %v1400
        %v1433 = vld [vmem:[%s910 + $0x2] sm:$0xff]
        %v1434 = vld [vmem:[%s910 + $0xa] sm:$0xff]
        %v1435 = vld [vmem:[%s910 + $0x1a] sm:$0xff]
        %v1436 = vld [vmem:[%s910 + $0x22] sm:$0xff]
        %v1437 = vld [vmem:[%s910 + $0x32] sm:$0xff]
        %v1438 = vld [vmem:[%s910 + $0x3a] sm:$0xff]
        %v1439 = vld [vmem:[%s910 + $0x4a] sm:$0xff]
        %v1440 = vld [vmem:[%s910 + $0x52] sm:$0xff]
        %v1441 = vld [vmem:[%s910 + $0x62] sm:$0xff]
        %v1442 = vld [vmem:[%s910 + $0x6a] sm:$0xff]
        %v1443 = vld [vmem:[%s910 + $0x7a] sm:$0xff]
        %v1444 = vld [vmem:[%s910 + $0x82] sm:$0xff]
        %v1445 = vld [vmem:[%s910 + $0x92] sm:$0xff]
        %v1446 = vld [vmem:[%s910 + $0x9a] sm:$0xff]
        %v1447 = vld [vmem:[%s910 + $0xaa] sm:$0xff]
        %v1448 = vld [vmem:[%s910 + $0xb2] sm:$0xff]
        %v1449 = vld [vmem:[%s910 + $0xc2] sm:$0xff]
        %v1450 = vld [vmem:[%s910 + $0xca] sm:$0xff]
        %v1451 = vld [vmem:[%s910 + $0xda] sm:$0xff]
        %v1452 = vld [vmem:[%s910 + $0xe2] sm:$0xff]
        %v1453 = vld [vmem:[%s910 + $0xf2] sm:$0xff]
        %v1454 = vld [vmem:[%s910 + $0xfa] sm:$0xff]
        %v1455 = vld [vmem:[%s910 + $0x10a] sm:$0xff]
        %v1456 = vld [vmem:[%s910 + $0x112] sm:$0xff]
        %v1457 = vld [vmem:[%s910 + $0x122] sm:$0xff]
        %v1458 = vld [vmem:[%s910 + $0x12a] sm:$0xff]
        %v1459 = vld [vmem:[%s910 + $0x13a] sm:$0xff]
        %v1460 = vld [vmem:[%s910 + $0x142] sm:$0xff]
        %v1461 = vld [vmem:[%s910 + $0x152] sm:$0xff]
        %v1462 = vld [vmem:[%s910 + $0x15a] sm:$0xff]
        %v1463 = vld [vmem:[%s910 + $0x16a] sm:$0xff]
        %v1464 = vld [vmem:[%s910 + $0x172] sm:$0xff]
        %v1465 = vld [vmem:[#allocation10 + $0x5] sm:$0x1]
        %v1466 = vperm.slane %v1465, 0
        %v1467 = vmul.f32 %v1433, %v1466
        %v1468 = vmul.f32 %v1434, %v1466
        %v1469 = vmul.f32 %v1435, %v1466
        %v1470 = vmul.f32 %v1436, %v1466
        %v1471 = vmul.f32 %v1437, %v1466
        %v1472 = vmul.f32 %v1438, %v1466
        %v1473 = vmul.f32 %v1439, %v1466
        %v1474 = vmul.f32 %v1440, %v1466
        %v1475 = vmul.f32 %v1441, %v1466
        %v1476 = vmul.f32 %v1442, %v1466
        %v1477 = vmul.f32 %v1443, %v1466
        %v1478 = vmul.f32 %v1444, %v1466
        %v1479 = vmul.f32 %v1445, %v1466
        %v1480 = vmul.f32 %v1446, %v1466
        %v1481 = vmul.f32 %v1447, %v1466
        %v1482 = vmul.f32 %v1448, %v1466
        %v1483 = vmul.f32 %v1449, %v1466
        %v1484 = vmul.f32 %v1450, %v1466
        %v1485 = vmul.f32 %v1451, %v1466
        %v1486 = vmul.f32 %v1452, %v1466
        %v1487 = vmul.f32 %v1453, %v1466
        %v1488 = vmul.f32 %v1454, %v1466
        %v1489 = vmul.f32 %v1455, %v1466
        %v1490 = vmul.f32 %v1456, %v1466
        %v1491 = vmul.f32 %v1457, %v1466
        %v1492 = vmul.f32 %v1458, %v1466
        %v1493 = vmul.f32 %v1459, %v1466
        %v1494 = vmul.f32 %v1460, %v1466
        %v1495 = vmul.f32 %v1461, %v1466
        %v1496 = vmul.f32 %v1462, %v1466
        %v1497 = vmul.f32 %v1463, %v1466
        %v1498 = vmul.f32 %v1464, %v1466
        %v1499 = vadd.f32 %v1401, %v1467
        %v1500 = vadd.f32 %v1402, %v1468
        %v1501 = vadd.f32 %v1403, %v1469
        %v1502 = vadd.f32 %v1404, %v1470
        %v1503 = vadd.f32 %v1405, %v1471
        %v1504 = vadd.f32 %v1406, %v1472
        %v1505 = vadd.f32 %v1407, %v1473
        %v1506 = vadd.f32 %v1408, %v1474
        %v1507 = vadd.f32 %v1409, %v1475
        %v1508 = vadd.f32 %v1410, %v1476
        %v1509 = vadd.f32 %v1411, %v1477
        %v1510 = vadd.f32 %v1412, %v1478
        %v1511 = vadd.f32 %v1413, %v1479
        %v1512 = vadd.f32 %v1414, %v1480
        %v1513 = vadd.f32 %v1415, %v1481
        %v1514 = vadd.f32 %v1416, %v1482
        %v1515 = vadd.f32 %v1417, %v1483
        %v1516 = vadd.f32 %v1418, %v1484
        %v1517 = vadd.f32 %v1419, %v1485
        %v1518 = vadd.f32 %v1420, %v1486
        %v1519 = vadd.f32 %v1421, %v1487
        %v1520 = vadd.f32 %v1422, %v1488
        %v1521 = vadd.f32 %v1423, %v1489
        %v1522 = vadd.f32 %v1424, %v1490
        %v1523 = vadd.f32 %v1425, %v1491
        %v1524 = vadd.f32 %v1426, %v1492
        %v1525 = vadd.f32 %v1427, %v1493
        %v1526 = vadd.f32 %v1428, %v1494
        %v1527 = vadd.f32 %v1429, %v1495
        %v1528 = vadd.f32 %v1430, %v1496
        %v1529 = vadd.f32 %v1431, %v1497
        %v1530 = vadd.f32 %v1432, %v1498
        %s1531 = scalar_lea.vmem [#allocation2], 48
        %v1532 = vld [vmem:[%s1531] sm:$0xff]
        %v1533 = vld [vmem:[%s1531 + $0x8] sm:$0xff]
        %v1534 = vld [vmem:[%s1531 + $0x18] sm:$0xff]
        %v1535 = vld [vmem:[%s1531 + $0x20] sm:$0xff]
        %v1536 = vld [vmem:[%s1531 + $0x30] sm:$0xff]
        %v1537 = vld [vmem:[%s1531 + $0x38] sm:$0xff]
        %v1538 = vld [vmem:[%s1531 + $0x48] sm:$0xff]
        %v1539 = vld [vmem:[%s1531 + $0x50] sm:$0xff]
        %v1540 = vld [vmem:[%s1531 + $0x60] sm:$0xff]
        %v1541 = vld [vmem:[%s1531 + $0x68] sm:$0xff]
        %v1542 = vld [vmem:[%s1531 + $0x78] sm:$0xff]
        %v1543 = vld [vmem:[%s1531 + $0x80] sm:$0xff]
        %v1544 = vld [vmem:[%s1531 + $0x90] sm:$0xff]
        %v1545 = vld [vmem:[%s1531 + $0x98] sm:$0xff]
        %v1546 = vld [vmem:[%s1531 + $0xa8] sm:$0xff]
        %v1547 = vld [vmem:[%s1531 + $0xb0] sm:$0xff]
        %v1548 = vld [vmem:[%s1531 + $0xc0] sm:$0xff]
        %v1549 = vld [vmem:[%s1531 + $0xc8] sm:$0xff]
        %v1550 = vld [vmem:[%s1531 + $0xd8] sm:$0xff]
        %v1551 = vld [vmem:[%s1531 + $0xe0] sm:$0xff]
        %v1552 = vld [vmem:[%s1531 + $0xf0] sm:$0xff]
        %v1553 = vld [vmem:[%s1531 + $0xf8] sm:$0xff]
        %v1554 = vld [vmem:[%s1531 + $0x108] sm:$0xff]
        %v1555 = vld [vmem:[%s1531 + $0x110] sm:$0xff]
        %v1556 = vld [vmem:[%s1531 + $0x120] sm:$0xff]
        %v1557 = vld [vmem:[%s1531 + $0x128] sm:$0xff]
        %v1558 = vld [vmem:[%s1531 + $0x138] sm:$0xff]
        %v1559 = vld [vmem:[%s1531 + $0x140] sm:$0xff]
        %v1560 = vld [vmem:[%s1531 + $0x150] sm:$0xff]
        %v1561 = vld [vmem:[%s1531 + $0x158] sm:$0xff]
        %v1562 = vld [vmem:[%s1531 + $0x168] sm:$0xff]
        %v1563 = vld [vmem:[%s1531 + $0x170] sm:$0xff]
        %v1564 = vld [vmem:[#allocation10 + $0x6] sm:$0x1]
        %v1565 = vperm.slane %v1564, 0
        %v1566 = vmul.f32 %v1532, %v1565
        %v1567 = vmul.f32 %v1533, %v1565
        %v1568 = vmul.f32 %v1534, %v1565
        %v1569 = vmul.f32 %v1535, %v1565
        %v1570 = vmul.f32 %v1536, %v1565
        %v1571 = vmul.f32 %v1537, %v1565
        %v1572 = vmul.f32 %v1538, %v1565
        %v1573 = vmul.f32 %v1539, %v1565
        %v1574 = vmul.f32 %v1540, %v1565
        %v1575 = vmul.f32 %v1541, %v1565
        %v1576 = vmul.f32 %v1542, %v1565
        %v1577 = vmul.f32 %v1543, %v1565
        %v1578 = vmul.f32 %v1544, %v1565
        %v1579 = vmul.f32 %v1545, %v1565
        %v1580 = vmul.f32 %v1546, %v1565
        %v1581 = vmul.f32 %v1547, %v1565
        %v1582 = vmul.f32 %v1548, %v1565
        %v1583 = vmul.f32 %v1549, %v1565
        %v1584 = vmul.f32 %v1550, %v1565
        %v1585 = vmul.f32 %v1551, %v1565
        %v1586 = vmul.f32 %v1552, %v1565
        %v1587 = vmul.f32 %v1553, %v1565
        %v1588 = vmul.f32 %v1554, %v1565
        %v1589 = vmul.f32 %v1555, %v1565
        %v1590 = vmul.f32 %v1556, %v1565
        %v1591 = vmul.f32 %v1557, %v1565
        %v1592 = vmul.f32 %v1558, %v1565
        %v1593 = vmul.f32 %v1559, %v1565
        %v1594 = vmul.f32 %v1560, %v1565
        %v1595 = vmul.f32 %v1561, %v1565
        %v1596 = vmul.f32 %v1562, %v1565
        %v1597 = vmul.f32 %v1563, %v1565
        %v1598 = vadd.f32 %v1499, %v1566
        %v1599 = vadd.f32 %v1500, %v1567
        %v1600 = vadd.f32 %v1501, %v1568
        %v1601 = vadd.f32 %v1502, %v1569
        %v1602 = vadd.f32 %v1503, %v1570
        %v1603 = vadd.f32 %v1504, %v1571
        %v1604 = vadd.f32 %v1505, %v1572
        %v1605 = vadd.f32 %v1506, %v1573
        %v1606 = vadd.f32 %v1507, %v1574
        %v1607 = vadd.f32 %v1508, %v1575
        %v1608 = vadd.f32 %v1509, %v1576
        %v1609 = vadd.f32 %v1510, %v1577
        %v1610 = vadd.f32 %v1511, %v1578
        %v1611 = vadd.f32 %v1512, %v1579
        %v1612 = vadd.f32 %v1513, %v1580
        %v1613 = vadd.f32 %v1514, %v1581
        %v1614 = vadd.f32 %v1515, %v1582
        %v1615 = vadd.f32 %v1516, %v1583
        %v1616 = vadd.f32 %v1517, %v1584
        %v1617 = vadd.f32 %v1518, %v1585
        %v1618 = vadd.f32 %v1519, %v1586
        %v1619 = vadd.f32 %v1520, %v1587
        %v1620 = vadd.f32 %v1521, %v1588
        %v1621 = vadd.f32 %v1522, %v1589
        %v1622 = vadd.f32 %v1523, %v1590
        %v1623 = vadd.f32 %v1524, %v1591
        %v1624 = vadd.f32 %v1525, %v1592
        %v1625 = vadd.f32 %v1526, %v1593
        %v1626 = vadd.f32 %v1527, %v1594
        %v1627 = vadd.f32 %v1528, %v1595
        %v1628 = vadd.f32 %v1529, %v1596
        %v1629 = vadd.f32 %v1530, %v1597
        %v1630 = vld [vmem:[%s1531 + $0x1] sm:$0xff]
        %v1631 = vld [vmem:[%s1531 + $0x9] sm:$0xff]
        %v1632 = vld [vmem:[%s1531 + $0x19] sm:$0xff]
        %v1633 = vld [vmem:[%s1531 + $0x21] sm:$0xff]
        %v1634 = vld [vmem:[%s1531 + $0x31] sm:$0xff]
        %v1635 = vld [vmem:[%s1531 + $0x39] sm:$0xff]
        %v1636 = vld [vmem:[%s1531 + $0x49] sm:$0xff]
        %v1637 = vld [vmem:[%s1531 + $0x51] sm:$0xff]
        %v1638 = vld [vmem:[%s1531 + $0x61] sm:$0xff]
        %v1639 = vld [vmem:[%s1531 + $0x69] sm:$0xff]
        %v1640 = vld [vmem:[%s1531 + $0x79] sm:$0xff]
        %v1641 = vld [vmem:[%s1531 + $0x81] sm:$0xff]
        %v1642 = vld [vmem:[%s1531 + $0x91] sm:$0xff]
        %v1643 = vld [vmem:[%s1531 + $0x99] sm:$0xff]
        %v1644 = vld [vmem:[%s1531 + $0xa9] sm:$0xff]
        %v1645 = vld [vmem:[%s1531 + $0xb1] sm:$0xff]
        %v1646 = vld [vmem:[%s1531 + $0xc1] sm:$0xff]
        %v1647 = vld [vmem:[%s1531 + $0xc9] sm:$0xff]
        %v1648 = vld [vmem:[%s1531 + $0xd9] sm:$0xff]
        %v1649 = vld [vmem:[%s1531 + $0xe1] sm:$0xff]
        %v1650 = vld [vmem:[%s1531 + $0xf1] sm:$0xff]
        %v1651 = vld [vmem:[%s1531 + $0xf9] sm:$0xff]
        %v1652 = vld [vmem:[%s1531 + $0x109] sm:$0xff]
        %v1653 = vld [vmem:[%s1531 + $0x111] sm:$0xff]
        %v1654 = vld [vmem:[%s1531 + $0x121] sm:$0xff]
        %v1655 = vld [vmem:[%s1531 + $0x129] sm:$0xff]
        %v1656 = vld [vmem:[%s1531 + $0x139] sm:$0xff]
        %v1657 = vld [vmem:[%s1531 + $0x141] sm:$0xff]
        %v1658 = vld [vmem:[%s1531 + $0x151] sm:$0xff]
        %v1659 = vld [vmem:[%s1531 + $0x159] sm:$0xff]
        %v1660 = vld [vmem:[%s1531 + $0x169] sm:$0xff]
        %v1661 = vld [vmem:[%s1531 + $0x171] sm:$0xff]
        %v1662 = vld [vmem:[#allocation10 + $0x7] sm:$0x1]
        %v1663 = vperm.slane %v1662, 0
        %v1664 = vmul.f32 %v1630, %v1663
        %v1665 = vmul.f32 %v1631, %v1663
        %v1666 = vmul.f32 %v1632, %v1663
        %v1667 = vmul.f32 %v1633, %v1663
        %v1668 = vmul.f32 %v1634, %v1663
        %v1669 = vmul.f32 %v1635, %v1663
        %v1670 = vmul.f32 %v1636, %v1663
        %v1671 = vmul.f32 %v1637, %v1663
        %v1672 = vmul.f32 %v1638, %v1663
        %v1673 = vmul.f32 %v1639, %v1663
        %v1674 = vmul.f32 %v1640, %v1663
        %v1675 = vmul.f32 %v1641, %v1663
        %v1676 = vmul.f32 %v1642, %v1663
        %v1677 = vmul.f32 %v1643, %v1663
        %v1678 = vmul.f32 %v1644, %v1663
        %v1679 = vmul.f32 %v1645, %v1663
        %v1680 = vmul.f32 %v1646, %v1663
        %v1681 = vmul.f32 %v1647, %v1663
        %v1682 = vmul.f32 %v1648, %v1663
        %v1683 = vmul.f32 %v1649, %v1663
        %v1684 = vmul.f32 %v1650, %v1663
        %v1685 = vmul.f32 %v1651, %v1663
        %v1686 = vmul.f32 %v1652, %v1663
        %v1687 = vmul.f32 %v1653, %v1663
        %v1688 = vmul.f32 %v1654, %v1663
        %v1689 = vmul.f32 %v1655, %v1663
        %v1690 = vmul.f32 %v1656, %v1663
        %v1691 = vmul.f32 %v1657, %v1663
        %v1692 = vmul.f32 %v1658, %v1663
        %v1693 = vmul.f32 %v1659, %v1663
        %v1694 = vmul.f32 %v1660, %v1663
        %v1695 = vmul.f32 %v1661, %v1663
        %v1696 = vadd.f32 %v1598, %v1664
        %v1697 = vadd.f32 %v1599, %v1665
        %v1698 = vadd.f32 %v1600, %v1666
        %v1699 = vadd.f32 %v1601, %v1667
        %v1700 = vadd.f32 %v1602, %v1668
        %v1701 = vadd.f32 %v1603, %v1669
        %v1702 = vadd.f32 %v1604, %v1670
        %v1703 = vadd.f32 %v1605, %v1671
        %v1704 = vadd.f32 %v1606, %v1672
        %v1705 = vadd.f32 %v1607, %v1673
        %v1706 = vadd.f32 %v1608, %v1674
        %v1707 = vadd.f32 %v1609, %v1675
        %v1708 = vadd.f32 %v1610, %v1676
        %v1709 = vadd.f32 %v1611, %v1677
        %v1710 = vadd.f32 %v1612, %v1678
        %v1711 = vadd.f32 %v1613, %v1679
        %v1712 = vadd.f32 %v1614, %v1680
        %v1713 = vadd.f32 %v1615, %v1681
        %v1714 = vadd.f32 %v1616, %v1682
        %v1715 = vadd.f32 %v1617, %v1683
        %v1716 = vadd.f32 %v1618, %v1684
        %v1717 = vadd.f32 %v1619, %v1685
        %v1718 = vadd.f32 %v1620, %v1686
        %v1719 = vadd.f32 %v1621, %v1687
        %v1720 = vadd.f32 %v1622, %v1688
        %v1721 = vadd.f32 %v1623, %v1689
        %v1722 = vadd.f32 %v1624, %v1690
        %v1723 = vadd.f32 %v1625, %v1691
        %v1724 = vadd.f32 %v1626, %v1692
        %v1725 = vadd.f32 %v1627, %v1693
        %v1726 = vadd.f32 %v1628, %v1694
        %v1727 = vadd.f32 %v1629, %v1695
        %v1728 = vld [vmem:[%s1531 + $0x2] sm:$0xff]
        %v1729 = vld [vmem:[%s1531 + $0xa] sm:$0xff]
        %v1730 = vld [vmem:[%s1531 + $0x1a] sm:$0xff]
        %v1731 = vld [vmem:[%s1531 + $0x22] sm:$0xff]
        %v1732 = vld [vmem:[%s1531 + $0x32] sm:$0xff]
        %v1733 = vld [vmem:[%s1531 + $0x3a] sm:$0xff]
        %v1734 = vld [vmem:[%s1531 + $0x4a] sm:$0xff]
        %v1735 = vld [vmem:[%s1531 + $0x52] sm:$0xff]
        %v1736 = vld [vmem:[%s1531 + $0x62] sm:$0xff]
        %v1737 = vld [vmem:[%s1531 + $0x6a] sm:$0xff]
        %v1738 = vld [vmem:[%s1531 + $0x7a] sm:$0xff]
        %v1739 = vld [vmem:[%s1531 + $0x82] sm:$0xff]
        %v1740 = vld [vmem:[%s1531 + $0x92] sm:$0xff]
        %v1741 = vld [vmem:[%s1531 + $0x9a] sm:$0xff]
        %v1742 = vld [vmem:[%s1531 + $0xaa] sm:$0xff]
        %v1743 = vld [vmem:[%s1531 + $0xb2] sm:$0xff]
        %v1744 = vld [vmem:[%s1531 + $0xc2] sm:$0xff]
        %v1745 = vld [vmem:[%s1531 + $0xca] sm:$0xff]
        %v1746 = vld [vmem:[%s1531 + $0xda] sm:$0xff]
        %v1747 = vld [vmem:[%s1531 + $0xe2] sm:$0xff]
        %v1748 = vld [vmem:[%s1531 + $0xf2] sm:$0xff]
        %v1749 = vld [vmem:[%s1531 + $0xfa] sm:$0xff]
        %v1750 = vld [vmem:[%s1531 + $0x10a] sm:$0xff]
        %v1751 = vld [vmem:[%s1531 + $0x112] sm:$0xff]
        %v1752 = vld [vmem:[%s1531 + $0x122] sm:$0xff]
        %v1753 = vld [vmem:[%s1531 + $0x12a] sm:$0xff]
        %v1754 = vld [vmem:[%s1531 + $0x13a] sm:$0xff]
        %v1755 = vld [vmem:[%s1531 + $0x142] sm:$0xff]
        %v1756 = vld [vmem:[%s1531 + $0x152] sm:$0xff]
        %v1757 = vld [vmem:[%s1531 + $0x15a] sm:$0xff]
        %v1758 = vld [vmem:[%s1531 + $0x16a] sm:$0xff]
        %v1759 = vld [vmem:[%s1531 + $0x172] sm:$0xff]
        %v1760 = vld [vmem:[#allocation10 + $0x8] sm:$0x1]
        %v1761 = vperm.slane %v1760, 0
        %v1762 = vmul.f32 %v1728, %v1761
        %v1763 = vmul.f32 %v1729, %v1761
        %v1764 = vmul.f32 %v1730, %v1761
        %v1765 = vmul.f32 %v1731, %v1761
        %v1766 = vmul.f32 %v1732, %v1761
        %v1767 = vmul.f32 %v1733, %v1761
        %v1768 = vmul.f32 %v1734, %v1761
        %v1769 = vmul.f32 %v1735, %v1761
        %v1770 = vmul.f32 %v1736, %v1761
        %v1771 = vmul.f32 %v1737, %v1761
        %v1772 = vmul.f32 %v1738, %v1761
        %v1773 = vmul.f32 %v1739, %v1761
        %v1774 = vmul.f32 %v1740, %v1761
        %v1775 = vmul.f32 %v1741, %v1761
        %v1776 = vmul.f32 %v1742, %v1761
        %v1777 = vmul.f32 %v1743, %v1761
        %v1778 = vmul.f32 %v1744, %v1761
        %v1779 = vmul.f32 %v1745, %v1761
        %v1780 = vmul.f32 %v1746, %v1761
        %v1781 = vmul.f32 %v1747, %v1761
        %v1782 = vmul.f32 %v1748, %v1761
        %v1783 = vmul.f32 %v1749, %v1761
        %v1784 = vmul.f32 %v1750, %v1761
        %v1785 = vmul.f32 %v1751, %v1761
        %v1786 = vmul.f32 %v1752, %v1761
        %v1787 = vmul.f32 %v1753, %v1761
        %v1788 = vmul.f32 %v1754, %v1761
        %v1789 = vmul.f32 %v1755, %v1761
        %v1790 = vmul.f32 %v1756, %v1761
        %v1791 = vmul.f32 %v1757, %v1761
        %v1792 = vmul.f32 %v1758, %v1761
        %v1793 = vmul.f32 %v1759, %v1761
        %v1794 = vadd.f32 %v1696, %v1762
        %v1795 = vadd.f32 %v1697, %v1763
        %v1796 = vadd.f32 %v1698, %v1764
        %v1797 = vadd.f32 %v1699, %v1765
        %v1798 = vadd.f32 %v1700, %v1766
        %v1799 = vadd.f32 %v1701, %v1767
        %v1800 = vadd.f32 %v1702, %v1768
        %v1801 = vadd.f32 %v1703, %v1769
        %v1802 = vadd.f32 %v1704, %v1770
        %v1803 = vadd.f32 %v1705, %v1771
        %v1804 = vadd.f32 %v1706, %v1772
        %v1805 = vadd.f32 %v1707, %v1773
        %v1806 = vadd.f32 %v1708, %v1774
        %v1807 = vadd.f32 %v1709, %v1775
        %v1808 = vadd.f32 %v1710, %v1776
        %v1809 = vadd.f32 %v1711, %v1777
        %v1810 = vadd.f32 %v1712, %v1778
        %v1811 = vadd.f32 %v1713, %v1779
        %v1812 = vadd.f32 %v1714, %v1780
        %v1813 = vadd.f32 %v1715, %v1781
        %v1814 = vadd.f32 %v1716, %v1782
        %v1815 = vadd.f32 %v1717, %v1783
        %v1816 = vadd.f32 %v1718, %v1784
        %v1817 = vadd.f32 %v1719, %v1785
        %v1818 = vadd.f32 %v1720, %v1786
        %v1819 = vadd.f32 %v1721, %v1787
        %v1820 = vadd.f32 %v1722, %v1788
        %v1821 = vadd.f32 %v1723, %v1789
        %v1822 = vadd.f32 %v1724, %v1790
        %v1823 = vadd.f32 %v1725, %v1791
        %v1824 = vadd.f32 %v1726, %v1792
        %v1825 = vadd.f32 %v1727, %v1793
        %v1826 = vld [vmem:[%s410] sm:$0x1]
        %v1828 = vperm.slane %v1826, 0
        %v1830 = vadd.f32 %v1794, %v1828
        %v1831 = vadd.f32 %v1795, %v1828
        %v1832 = vadd.f32 %v1796, %v1828
        %v1833 = vadd.f32 %v1797, %v1828
        %v1834 = vadd.f32 %v1798, %v1828
        %v1835 = vadd.f32 %v1799, %v1828
        %v1836 = vadd.f32 %v1800, %v1828
        %v1837 = vadd.f32 %v1801, %v1828
        %v1838 = vadd.f32 %v1802, %v1828
        %v1839 = vadd.f32 %v1803, %v1828
        %v1840 = vadd.f32 %v1804, %v1828
        %v1841 = vadd.f32 %v1805, %v1828
        %v1842 = vadd.f32 %v1806, %v1828
        %v1843 = vadd.f32 %v1807, %v1828
        %v1844 = vadd.f32 %v1808, %v1828
        %v1845 = vadd.f32 %v1809, %v1828
        %v1846 = vadd.f32 %v1810, %v1828
        %v1847 = vadd.f32 %v1811, %v1828
        %v1848 = vadd.f32 %v1812, %v1828
        %v1849 = vadd.f32 %v1813, %v1828
        %v1850 = vadd.f32 %v1814, %v1828
        %v1851 = vadd.f32 %v1815, %v1828
        %v1852 = vadd.f32 %v1816, %v1828
        %v1853 = vadd.f32 %v1817, %v1828
        %v1854 = vadd.f32 %v1818, %v1828
        %v1855 = vadd.f32 %v1819, %v1828
        %v1856 = vadd.f32 %v1820, %v1828
        %v1857 = vadd.f32 %v1821, %v1828
        %v1858 = vadd.f32 %v1822, %v1828
        %v1859 = vadd.f32 %v1823, %v1828
        %v1860 = vadd.f32 %v1824, %v1828
        %v1861 = vadd.f32 %v1825, %v1828
        %v1862 = vmul.f32 %v1830, 0.5
        %v1863 = vmul.f32 %v1831, 0.5
        %v1864 = vmul.f32 %v1832, 0.5
        %v1865 = vmul.f32 %v1833, 0.5
        %v1866 = vmul.f32 %v1834, 0.5
        %v1867 = vmul.f32 %v1835, 0.5
        %v1868 = vmul.f32 %v1836, 0.5
        %v1869 = vmul.f32 %v1837, 0.5
        %v1870 = vmul.f32 %v1838, 0.5
        %v1871 = vmul.f32 %v1839, 0.5
        %v1872 = vmul.f32 %v1840, 0.5
        %v1873 = vmul.f32 %v1841, 0.5
        %v1874 = vmul.f32 %v1842, 0.5
        %v1875 = vmul.f32 %v1843, 0.5
        %v1876 = vmul.f32 %v1844, 0.5
        %v1877 = vmul.f32 %v1845, 0.5
        %v1878 = vmul.f32 %v1846, 0.5
        %v1879 = vmul.f32 %v1847, 0.5
        %v1880 = vmul.f32 %v1848, 0.5
        %v1881 = vmul.f32 %v1849, 0.5
        %v1882 = vmul.f32 %v1850, 0.5
        %v1883 = vmul.f32 %v1851, 0.5
        %v1884 = vmul.f32 %v1852, 0.5
        %v1885 = vmul.f32 %v1853, 0.5
        %v1886 = vmul.f32 %v1854, 0.5
        %v1887 = vmul.f32 %v1855, 0.5
        %v1888 = vmul.f32 %v1856, 0.5
        %v1889 = vmul.f32 %v1857, 0.5
        %v1890 = vmul.f32 %v1858, 0.5
        %v1891 = vmul.f32 %v1859, 0.5
        %v1892 = vmul.f32 %v1860, 0.5
        %v1893 = vmul.f32 %v1861, 0.5
        %v1894 = vmul.f32 %v1830, 0.70710677
        %v1895 = vmul.f32 %v1831, 0.70710677
        %v1896 = vmul.f32 %v1832, 0.70710677
        %v1897 = vmul.f32 %v1833, 0.70710677
        %v1898 = vmul.f32 %v1834, 0.70710677
        %v1899 = vmul.f32 %v1835, 0.70710677
        %v1900 = vmul.f32 %v1836, 0.70710677
        %v1901 = vmul.f32 %v1837, 0.70710677
        %v1902 = vmul.f32 %v1838, 0.70710677
        %v1903 = vmul.f32 %v1839, 0.70710677
        %v1904 = vmul.f32 %v1840, 0.70710677
        %v1905 = vmul.f32 %v1841, 0.70710677
        %v1906 = vmul.f32 %v1842, 0.70710677
        %v1907 = vmul.f32 %v1843, 0.70710677
        %v1908 = vmul.f32 %v1844, 0.70710677
        %v1909 = vmul.f32 %v1845, 0.70710677
        %v1910 = vmul.f32 %v1846, 0.70710677
        %v1911 = vmul.f32 %v1847, 0.70710677
        %v1912 = vmul.f32 %v1848, 0.70710677
        %v1913 = vmul.f32 %v1849, 0.70710677
        %v1914 = vmul.f32 %v1850, 0.70710677
        %v1915 = vmul.f32 %v1851, 0.70710677
        %v1916 = vmul.f32 %v1852, 0.70710677
        %v1917 = vmul.f32 %v1853, 0.70710677
        %v1918 = vmul.f32 %v1854, 0.70710677
        %v1919 = vmul.f32 %v1855, 0.70710677
        %v1920 = vmul.f32 %v1856, 0.70710677
        %v1921 = vmul.f32 %v1857, 0.70710677
        %v1922 = vmul.f32 %v1858, 0.70710677
        %v1923 = vmul.f32 %v1859, 0.70710677
        %v1924 = vmul.f32 %v1860, 0.70710677
        %v1925 = vmul.f32 %v1861, 0.70710677
        %v1926 = vmul.f32 %v1894, %v1894
        %v1927 = vmin.f32 16.0, %v1926
        %v1928 = vmul.f32 %v1927, 2.1237322e-06
        %v1929 = vadd.f32 %v1928, 0.00028619796
        %v1930 = vmul.f32 %v1927, %v1929
        %v1931 = vadd.f32 %v1930, 0.0036580483
        %v1932 = vmul.f32 %v1927, %v1931
        %v1933 = vadd.f32 %v1932, 0.05243302
        %v1934 = vmul.f32 %v1927, %v1933
        %v1935 = vadd.f32 %v1934, 0.18741608
        %v1936 = vmul.f32 %v1927, %v1935
        %v1937 = vadd.f32 %v1936, 1.1283791
        %v1938 = vmul.f32 %v1894, %v1937
        %v1939 = vmul.f32 %v1927, 3.8918573e-05
        %v1940 = vadd.f32 %v1939, 0.001143296
        %v1941 = vmul.f32 %v1927, %v1940
        %v1942 = vadd.f32 %v1941, 0.014752088
        %v1943 = vmul.f32 %v1927, %v1942
        %v1944 = vadd.f32 %v1943, 0.112945676
        %v1945 = vmul.f32 %v1927, %v1944
        %v1946 = vadd.f32 %v1945, 0.4994258
        %v1947 = vmul.f32 %v1927, %v1946
        %v1948 = vadd.f32 %v1947, 1.0
        %v1949 = vrcp.pop %v1948
        %v1950 = vmul.f32 %v1948, %v1949
        %v1951 = vsub.f32 1.0, %v1950
        %v1952 = vmul.f32 %v1949, %v1951
        %v1953 = vadd.f32 %v1949, %v1952
        %vm1954 = vweird.f32 %v1948
        %vm1955 = vweird.f32 %v1949
        %vm1956 = vmor %vm1954, %vm1955
        %v1957 = vsel %vm1956, %v1949, %v1953
        %v1958 = vand.u32 2147483647, %v1948
        %vm1959 = vcmp.eq.f32.partialorder %v1958, 8.507059e+37
        %v1960 = vand.u32 %v1948, 2147483648
        %v1961 = vor.u32 1.1754944e-38, %v1960
        %v1962 = vsel %vm1959, %v1961, %v1957
        %v1963 = vmul.f32 %v1938, %v1962
        %v1964 = vmin.f32 %v1963, 1.0
        %v1965 = vmax.f32 %v1964, -1.0
        %v1966 = vmul.f32 %v1895, %v1895
        %v1967 = vmin.f32 16.0, %v1966
        %v1968 = vmul.f32 %v1967, 2.1237322e-06
        %v1969 = vadd.f32 %v1968, 0.00028619796
        %v1970 = vmul.f32 %v1967, %v1969
        %v1971 = vadd.f32 %v1970, 0.0036580483
        %v1972 = vmul.f32 %v1967, %v1971
        %v1973 = vadd.f32 %v1972, 0.05243302
        %v1974 = vmul.f32 %v1967, %v1973
        %v1975 = vadd.f32 %v1974, 0.18741608
        %v1976 = vmul.f32 %v1967, %v1975
        %v1977 = vadd.f32 %v1976, 1.1283791
        %v1978 = vmul.f32 %v1895, %v1977
        %v1979 = vmul.f32 %v1967, 3.8918573e-05
        %v1980 = vadd.f32 %v1979, 0.001143296
        %v1981 = vmul.f32 %v1967, %v1980
        %v1982 = vadd.f32 %v1981, 0.014752088
        %v1983 = vmul.f32 %v1967, %v1982
        %v1984 = vadd.f32 %v1983, 0.112945676
        %v1985 = vmul.f32 %v1967, %v1984
        %v1986 = vadd.f32 %v1985, 0.4994258
        %v1987 = vmul.f32 %v1967, %v1986
        %v1988 = vadd.f32 %v1987, 1.0
        %v1989 = vrcp.pop %v1988
        %v1990 = vmul.f32 %v1988, %v1989
        %v1991 = vsub.f32 1.0, %v1990
        %v1992 = vmul.f32 %v1989, %v1991
        %v1993 = vadd.f32 %v1989, %v1992
        %vm1994 = vweird.f32 %v1988
        %vm1995 = vweird.f32 %v1989
        %vm1996 = vmor %vm1994, %vm1995
        %v1997 = vsel %vm1996, %v1989, %v1993
        %v1998 = vand.u32 2147483647, %v1988
        %vm1999 = vcmp.eq.f32.partialorder %v1998, 8.507059e+37
        %v2000 = vand.u32 %v1988, 2147483648
        %v2001 = vor.u32 1.1754944e-38, %v2000
        %v2002 = vsel %vm1999, %v2001, %v1997
        %v2003 = vmul.f32 %v1978, %v2002
        %v2004 = vmin.f32 %v2003, 1.0
        %v2005 = vmax.f32 %v2004, -1.0
        %v2006 = vmul.f32 %v1896, %v1896
        %v2007 = vmin.f32 16.0, %v2006
        %v2008 = vmul.f32 %v2007, 2.1237322e-06
        %v2009 = vadd.f32 %v2008, 0.00028619796
        %v2010 = vmul.f32 %v2007, %v2009
        %v2011 = vadd.f32 %v2010, 0.0036580483
        %v2012 = vmul.f32 %v2007, %v2011
        %v2013 = vadd.f32 %v2012, 0.05243302
        %v2014 = vmul.f32 %v2007, %v2013
        %v2015 = vadd.f32 %v2014, 0.18741608
        %v2016 = vmul.f32 %v2007, %v2015
        %v2017 = vadd.f32 %v2016, 1.1283791
        %v2018 = vmul.f32 %v1896, %v2017
        %v2019 = vmul.f32 %v2007, 3.8918573e-05
        %v2020 = vadd.f32 %v2019, 0.001143296
        %v2021 = vmul.f32 %v2007, %v2020
        %v2022 = vadd.f32 %v2021, 0.014752088
        %v2023 = vmul.f32 %v2007, %v2022
        %v2024 = vadd.f32 %v2023, 0.112945676
        %v2025 = vmul.f32 %v2007, %v2024
        %v2026 = vadd.f32 %v2025, 0.4994258
        %v2027 = vmul.f32 %v2007, %v2026
        %v2028 = vadd.f32 %v2027, 1.0
        %v2029 = vrcp.pop %v2028
        %v2030 = vmul.f32 %v2028, %v2029
        %v2031 = vsub.f32 1.0, %v2030
        %v2032 = vmul.f32 %v2029, %v2031
        %v2033 = vadd.f32 %v2029, %v2032
        %vm2034 = vweird.f32 %v2028
        %vm2035 = vweird.f32 %v2029
        %vm2036 = vmor %vm2034, %vm2035
        %v2037 = vsel %vm2036, %v2029, %v2033
        %v2038 = vand.u32 2147483647, %v2028
        %vm2039 = vcmp.eq.f32.partialorder %v2038, 8.507059e+37
        %v2040 = vand.u32 %v2028, 2147483648
        %v2041 = vor.u32 1.1754944e-38, %v2040
        %v2042 = vsel %vm2039, %v2041, %v2037
        %v2043 = vmul.f32 %v2018, %v2042
        %v2044 = vmin.f32 %v2043, 1.0
        %v2045 = vmax.f32 %v2044, -1.0
        %v2046 = vmul.f32 %v1897, %v1897
        %v2047 = vmin.f32 16.0, %v2046
        %v2048 = vmul.f32 %v2047, 2.1237322e-06
        %v2049 = vadd.f32 %v2048, 0.00028619796
        %v2050 = vmul.f32 %v2047, %v2049
        %v2051 = vadd.f32 %v2050, 0.0036580483
        %v2052 = vmul.f32 %v2047, %v2051
        %v2053 = vadd.f32 %v2052, 0.05243302
        %v2054 = vmul.f32 %v2047, %v2053
        %v2055 = vadd.f32 %v2054, 0.18741608
        %v2056 = vmul.f32 %v2047, %v2055
        %v2057 = vadd.f32 %v2056, 1.1283791
        %v2058 = vmul.f32 %v1897, %v2057
        %v2059 = vmul.f32 %v2047, 3.8918573e-05
        %v2060 = vadd.f32 %v2059, 0.001143296
        %v2061 = vmul.f32 %v2047, %v2060
        %v2062 = vadd.f32 %v2061, 0.014752088
        %v2063 = vmul.f32 %v2047, %v2062
        %v2064 = vadd.f32 %v2063, 0.112945676
        %v2065 = vmul.f32 %v2047, %v2064
        %v2066 = vadd.f32 %v2065, 0.4994258
        %v2067 = vmul.f32 %v2047, %v2066
        %v2068 = vadd.f32 %v2067, 1.0
        %v2069 = vrcp.pop %v2068
        %v2070 = vmul.f32 %v2068, %v2069
        %v2071 = vsub.f32 1.0, %v2070
        %v2072 = vmul.f32 %v2069, %v2071
        %v2073 = vadd.f32 %v2069, %v2072
        %vm2074 = vweird.f32 %v2068
        %vm2075 = vweird.f32 %v2069
        %vm2076 = vmor %vm2074, %vm2075
        %v2077 = vsel %vm2076, %v2069, %v2073
        %v2078 = vand.u32 2147483647, %v2068
        %vm2079 = vcmp.eq.f32.partialorder %v2078, 8.507059e+37
        %v2080 = vand.u32 %v2068, 2147483648
        %v2081 = vor.u32 1.1754944e-38, %v2080
        %v2082 = vsel %vm2079, %v2081, %v2077
        %v2083 = vmul.f32 %v2058, %v2082
        %v2084 = vmin.f32 %v2083, 1.0
        %v2085 = vmax.f32 %v2084, -1.0
        %v2086 = vmul.f32 %v1898, %v1898
        %v2087 = vmin.f32 16.0, %v2086
        %v2088 = vmul.f32 %v2087, 2.1237322e-06
        %v2089 = vadd.f32 %v2088, 0.00028619796
        %v2090 = vmul.f32 %v2087, %v2089
        %v2091 = vadd.f32 %v2090, 0.0036580483
        %v2092 = vmul.f32 %v2087, %v2091
        %v2093 = vadd.f32 %v2092, 0.05243302
        %v2094 = vmul.f32 %v2087, %v2093
        %v2095 = vadd.f32 %v2094, 0.18741608
        %v2096 = vmul.f32 %v2087, %v2095
        %v2097 = vadd.f32 %v2096, 1.1283791
        %v2098 = vmul.f32 %v1898, %v2097
        %v2099 = vmul.f32 %v2087, 3.8918573e-05
        %v2100 = vadd.f32 %v2099, 0.001143296
        %v2101 = vmul.f32 %v2087, %v2100
        %v2102 = vadd.f32 %v2101, 0.014752088
        %v2103 = vmul.f32 %v2087, %v2102
        %v2104 = vadd.f32 %v2103, 0.112945676
        %v2105 = vmul.f32 %v2087, %v2104
        %v2106 = vadd.f32 %v2105, 0.4994258
        %v2107 = vmul.f32 %v2087, %v2106
        %v2108 = vadd.f32 %v2107, 1.0
        %v2109 = vrcp.pop %v2108
        %v2110 = vmul.f32 %v2108, %v2109
        %v2111 = vsub.f32 1.0, %v2110
        %v2112 = vmul.f32 %v2109, %v2111
        %v2113 = vadd.f32 %v2109, %v2112
        %vm2114 = vweird.f32 %v2108
        %vm2115 = vweird.f32 %v2109
        %vm2116 = vmor %vm2114, %vm2115
        %v2117 = vsel %vm2116, %v2109, %v2113
        %v2118 = vand.u32 2147483647, %v2108
        %vm2119 = vcmp.eq.f32.partialorder %v2118, 8.507059e+37
        %v2120 = vand.u32 %v2108, 2147483648
        %v2121 = vor.u32 1.1754944e-38, %v2120
        %v2122 = vsel %vm2119, %v2121, %v2117
        %v2123 = vmul.f32 %v2098, %v2122
        %v2124 = vmin.f32 %v2123, 1.0
        %v2125 = vmax.f32 %v2124, -1.0
        %v2126 = vmul.f32 %v1899, %v1899
        %v2127 = vmin.f32 16.0, %v2126
        %v2128 = vmul.f32 %v2127, 2.1237322e-06
        %v2129 = vadd.f32 %v2128, 0.00028619796
        %v2130 = vmul.f32 %v2127, %v2129
        %v2131 = vadd.f32 %v2130, 0.0036580483
        %v2132 = vmul.f32 %v2127, %v2131
        %v2133 = vadd.f32 %v2132, 0.05243302
        %v2134 = vmul.f32 %v2127, %v2133
        %v2135 = vadd.f32 %v2134, 0.18741608
        %v2136 = vmul.f32 %v2127, %v2135
        %v2137 = vadd.f32 %v2136, 1.1283791
        %v2138 = vmul.f32 %v1899, %v2137
        %v2139 = vmul.f32 %v2127, 3.8918573e-05
        %v2140 = vadd.f32 %v2139, 0.001143296
        %v2141 = vmul.f32 %v2127, %v2140
        %v2142 = vadd.f32 %v2141, 0.014752088
        %v2143 = vmul.f32 %v2127, %v2142
        %v2144 = vadd.f32 %v2143, 0.112945676
        %v2145 = vmul.f32 %v2127, %v2144
        %v2146 = vadd.f32 %v2145, 0.4994258
        %v2147 = vmul.f32 %v2127, %v2146
        %v2148 = vadd.f32 %v2147, 1.0
        %v2149 = vrcp.pop %v2148
        %v2150 = vmul.f32 %v2148, %v2149
        %v2151 = vsub.f32 1.0, %v2150
        %v2152 = vmul.f32 %v2149, %v2151
        %v2153 = vadd.f32 %v2149, %v2152
        %vm2154 = vweird.f32 %v2148
        %vm2155 = vweird.f32 %v2149
        %vm2156 = vmor %vm2154, %vm2155
        %v2157 = vsel %vm2156, %v2149, %v2153
        %v2158 = vand.u32 2147483647, %v2148
        %vm2159 = vcmp.eq.f32.partialorder %v2158, 8.507059e+37
        %v2160 = vand.u32 %v2148, 2147483648
        %v2161 = vor.u32 1.1754944e-38, %v2160
        %v2162 = vsel %vm2159, %v2161, %v2157
        %v2163 = vmul.f32 %v2138, %v2162
        %v2164 = vmin.f32 %v2163, 1.0
        %v2165 = vmax.f32 %v2164, -1.0
        %v2166 = vmul.f32 %v1900, %v1900
        %v2167 = vmin.f32 16.0, %v2166
        %v2168 = vmul.f32 %v2167, 2.1237322e-06
        %v2169 = vadd.f32 %v2168, 0.00028619796
        %v2170 = vmul.f32 %v2167, %v2169
        %v2171 = vadd.f32 %v2170, 0.0036580483
        %v2172 = vmul.f32 %v2167, %v2171
        %v2173 = vadd.f32 %v2172, 0.05243302
        %v2174 = vmul.f32 %v2167, %v2173
        %v2175 = vadd.f32 %v2174, 0.18741608
        %v2176 = vmul.f32 %v2167, %v2175
        %v2177 = vadd.f32 %v2176, 1.1283791
        %v2178 = vmul.f32 %v1900, %v2177
        %v2179 = vmul.f32 %v2167, 3.8918573e-05
        %v2180 = vadd.f32 %v2179, 0.001143296
        %v2181 = vmul.f32 %v2167, %v2180
        %v2182 = vadd.f32 %v2181, 0.014752088
        %v2183 = vmul.f32 %v2167, %v2182
        %v2184 = vadd.f32 %v2183, 0.112945676
        %v2185 = vmul.f32 %v2167, %v2184
        %v2186 = vadd.f32 %v2185, 0.4994258
        %v2187 = vmul.f32 %v2167, %v2186
        %v2188 = vadd.f32 %v2187, 1.0
        %v2189 = vrcp.pop %v2188
        %v2190 = vmul.f32 %v2188, %v2189
        %v2191 = vsub.f32 1.0, %v2190
        %v2192 = vmul.f32 %v2189, %v2191
        %v2193 = vadd.f32 %v2189, %v2192
        %vm2194 = vweird.f32 %v2188
        %vm2195 = vweird.f32 %v2189
        %vm2196 = vmor %vm2194, %vm2195
        %v2197 = vsel %vm2196, %v2189, %v2193
        %v2198 = vand.u32 2147483647, %v2188
        %vm2199 = vcmp.eq.f32.partialorder %v2198, 8.507059e+37
        %v2200 = vand.u32 %v2188, 2147483648
        %v2201 = vor.u32 1.1754944e-38, %v2200
        %v2202 = vsel %vm2199, %v2201, %v2197
        %v2203 = vmul.f32 %v2178, %v2202
        %v2204 = vmin.f32 %v2203, 1.0
        %v2205 = vmax.f32 %v2204, -1.0
        %v2206 = vmul.f32 %v1901, %v1901
        %v2207 = vmin.f32 16.0, %v2206
        %v2208 = vmul.f32 %v2207, 2.1237322e-06
        %v2209 = vadd.f32 %v2208, 0.00028619796
        %v2210 = vmul.f32 %v2207, %v2209
        %v2211 = vadd.f32 %v2210, 0.0036580483
        %v2212 = vmul.f32 %v2207, %v2211
        %v2213 = vadd.f32 %v2212, 0.05243302
        %v2214 = vmul.f32 %v2207, %v2213
        %v2215 = vadd.f32 %v2214, 0.18741608
        %v2216 = vmul.f32 %v2207, %v2215
        %v2217 = vadd.f32 %v2216, 1.1283791
        %v2218 = vmul.f32 %v1901, %v2217
        %v2219 = vmul.f32 %v2207, 3.8918573e-05
        %v2220 = vadd.f32 %v2219, 0.001143296
        %v2221 = vmul.f32 %v2207, %v2220
        %v2222 = vadd.f32 %v2221, 0.014752088
        %v2223 = vmul.f32 %v2207, %v2222
        %v2224 = vadd.f32 %v2223, 0.112945676
        %v2225 = vmul.f32 %v2207, %v2224
        %v2226 = vadd.f32 %v2225, 0.4994258
        %v2227 = vmul.f32 %v2207, %v2226
        %v2228 = vadd.f32 %v2227, 1.0
        %v2229 = vrcp.pop %v2228
        %v2230 = vmul.f32 %v2228, %v2229
        %v2231 = vsub.f32 1.0, %v2230
        %v2232 = vmul.f32 %v2229, %v2231
        %v2233 = vadd.f32 %v2229, %v2232
        %vm2234 = vweird.f32 %v2228
        %vm2235 = vweird.f32 %v2229
        %vm2236 = vmor %vm2234, %vm2235
        %v2237 = vsel %vm2236, %v2229, %v2233
        %v2238 = vand.u32 2147483647, %v2228
        %vm2239 = vcmp.eq.f32.partialorder %v2238, 8.507059e+37
        %v2240 = vand.u32 %v2228, 2147483648
        %v2241 = vor.u32 1.1754944e-38, %v2240
        %v2242 = vsel %vm2239, %v2241, %v2237
        %v2243 = vmul.f32 %v2218, %v2242
        %v2244 = vmin.f32 %v2243, 1.0
        %v2245 = vmax.f32 %v2244, -1.0
        %v2246 = vmul.f32 %v1902, %v1902
        %v2247 = vmin.f32 16.0, %v2246
        %v2248 = vmul.f32 %v2247, 2.1237322e-06
        %v2249 = vadd.f32 %v2248, 0.00028619796
        %v2250 = vmul.f32 %v2247, %v2249
        %v2251 = vadd.f32 %v2250, 0.0036580483
        %v2252 = vmul.f32 %v2247, %v2251
        %v2253 = vadd.f32 %v2252, 0.05243302
        %v2254 = vmul.f32 %v2247, %v2253
        %v2255 = vadd.f32 %v2254, 0.18741608
        %v2256 = vmul.f32 %v2247, %v2255
        %v2257 = vadd.f32 %v2256, 1.1283791
        %v2258 = vmul.f32 %v1902, %v2257
        %v2259 = vmul.f32 %v2247, 3.8918573e-05
        %v2260 = vadd.f32 %v2259, 0.001143296
        %v2261 = vmul.f32 %v2247, %v2260
        %v2262 = vadd.f32 %v2261, 0.014752088
        %v2263 = vmul.f32 %v2247, %v2262
        %v2264 = vadd.f32 %v2263, 0.112945676
        %v2265 = vmul.f32 %v2247, %v2264
        %v2266 = vadd.f32 %v2265, 0.4994258
        %v2267 = vmul.f32 %v2247, %v2266
        %v2268 = vadd.f32 %v2267, 1.0
        %v2269 = vrcp.pop %v2268
        %v2270 = vmul.f32 %v2268, %v2269
        %v2271 = vsub.f32 1.0, %v2270
        %v2272 = vmul.f32 %v2269, %v2271
        %v2273 = vadd.f32 %v2269, %v2272
        %vm2274 = vweird.f32 %v2268
        %vm2275 = vweird.f32 %v2269
        %vm2276 = vmor %vm2274, %vm2275
        %v2277 = vsel %vm2276, %v2269, %v2273
        %v2278 = vand.u32 2147483647, %v2268
        %vm2279 = vcmp.eq.f32.partialorder %v2278, 8.507059e+37
        %v2280 = vand.u32 %v2268, 2147483648
        %v2281 = vor.u32 1.1754944e-38, %v2280
        %v2282 = vsel %vm2279, %v2281, %v2277
        %v2283 = vmul.f32 %v2258, %v2282
        %v2284 = vmin.f32 %v2283, 1.0
        %v2285 = vmax.f32 %v2284, -1.0
        %v2286 = vmul.f32 %v1903, %v1903
        %v2287 = vmin.f32 16.0, %v2286
        %v2288 = vmul.f32 %v2287, 2.1237322e-06
        %v2289 = vadd.f32 %v2288, 0.00028619796
        %v2290 = vmul.f32 %v2287, %v2289
        %v2291 = vadd.f32 %v2290, 0.0036580483
        %v2292 = vmul.f32 %v2287, %v2291
        %v2293 = vadd.f32 %v2292, 0.05243302
        %v2294 = vmul.f32 %v2287, %v2293
        %v2295 = vadd.f32 %v2294, 0.18741608
        %v2296 = vmul.f32 %v2287, %v2295
        %v2297 = vadd.f32 %v2296, 1.1283791
        %v2298 = vmul.f32 %v1903, %v2297
        %v2299 = vmul.f32 %v2287, 3.8918573e-05
        %v2300 = vadd.f32 %v2299, 0.001143296
        %v2301 = vmul.f32 %v2287, %v2300
        %v2302 = vadd.f32 %v2301, 0.014752088
        %v2303 = vmul.f32 %v2287, %v2302
        %v2304 = vadd.f32 %v2303, 0.112945676
        %v2305 = vmul.f32 %v2287, %v2304
        %v2306 = vadd.f32 %v2305, 0.4994258
        %v2307 = vmul.f32 %v2287, %v2306
        %v2308 = vadd.f32 %v2307, 1.0
        %v2309 = vrcp.pop %v2308
        %v2310 = vmul.f32 %v2308, %v2309
        %v2311 = vsub.f32 1.0, %v2310
        %v2312 = vmul.f32 %v2309, %v2311
        %v2313 = vadd.f32 %v2309, %v2312
        %vm2314 = vweird.f32 %v2308
        %vm2315 = vweird.f32 %v2309
        %vm2316 = vmor %vm2314, %vm2315
        %v2317 = vsel %vm2316, %v2309, %v2313
        %v2318 = vand.u32 2147483647, %v2308
        %vm2319 = vcmp.eq.f32.partialorder %v2318, 8.507059e+37
        %v2320 = vand.u32 %v2308, 2147483648
        %v2321 = vor.u32 1.1754944e-38, %v2320
        %v2322 = vsel %vm2319, %v2321, %v2317
        %v2323 = vmul.f32 %v2298, %v2322
        %v2324 = vmin.f32 %v2323, 1.0
        %v2325 = vmax.f32 %v2324, -1.0
        %v2326 = vmul.f32 %v1904, %v1904
        %v2327 = vmin.f32 16.0, %v2326
        %v2328 = vmul.f32 %v2327, 2.1237322e-06
        %v2329 = vadd.f32 %v2328, 0.00028619796
        %v2330 = vmul.f32 %v2327, %v2329
        %v2331 = vadd.f32 %v2330, 0.0036580483
        %v2332 = vmul.f32 %v2327, %v2331
        %v2333 = vadd.f32 %v2332, 0.05243302
        %v2334 = vmul.f32 %v2327, %v2333
        %v2335 = vadd.f32 %v2334, 0.18741608
        %v2336 = vmul.f32 %v2327, %v2335
        %v2337 = vadd.f32 %v2336, 1.1283791
        %v2338 = vmul.f32 %v1904, %v2337
        %v2339 = vmul.f32 %v2327, 3.8918573e-05
        %v2340 = vadd.f32 %v2339, 0.001143296
        %v2341 = vmul.f32 %v2327, %v2340
        %v2342 = vadd.f32 %v2341, 0.014752088
        %v2343 = vmul.f32 %v2327, %v2342
        %v2344 = vadd.f32 %v2343, 0.112945676
        %v2345 = vmul.f32 %v2327, %v2344
        %v2346 = vadd.f32 %v2345, 0.4994258
        %v2347 = vmul.f32 %v2327, %v2346
        %v2348 = vadd.f32 %v2347, 1.0
        %v2349 = vrcp.pop %v2348
        %v2350 = vmul.f32 %v2348, %v2349
        %v2351 = vsub.f32 1.0, %v2350
        %v2352 = vmul.f32 %v2349, %v2351
        %v2353 = vadd.f32 %v2349, %v2352
        %vm2354 = vweird.f32 %v2348
        %vm2355 = vweird.f32 %v2349
        %vm2356 = vmor %vm2354, %vm2355
        %v2357 = vsel %vm2356, %v2349, %v2353
        %v2358 = vand.u32 2147483647, %v2348
        %vm2359 = vcmp.eq.f32.partialorder %v2358, 8.507059e+37
        %v2360 = vand.u32 %v2348, 2147483648
        %v2361 = vor.u32 1.1754944e-38, %v2360
        %v2362 = vsel %vm2359, %v2361, %v2357
        %v2363 = vmul.f32 %v2338, %v2362
        %v2364 = vmin.f32 %v2363, 1.0
        %v2365 = vmax.f32 %v2364, -1.0
        %v2366 = vmul.f32 %v1905, %v1905
        %v2367 = vmin.f32 16.0, %v2366
        %v2368 = vmul.f32 %v2367, 2.1237322e-06
        %v2369 = vadd.f32 %v2368, 0.00028619796
        %v2370 = vmul.f32 %v2367, %v2369
        %v2371 = vadd.f32 %v2370, 0.0036580483
        %v2372 = vmul.f32 %v2367, %v2371
        %v2373 = vadd.f32 %v2372, 0.05243302
        %v2374 = vmul.f32 %v2367, %v2373
        %v2375 = vadd.f32 %v2374, 0.18741608
        %v2376 = vmul.f32 %v2367, %v2375
        %v2377 = vadd.f32 %v2376, 1.1283791
        %v2378 = vmul.f32 %v1905, %v2377
        %v2379 = vmul.f32 %v2367, 3.8918573e-05
        %v2380 = vadd.f32 %v2379, 0.001143296
        %v2381 = vmul.f32 %v2367, %v2380
        %v2382 = vadd.f32 %v2381, 0.014752088
        %v2383 = vmul.f32 %v2367, %v2382
        %v2384 = vadd.f32 %v2383, 0.112945676
        %v2385 = vmul.f32 %v2367, %v2384
        %v2386 = vadd.f32 %v2385, 0.4994258
        %v2387 = vmul.f32 %v2367, %v2386
        %v2388 = vadd.f32 %v2387, 1.0
        %v2389 = vrcp.pop %v2388
        %v2390 = vmul.f32 %v2388, %v2389
        %v2391 = vsub.f32 1.0, %v2390
        %v2392 = vmul.f32 %v2389, %v2391
        %v2393 = vadd.f32 %v2389, %v2392
        %vm2394 = vweird.f32 %v2388
        %vm2395 = vweird.f32 %v2389
        %vm2396 = vmor %vm2394, %vm2395
        %v2397 = vsel %vm2396, %v2389, %v2393
        %v2398 = vand.u32 2147483647, %v2388
        %vm2399 = vcmp.eq.f32.partialorder %v2398, 8.507059e+37
        %v2400 = vand.u32 %v2388, 2147483648
        %v2401 = vor.u32 1.1754944e-38, %v2400
        %v2402 = vsel %vm2399, %v2401, %v2397
        %v2403 = vmul.f32 %v2378, %v2402
        %v2404 = vmin.f32 %v2403, 1.0
        %v2405 = vmax.f32 %v2404, -1.0
        %v2406 = vmul.f32 %v1906, %v1906
        %v2407 = vmin.f32 16.0, %v2406
        %v2408 = vmul.f32 %v2407, 2.1237322e-06
        %v2409 = vadd.f32 %v2408, 0.00028619796
        %v2410 = vmul.f32 %v2407, %v2409
        %v2411 = vadd.f32 %v2410, 0.0036580483
        %v2412 = vmul.f32 %v2407, %v2411
        %v2413 = vadd.f32 %v2412, 0.05243302
        %v2414 = vmul.f32 %v2407, %v2413
        %v2415 = vadd.f32 %v2414, 0.18741608
        %v2416 = vmul.f32 %v2407, %v2415
        %v2417 = vadd.f32 %v2416, 1.1283791
        %v2418 = vmul.f32 %v1906, %v2417
        %v2419 = vmul.f32 %v2407, 3.8918573e-05
        %v2420 = vadd.f32 %v2419, 0.001143296
        %v2421 = vmul.f32 %v2407, %v2420
        %v2422 = vadd.f32 %v2421, 0.014752088
        %v2423 = vmul.f32 %v2407, %v2422
        %v2424 = vadd.f32 %v2423, 0.112945676
        %v2425 = vmul.f32 %v2407, %v2424
        %v2426 = vadd.f32 %v2425, 0.4994258
        %v2427 = vmul.f32 %v2407, %v2426
        %v2428 = vadd.f32 %v2427, 1.0
        %v2429 = vrcp.pop %v2428
        %v2430 = vmul.f32 %v2428, %v2429
        %v2431 = vsub.f32 1.0, %v2430
        %v2432 = vmul.f32 %v2429, %v2431
        %v2433 = vadd.f32 %v2429, %v2432
        %vm2434 = vweird.f32 %v2428
        %vm2435 = vweird.f32 %v2429
        %vm2436 = vmor %vm2434, %vm2435
        %v2437 = vsel %vm2436, %v2429, %v2433
        %v2438 = vand.u32 2147483647, %v2428
        %vm2439 = vcmp.eq.f32.partialorder %v2438, 8.507059e+37
        %v2440 = vand.u32 %v2428, 2147483648
        %v2441 = vor.u32 1.1754944e-38, %v2440
        %v2442 = vsel %vm2439, %v2441, %v2437
        %v2443 = vmul.f32 %v2418, %v2442
        %v2444 = vmin.f32 %v2443, 1.0
        %v2445 = vmax.f32 %v2444, -1.0
        %v2446 = vmul.f32 %v1907, %v1907
        %v2447 = vmin.f32 16.0, %v2446
        %v2448 = vmul.f32 %v2447, 2.1237322e-06
        %v2449 = vadd.f32 %v2448, 0.00028619796
        %v2450 = vmul.f32 %v2447, %v2449
        %v2451 = vadd.f32 %v2450, 0.0036580483
        %v2452 = vmul.f32 %v2447, %v2451
        %v2453 = vadd.f32 %v2452, 0.05243302
        %v2454 = vmul.f32 %v2447, %v2453
        %v2455 = vadd.f32 %v2454, 0.18741608
        %v2456 = vmul.f32 %v2447, %v2455
        %v2457 = vadd.f32 %v2456, 1.1283791
        %v2458 = vmul.f32 %v1907, %v2457
        %v2459 = vmul.f32 %v2447, 3.8918573e-05
        %v2460 = vadd.f32 %v2459, 0.001143296
        %v2461 = vmul.f32 %v2447, %v2460
        %v2462 = vadd.f32 %v2461, 0.014752088
        %v2463 = vmul.f32 %v2447, %v2462
        %v2464 = vadd.f32 %v2463, 0.112945676
        %v2465 = vmul.f32 %v2447, %v2464
        %v2466 = vadd.f32 %v2465, 0.4994258
        %v2467 = vmul.f32 %v2447, %v2466
        %v2468 = vadd.f32 %v2467, 1.0
        %v2469 = vrcp.pop %v2468
        %v2470 = vmul.f32 %v2468, %v2469
        %v2471 = vsub.f32 1.0, %v2470
        %v2472 = vmul.f32 %v2469, %v2471
        %v2473 = vadd.f32 %v2469, %v2472
        %vm2474 = vweird.f32 %v2468
        %vm2475 = vweird.f32 %v2469
        %vm2476 = vmor %vm2474, %vm2475
        %v2477 = vsel %vm2476, %v2469, %v2473
        %v2478 = vand.u32 2147483647, %v2468
        %vm2479 = vcmp.eq.f32.partialorder %v2478, 8.507059e+37
        %v2480 = vand.u32 %v2468, 2147483648
        %v2481 = vor.u32 1.1754944e-38, %v2480
        %v2482 = vsel %vm2479, %v2481, %v2477
        %v2483 = vmul.f32 %v2458, %v2482
        %v2484 = vmin.f32 %v2483, 1.0
        %v2485 = vmax.f32 %v2484, -1.0
        %v2486 = vmul.f32 %v1908, %v1908
        %v2487 = vmin.f32 16.0, %v2486
        %v2488 = vmul.f32 %v2487, 2.1237322e-06
        %v2489 = vadd.f32 %v2488, 0.00028619796
        %v2490 = vmul.f32 %v2487, %v2489
        %v2491 = vadd.f32 %v2490, 0.0036580483
        %v2492 = vmul.f32 %v2487, %v2491
        %v2493 = vadd.f32 %v2492, 0.05243302
        %v2494 = vmul.f32 %v2487, %v2493
        %v2495 = vadd.f32 %v2494, 0.18741608
        %v2496 = vmul.f32 %v2487, %v2495
        %v2497 = vadd.f32 %v2496, 1.1283791
        %v2498 = vmul.f32 %v1908, %v2497
        %v2499 = vmul.f32 %v2487, 3.8918573e-05
        %v2500 = vadd.f32 %v2499, 0.001143296
        %v2501 = vmul.f32 %v2487, %v2500
        %v2502 = vadd.f32 %v2501, 0.014752088
        %v2503 = vmul.f32 %v2487, %v2502
        %v2504 = vadd.f32 %v2503, 0.112945676
        %v2505 = vmul.f32 %v2487, %v2504
        %v2506 = vadd.f32 %v2505, 0.4994258
        %v2507 = vmul.f32 %v2487, %v2506
        %v2508 = vadd.f32 %v2507, 1.0
        %v2509 = vrcp.pop %v2508
        %v2510 = vmul.f32 %v2508, %v2509
        %v2511 = vsub.f32 1.0, %v2510
        %v2512 = vmul.f32 %v2509, %v2511
        %v2513 = vadd.f32 %v2509, %v2512
        %vm2514 = vweird.f32 %v2508
        %vm2515 = vweird.f32 %v2509
        %vm2516 = vmor %vm2514, %vm2515
        %v2517 = vsel %vm2516, %v2509, %v2513
        %v2518 = vand.u32 2147483647, %v2508
        %vm2519 = vcmp.eq.f32.partialorder %v2518, 8.507059e+37
        %v2520 = vand.u32 %v2508, 2147483648
        %v2521 = vor.u32 1.1754944e-38, %v2520
        %v2522 = vsel %vm2519, %v2521, %v2517
        %v2523 = vmul.f32 %v2498, %v2522
        %v2524 = vmin.f32 %v2523, 1.0
        %v2525 = vmax.f32 %v2524, -1.0
        %v2526 = vmul.f32 %v1909, %v1909
        %v2527 = vmin.f32 16.0, %v2526
        %v2528 = vmul.f32 %v2527, 2.1237322e-06
        %v2529 = vadd.f32 %v2528, 0.00028619796
        %v2530 = vmul.f32 %v2527, %v2529
        %v2531 = vadd.f32 %v2530, 0.0036580483
        %v2532 = vmul.f32 %v2527, %v2531
        %v2533 = vadd.f32 %v2532, 0.05243302
        %v2534 = vmul.f32 %v2527, %v2533
        %v2535 = vadd.f32 %v2534, 0.18741608
        %v2536 = vmul.f32 %v2527, %v2535
        %v2537 = vadd.f32 %v2536, 1.1283791
        %v2538 = vmul.f32 %v1909, %v2537
        %v2539 = vmul.f32 %v2527, 3.8918573e-05
        %v2540 = vadd.f32 %v2539, 0.001143296
        %v2541 = vmul.f32 %v2527, %v2540
        %v2542 = vadd.f32 %v2541, 0.014752088
        %v2543 = vmul.f32 %v2527, %v2542
        %v2544 = vadd.f32 %v2543, 0.112945676
        %v2545 = vmul.f32 %v2527, %v2544
        %v2546 = vadd.f32 %v2545, 0.4994258
        %v2547 = vmul.f32 %v2527, %v2546
        %v2548 = vadd.f32 %v2547, 1.0
        %v2549 = vrcp.pop %v2548
        %v2550 = vmul.f32 %v2548, %v2549
        %v2551 = vsub.f32 1.0, %v2550
        %v2552 = vmul.f32 %v2549, %v2551
        %v2553 = vadd.f32 %v2549, %v2552
        %vm2554 = vweird.f32 %v2548
        %vm2555 = vweird.f32 %v2549
        %vm2556 = vmor %vm2554, %vm2555
        %v2557 = vsel %vm2556, %v2549, %v2553
        %v2558 = vand.u32 2147483647, %v2548
        %vm2559 = vcmp.eq.f32.partialorder %v2558, 8.507059e+37
        %v2560 = vand.u32 %v2548, 2147483648
        %v2561 = vor.u32 1.1754944e-38, %v2560
        %v2562 = vsel %vm2559, %v2561, %v2557
        %v2563 = vmul.f32 %v2538, %v2562
        %v2564 = vmin.f32 %v2563, 1.0
        %v2565 = vmax.f32 %v2564, -1.0
        %v2566 = vmul.f32 %v1910, %v1910
        %v2567 = vmin.f32 16.0, %v2566
        %v2568 = vmul.f32 %v2567, 2.1237322e-06
        %v2569 = vadd.f32 %v2568, 0.00028619796
        %v2570 = vmul.f32 %v2567, %v2569
        %v2571 = vadd.f32 %v2570, 0.0036580483
        %v2572 = vmul.f32 %v2567, %v2571
        %v2573 = vadd.f32 %v2572, 0.05243302
        %v2574 = vmul.f32 %v2567, %v2573
        %v2575 = vadd.f32 %v2574, 0.18741608
        %v2576 = vmul.f32 %v2567, %v2575
        %v2577 = vadd.f32 %v2576, 1.1283791
        %v2578 = vmul.f32 %v1910, %v2577
        %v2579 = vmul.f32 %v2567, 3.8918573e-05
        %v2580 = vadd.f32 %v2579, 0.001143296
        %v2581 = vmul.f32 %v2567, %v2580
        %v2582 = vadd.f32 %v2581, 0.014752088
        %v2583 = vmul.f32 %v2567, %v2582
        %v2584 = vadd.f32 %v2583, 0.112945676
        %v2585 = vmul.f32 %v2567, %v2584
        %v2586 = vadd.f32 %v2585, 0.4994258
        %v2587 = vmul.f32 %v2567, %v2586
        %v2588 = vadd.f32 %v2587, 1.0
        %v2589 = vrcp.pop %v2588
        %v2590 = vmul.f32 %v2588, %v2589
        %v2591 = vsub.f32 1.0, %v2590
        %v2592 = vmul.f32 %v2589, %v2591
        %v2593 = vadd.f32 %v2589, %v2592
        %vm2594 = vweird.f32 %v2588
        %vm2595 = vweird.f32 %v2589
        %vm2596 = vmor %vm2594, %vm2595
        %v2597 = vsel %vm2596, %v2589, %v2593
        %v2598 = vand.u32 2147483647, %v2588
        %vm2599 = vcmp.eq.f32.partialorder %v2598, 8.507059e+37
        %v2600 = vand.u32 %v2588, 2147483648
        %v2601 = vor.u32 1.1754944e-38, %v2600
        %v2602 = vsel %vm2599, %v2601, %v2597
        %v2603 = vmul.f32 %v2578, %v2602
        %v2604 = vmin.f32 %v2603, 1.0
        %v2605 = vmax.f32 %v2604, -1.0
        %v2606 = vmul.f32 %v1911, %v1911
        %v2607 = vmin.f32 16.0, %v2606
        %v2608 = vmul.f32 %v2607, 2.1237322e-06
        %v2609 = vadd.f32 %v2608, 0.00028619796
        %v2610 = vmul.f32 %v2607, %v2609
        %v2611 = vadd.f32 %v2610, 0.0036580483
        %v2612 = vmul.f32 %v2607, %v2611
        %v2613 = vadd.f32 %v2612, 0.05243302
        %v2614 = vmul.f32 %v2607, %v2613
        %v2615 = vadd.f32 %v2614, 0.18741608
        %v2616 = vmul.f32 %v2607, %v2615
        %v2617 = vadd.f32 %v2616, 1.1283791
        %v2618 = vmul.f32 %v1911, %v2617
        %v2619 = vmul.f32 %v2607, 3.8918573e-05
        %v2620 = vadd.f32 %v2619, 0.001143296
        %v2621 = vmul.f32 %v2607, %v2620
        %v2622 = vadd.f32 %v2621, 0.014752088
        %v2623 = vmul.f32 %v2607, %v2622
        %v2624 = vadd.f32 %v2623, 0.112945676
        %v2625 = vmul.f32 %v2607, %v2624
        %v2626 = vadd.f32 %v2625, 0.4994258
        %v2627 = vmul.f32 %v2607, %v2626
        %v2628 = vadd.f32 %v2627, 1.0
        %v2629 = vrcp.pop %v2628
        %v2630 = vmul.f32 %v2628, %v2629
        %v2631 = vsub.f32 1.0, %v2630
        %v2632 = vmul.f32 %v2629, %v2631
        %v2633 = vadd.f32 %v2629, %v2632
        %vm2634 = vweird.f32 %v2628
        %vm2635 = vweird.f32 %v2629
        %vm2636 = vmor %vm2634, %vm2635
        %v2637 = vsel %vm2636, %v2629, %v2633
        %v2638 = vand.u32 2147483647, %v2628
        %vm2639 = vcmp.eq.f32.partialorder %v2638, 8.507059e+37
        %v2640 = vand.u32 %v2628, 2147483648
        %v2641 = vor.u32 1.1754944e-38, %v2640
        %v2642 = vsel %vm2639, %v2641, %v2637
        %v2643 = vmul.f32 %v2618, %v2642
        %v2644 = vmin.f32 %v2643, 1.0
        %v2645 = vmax.f32 %v2644, -1.0
        %v2646 = vmul.f32 %v1912, %v1912
        %v2647 = vmin.f32 16.0, %v2646
        %v2648 = vmul.f32 %v2647, 2.1237322e-06
        %v2649 = vadd.f32 %v2648, 0.00028619796
        %v2650 = vmul.f32 %v2647, %v2649
        %v2651 = vadd.f32 %v2650, 0.0036580483
        %v2652 = vmul.f32 %v2647, %v2651
        %v2653 = vadd.f32 %v2652, 0.05243302
        %v2654 = vmul.f32 %v2647, %v2653
        %v2655 = vadd.f32 %v2654, 0.18741608
        %v2656 = vmul.f32 %v2647, %v2655
        %v2657 = vadd.f32 %v2656, 1.1283791
        %v2658 = vmul.f32 %v1912, %v2657
        %v2659 = vmul.f32 %v2647, 3.8918573e-05
        %v2660 = vadd.f32 %v2659, 0.001143296
        %v2661 = vmul.f32 %v2647, %v2660
        %v2662 = vadd.f32 %v2661, 0.014752088
        %v2663 = vmul.f32 %v2647, %v2662
        %v2664 = vadd.f32 %v2663, 0.112945676
        %v2665 = vmul.f32 %v2647, %v2664
        %v2666 = vadd.f32 %v2665, 0.4994258
        %v2667 = vmul.f32 %v2647, %v2666
        %v2668 = vadd.f32 %v2667, 1.0
        %v2669 = vrcp.pop %v2668
        %v2670 = vmul.f32 %v2668, %v2669
        %v2671 = vsub.f32 1.0, %v2670
        %v2672 = vmul.f32 %v2669, %v2671
        %v2673 = vadd.f32 %v2669, %v2672
        %vm2674 = vweird.f32 %v2668
        %vm2675 = vweird.f32 %v2669
        %vm2676 = vmor %vm2674, %vm2675
        %v2677 = vsel %vm2676, %v2669, %v2673
        %v2678 = vand.u32 2147483647, %v2668
        %vm2679 = vcmp.eq.f32.partialorder %v2678, 8.507059e+37
        %v2680 = vand.u32 %v2668, 2147483648
        %v2681 = vor.u32 1.1754944e-38, %v2680
        %v2682 = vsel %vm2679, %v2681, %v2677
        %v2683 = vmul.f32 %v2658, %v2682
        %v2684 = vmin.f32 %v2683, 1.0
        %v2685 = vmax.f32 %v2684, -1.0
        %v2686 = vmul.f32 %v1913, %v1913
        %v2687 = vmin.f32 16.0, %v2686
        %v2688 = vmul.f32 %v2687, 2.1237322e-06
        %v2689 = vadd.f32 %v2688, 0.00028619796
        %v2690 = vmul.f32 %v2687, %v2689
        %v2691 = vadd.f32 %v2690, 0.0036580483
        %v2692 = vmul.f32 %v2687, %v2691
        %v2693 = vadd.f32 %v2692, 0.05243302
        %v2694 = vmul.f32 %v2687, %v2693
        %v2695 = vadd.f32 %v2694, 0.18741608
        %v2696 = vmul.f32 %v2687, %v2695
        %v2697 = vadd.f32 %v2696, 1.1283791
        %v2698 = vmul.f32 %v1913, %v2697
        %v2699 = vmul.f32 %v2687, 3.8918573e-05
        %v2700 = vadd.f32 %v2699, 0.001143296
        %v2701 = vmul.f32 %v2687, %v2700
        %v2702 = vadd.f32 %v2701, 0.014752088
        %v2703 = vmul.f32 %v2687, %v2702
        %v2704 = vadd.f32 %v2703, 0.112945676
        %v2705 = vmul.f32 %v2687, %v2704
        %v2706 = vadd.f32 %v2705, 0.4994258
        %v2707 = vmul.f32 %v2687, %v2706
        %v2708 = vadd.f32 %v2707, 1.0
        %v2709 = vrcp.pop %v2708
        %v2710 = vmul.f32 %v2708, %v2709
        %v2711 = vsub.f32 1.0, %v2710
        %v2712 = vmul.f32 %v2709, %v2711
        %v2713 = vadd.f32 %v2709, %v2712
        %vm2714 = vweird.f32 %v2708
        %vm2715 = vweird.f32 %v2709
        %vm2716 = vmor %vm2714, %vm2715
        %v2717 = vsel %vm2716, %v2709, %v2713
        %v2718 = vand.u32 2147483647, %v2708
        %vm2719 = vcmp.eq.f32.partialorder %v2718, 8.507059e+37
        %v2720 = vand.u32 %v2708, 2147483648
        %v2721 = vor.u32 1.1754944e-38, %v2720
        %v2722 = vsel %vm2719, %v2721, %v2717
        %v2723 = vmul.f32 %v2698, %v2722
        %v2724 = vmin.f32 %v2723, 1.0
        %v2725 = vmax.f32 %v2724, -1.0
        %v2726 = vmul.f32 %v1914, %v1914
        %v2727 = vmin.f32 16.0, %v2726
        %v2728 = vmul.f32 %v2727, 2.1237322e-06
        %v2729 = vadd.f32 %v2728, 0.00028619796
        %v2730 = vmul.f32 %v2727, %v2729
        %v2731 = vadd.f32 %v2730, 0.0036580483
        %v2732 = vmul.f32 %v2727, %v2731
        %v2733 = vadd.f32 %v2732, 0.05243302
        %v2734 = vmul.f32 %v2727, %v2733
        %v2735 = vadd.f32 %v2734, 0.18741608
        %v2736 = vmul.f32 %v2727, %v2735
        %v2737 = vadd.f32 %v2736, 1.1283791
        %v2738 = vmul.f32 %v1914, %v2737
        %v2739 = vmul.f32 %v2727, 3.8918573e-05
        %v2740 = vadd.f32 %v2739, 0.001143296
        %v2741 = vmul.f32 %v2727, %v2740
        %v2742 = vadd.f32 %v2741, 0.014752088
        %v2743 = vmul.f32 %v2727, %v2742
        %v2744 = vadd.f32 %v2743, 0.112945676
        %v2745 = vmul.f32 %v2727, %v2744
        %v2746 = vadd.f32 %v2745, 0.4994258
        %v2747 = vmul.f32 %v2727, %v2746
        %v2748 = vadd.f32 %v2747, 1.0
        %v2749 = vrcp.pop %v2748
        %v2750 = vmul.f32 %v2748, %v2749
        %v2751 = vsub.f32 1.0, %v2750
        %v2752 = vmul.f32 %v2749, %v2751
        %v2753 = vadd.f32 %v2749, %v2752
        %vm2754 = vweird.f32 %v2748
        %vm2755 = vweird.f32 %v2749
        %vm2756 = vmor %vm2754, %vm2755
        %v2757 = vsel %vm2756, %v2749, %v2753
        %v2758 = vand.u32 2147483647, %v2748
        %vm2759 = vcmp.eq.f32.partialorder %v2758, 8.507059e+37
        %v2760 = vand.u32 %v2748, 2147483648
        %v2761 = vor.u32 1.1754944e-38, %v2760
        %v2762 = vsel %vm2759, %v2761, %v2757
        %v2763 = vmul.f32 %v2738, %v2762
        %v2764 = vmin.f32 %v2763, 1.0
        %v2765 = vmax.f32 %v2764, -1.0
        %v2766 = vmul.f32 %v1915, %v1915
        %v2767 = vmin.f32 16.0, %v2766
        %v2768 = vmul.f32 %v2767, 2.1237322e-06
        %v2769 = vadd.f32 %v2768, 0.00028619796
        %v2770 = vmul.f32 %v2767, %v2769
        %v2771 = vadd.f32 %v2770, 0.0036580483
        %v2772 = vmul.f32 %v2767, %v2771
        %v2773 = vadd.f32 %v2772, 0.05243302
        %v2774 = vmul.f32 %v2767, %v2773
        %v2775 = vadd.f32 %v2774, 0.18741608
        %v2776 = vmul.f32 %v2767, %v2775
        %v2777 = vadd.f32 %v2776, 1.1283791
        %v2778 = vmul.f32 %v1915, %v2777
        %v2779 = vmul.f32 %v2767, 3.8918573e-05
        %v2780 = vadd.f32 %v2779, 0.001143296
        %v2781 = vmul.f32 %v2767, %v2780
        %v2782 = vadd.f32 %v2781, 0.014752088
        %v2783 = vmul.f32 %v2767, %v2782
        %v2784 = vadd.f32 %v2783, 0.112945676
        %v2785 = vmul.f32 %v2767, %v2784
        %v2786 = vadd.f32 %v2785, 0.4994258
        %v2787 = vmul.f32 %v2767, %v2786
        %v2788 = vadd.f32 %v2787, 1.0
        %v2789 = vrcp.pop %v2788
        %v2790 = vmul.f32 %v2788, %v2789
        %v2791 = vsub.f32 1.0, %v2790
        %v2792 = vmul.f32 %v2789, %v2791
        %v2793 = vadd.f32 %v2789, %v2792
        %vm2794 = vweird.f32 %v2788
        %vm2795 = vweird.f32 %v2789
        %vm2796 = vmor %vm2794, %vm2795
        %v2797 = vsel %vm2796, %v2789, %v2793
        %v2798 = vand.u32 2147483647, %v2788
        %vm2799 = vcmp.eq.f32.partialorder %v2798, 8.507059e+37
        %v2800 = vand.u32 %v2788, 2147483648
        %v2801 = vor.u32 1.1754944e-38, %v2800
        %v2802 = vsel %vm2799, %v2801, %v2797
        %v2803 = vmul.f32 %v2778, %v2802
        %v2804 = vmin.f32 %v2803, 1.0
        %v2805 = vmax.f32 %v2804, -1.0
        %v2806 = vmul.f32 %v1916, %v1916
        %v2807 = vmin.f32 16.0, %v2806
        %v2808 = vmul.f32 %v2807, 2.1237322e-06
        %v2809 = vadd.f32 %v2808, 0.00028619796
        %v2810 = vmul.f32 %v2807, %v2809
        %v2811 = vadd.f32 %v2810, 0.0036580483
        %v2812 = vmul.f32 %v2807, %v2811
        %v2813 = vadd.f32 %v2812, 0.05243302
        %v2814 = vmul.f32 %v2807, %v2813
        %v2815 = vadd.f32 %v2814, 0.18741608
        %v2816 = vmul.f32 %v2807, %v2815
        %v2817 = vadd.f32 %v2816, 1.1283791
        %v2818 = vmul.f32 %v1916, %v2817
        %v2819 = vmul.f32 %v2807, 3.8918573e-05
        %v2820 = vadd.f32 %v2819, 0.001143296
        %v2821 = vmul.f32 %v2807, %v2820
        %v2822 = vadd.f32 %v2821, 0.014752088
        %v2823 = vmul.f32 %v2807, %v2822
        %v2824 = vadd.f32 %v2823, 0.112945676
        %v2825 = vmul.f32 %v2807, %v2824
        %v2826 = vadd.f32 %v2825, 0.4994258
        %v2827 = vmul.f32 %v2807, %v2826
        %v2828 = vadd.f32 %v2827, 1.0
        %v2829 = vrcp.pop %v2828
        %v2830 = vmul.f32 %v2828, %v2829
        %v2831 = vsub.f32 1.0, %v2830
        %v2832 = vmul.f32 %v2829, %v2831
        %v2833 = vadd.f32 %v2829, %v2832
        %vm2834 = vweird.f32 %v2828
        %vm2835 = vweird.f32 %v2829
        %vm2836 = vmor %vm2834, %vm2835
        %v2837 = vsel %vm2836, %v2829, %v2833
        %v2838 = vand.u32 2147483647, %v2828
        %vm2839 = vcmp.eq.f32.partialorder %v2838, 8.507059e+37
        %v2840 = vand.u32 %v2828, 2147483648
        %v2841 = vor.u32 1.1754944e-38, %v2840
        %v2842 = vsel %vm2839, %v2841, %v2837
        %v2843 = vmul.f32 %v2818, %v2842
        %v2844 = vmin.f32 %v2843, 1.0
        %v2845 = vmax.f32 %v2844, -1.0
        %v2846 = vmul.f32 %v1917, %v1917
        %v2847 = vmin.f32 16.0, %v2846
        %v2848 = vmul.f32 %v2847, 2.1237322e-06
        %v2849 = vadd.f32 %v2848, 0.00028619796
        %v2850 = vmul.f32 %v2847, %v2849
        %v2851 = vadd.f32 %v2850, 0.0036580483
        %v2852 = vmul.f32 %v2847, %v2851
        %v2853 = vadd.f32 %v2852, 0.05243302
        %v2854 = vmul.f32 %v2847, %v2853
        %v2855 = vadd.f32 %v2854, 0.18741608
        %v2856 = vmul.f32 %v2847, %v2855
        %v2857 = vadd.f32 %v2856, 1.1283791
        %v2858 = vmul.f32 %v1917, %v2857
        %v2859 = vmul.f32 %v2847, 3.8918573e-05
        %v2860 = vadd.f32 %v2859, 0.001143296
        %v2861 = vmul.f32 %v2847, %v2860
        %v2862 = vadd.f32 %v2861, 0.014752088
        %v2863 = vmul.f32 %v2847, %v2862
        %v2864 = vadd.f32 %v2863, 0.112945676
        %v2865 = vmul.f32 %v2847, %v2864
        %v2866 = vadd.f32 %v2865, 0.4994258
        %v2867 = vmul.f32 %v2847, %v2866
        %v2868 = vadd.f32 %v2867, 1.0
        %v2869 = vrcp.pop %v2868
        %v2870 = vmul.f32 %v2868, %v2869
        %v2871 = vsub.f32 1.0, %v2870
        %v2872 = vmul.f32 %v2869, %v2871
        %v2873 = vadd.f32 %v2869, %v2872
        %vm2874 = vweird.f32 %v2868
        %vm2875 = vweird.f32 %v2869
        %vm2876 = vmor %vm2874, %vm2875
        %v2877 = vsel %vm2876, %v2869, %v2873
        %v2878 = vand.u32 2147483647, %v2868
        %vm2879 = vcmp.eq.f32.partialorder %v2878, 8.507059e+37
        %v2880 = vand.u32 %v2868, 2147483648
        %v2881 = vor.u32 1.1754944e-38, %v2880
        %v2882 = vsel %vm2879, %v2881, %v2877
        %v2883 = vmul.f32 %v2858, %v2882
        %v2884 = vmin.f32 %v2883, 1.0
        %v2885 = vmax.f32 %v2884, -1.0
        %v2886 = vmul.f32 %v1918, %v1918
        %v2887 = vmin.f32 16.0, %v2886
        %v2888 = vmul.f32 %v2887, 2.1237322e-06
        %v2889 = vadd.f32 %v2888, 0.00028619796
        %v2890 = vmul.f32 %v2887, %v2889
        %v2891 = vadd.f32 %v2890, 0.0036580483
        %v2892 = vmul.f32 %v2887, %v2891
        %v2893 = vadd.f32 %v2892, 0.05243302
        %v2894 = vmul.f32 %v2887, %v2893
        %v2895 = vadd.f32 %v2894, 0.18741608
        %v2896 = vmul.f32 %v2887, %v2895
        %v2897 = vadd.f32 %v2896, 1.1283791
        %v2898 = vmul.f32 %v1918, %v2897
        %v2899 = vmul.f32 %v2887, 3.8918573e-05
        %v2900 = vadd.f32 %v2899, 0.001143296
        %v2901 = vmul.f32 %v2887, %v2900
        %v2902 = vadd.f32 %v2901, 0.014752088
        %v2903 = vmul.f32 %v2887, %v2902
        %v2904 = vadd.f32 %v2903, 0.112945676
        %v2905 = vmul.f32 %v2887, %v2904
        %v2906 = vadd.f32 %v2905, 0.4994258
        %v2907 = vmul.f32 %v2887, %v2906
        %v2908 = vadd.f32 %v2907, 1.0
        %v2909 = vrcp.pop %v2908
        %v2910 = vmul.f32 %v2908, %v2909
        %v2911 = vsub.f32 1.0, %v2910
        %v2912 = vmul.f32 %v2909, %v2911
        %v2913 = vadd.f32 %v2909, %v2912
        %vm2914 = vweird.f32 %v2908
        %vm2915 = vweird.f32 %v2909
        %vm2916 = vmor %vm2914, %vm2915
        %v2917 = vsel %vm2916, %v2909, %v2913
        %v2918 = vand.u32 2147483647, %v2908
        %vm2919 = vcmp.eq.f32.partialorder %v2918, 8.507059e+37
        %v2920 = vand.u32 %v2908, 2147483648
        %v2921 = vor.u32 1.1754944e-38, %v2920
        %v2922 = vsel %vm2919, %v2921, %v2917
        %v2923 = vmul.f32 %v2898, %v2922
        %v2924 = vmin.f32 %v2923, 1.0
        %v2925 = vmax.f32 %v2924, -1.0
        %v2926 = vmul.f32 %v1919, %v1919
        %v2927 = vmin.f32 16.0, %v2926
        %v2928 = vmul.f32 %v2927, 2.1237322e-06
        %v2929 = vadd.f32 %v2928, 0.00028619796
        %v2930 = vmul.f32 %v2927, %v2929
        %v2931 = vadd.f32 %v2930, 0.0036580483
        %v2932 = vmul.f32 %v2927, %v2931
        %v2933 = vadd.f32 %v2932, 0.05243302
        %v2934 = vmul.f32 %v2927, %v2933
        %v2935 = vadd.f32 %v2934, 0.18741608
        %v2936 = vmul.f32 %v2927, %v2935
        %v2937 = vadd.f32 %v2936, 1.1283791
        %v2938 = vmul.f32 %v1919, %v2937
        %v2939 = vmul.f32 %v2927, 3.8918573e-05
        %v2940 = vadd.f32 %v2939, 0.001143296
        %v2941 = vmul.f32 %v2927, %v2940
        %v2942 = vadd.f32 %v2941, 0.014752088
        %v2943 = vmul.f32 %v2927, %v2942
        %v2944 = vadd.f32 %v2943, 0.112945676
        %v2945 = vmul.f32 %v2927, %v2944
        %v2946 = vadd.f32 %v2945, 0.4994258
        %v2947 = vmul.f32 %v2927, %v2946
        %v2948 = vadd.f32 %v2947, 1.0
        %v2949 = vrcp.pop %v2948
        %v2950 = vmul.f32 %v2948, %v2949
        %v2951 = vsub.f32 1.0, %v2950
        %v2952 = vmul.f32 %v2949, %v2951
        %v2953 = vadd.f32 %v2949, %v2952
        %vm2954 = vweird.f32 %v2948
        %vm2955 = vweird.f32 %v2949
        %vm2956 = vmor %vm2954, %vm2955
        %v2957 = vsel %vm2956, %v2949, %v2953
        %v2958 = vand.u32 2147483647, %v2948
        %vm2959 = vcmp.eq.f32.partialorder %v2958, 8.507059e+37
        %v2960 = vand.u32 %v2948, 2147483648
        %v2961 = vor.u32 1.1754944e-38, %v2960
        %v2962 = vsel %vm2959, %v2961, %v2957
        %v2963 = vmul.f32 %v2938, %v2962
        %v2964 = vmin.f32 %v2963, 1.0
        %v2965 = vmax.f32 %v2964, -1.0
        %v2966 = vmul.f32 %v1920, %v1920
        %v2967 = vmin.f32 16.0, %v2966
        %v2968 = vmul.f32 %v2967, 2.1237322e-06
        %v2969 = vadd.f32 %v2968, 0.00028619796
        %v2970 = vmul.f32 %v2967, %v2969
        %v2971 = vadd.f32 %v2970, 0.0036580483
        %v2972 = vmul.f32 %v2967, %v2971
        %v2973 = vadd.f32 %v2972, 0.05243302
        %v2974 = vmul.f32 %v2967, %v2973
        %v2975 = vadd.f32 %v2974, 0.18741608
        %v2976 = vmul.f32 %v2967, %v2975
        %v2977 = vadd.f32 %v2976, 1.1283791
        %v2978 = vmul.f32 %v1920, %v2977
        %v2979 = vmul.f32 %v2967, 3.8918573e-05
        %v2980 = vadd.f32 %v2979, 0.001143296
        %v2981 = vmul.f32 %v2967, %v2980
        %v2982 = vadd.f32 %v2981, 0.014752088
        %v2983 = vmul.f32 %v2967, %v2982
        %v2984 = vadd.f32 %v2983, 0.112945676
        %v2985 = vmul.f32 %v2967, %v2984
        %v2986 = vadd.f32 %v2985, 0.4994258
        %v2987 = vmul.f32 %v2967, %v2986
        %v2988 = vadd.f32 %v2987, 1.0
        %v2989 = vrcp.pop %v2988
        %v2990 = vmul.f32 %v2988, %v2989
        %v2991 = vsub.f32 1.0, %v2990
        %v2992 = vmul.f32 %v2989, %v2991
        %v2993 = vadd.f32 %v2989, %v2992
        %vm2994 = vweird.f32 %v2988
        %vm2995 = vweird.f32 %v2989
        %vm2996 = vmor %vm2994, %vm2995
        %v2997 = vsel %vm2996, %v2989, %v2993
        %v2998 = vand.u32 2147483647, %v2988
        %vm2999 = vcmp.eq.f32.partialorder %v2998, 8.507059e+37
        %v3000 = vand.u32 %v2988, 2147483648
        %v3001 = vor.u32 1.1754944e-38, %v3000
        %v3002 = vsel %vm2999, %v3001, %v2997
        %v3003 = vmul.f32 %v2978, %v3002
        %v3004 = vmin.f32 %v3003, 1.0
        %v3005 = vmax.f32 %v3004, -1.0
        %v3006 = vmul.f32 %v1921, %v1921
        %v3007 = vmin.f32 16.0, %v3006
        %v3008 = vmul.f32 %v3007, 2.1237322e-06
        %v3009 = vadd.f32 %v3008, 0.00028619796
        %v3010 = vmul.f32 %v3007, %v3009
        %v3011 = vadd.f32 %v3010, 0.0036580483
        %v3012 = vmul.f32 %v3007, %v3011
        %v3013 = vadd.f32 %v3012, 0.05243302
        %v3014 = vmul.f32 %v3007, %v3013
        %v3015 = vadd.f32 %v3014, 0.18741608
        %v3016 = vmul.f32 %v3007, %v3015
        %v3017 = vadd.f32 %v3016, 1.1283791
        %v3018 = vmul.f32 %v1921, %v3017
        %v3019 = vmul.f32 %v3007, 3.8918573e-05
        %v3020 = vadd.f32 %v3019, 0.001143296
        %v3021 = vmul.f32 %v3007, %v3020
        %v3022 = vadd.f32 %v3021, 0.014752088
        %v3023 = vmul.f32 %v3007, %v3022
        %v3024 = vadd.f32 %v3023, 0.112945676
        %v3025 = vmul.f32 %v3007, %v3024
        %v3026 = vadd.f32 %v3025, 0.4994258
        %v3027 = vmul.f32 %v3007, %v3026
        %v3028 = vadd.f32 %v3027, 1.0
        %v3029 = vrcp.pop %v3028
        %v3030 = vmul.f32 %v3028, %v3029
        %v3031 = vsub.f32 1.0, %v3030
        %v3032 = vmul.f32 %v3029, %v3031
        %v3033 = vadd.f32 %v3029, %v3032
        %vm3034 = vweird.f32 %v3028
        %vm3035 = vweird.f32 %v3029
        %vm3036 = vmor %vm3034, %vm3035
        %v3037 = vsel %vm3036, %v3029, %v3033
        %v3038 = vand.u32 2147483647, %v3028
        %vm3039 = vcmp.eq.f32.partialorder %v3038, 8.507059e+37
        %v3040 = vand.u32 %v3028, 2147483648
        %v3041 = vor.u32 1.1754944e-38, %v3040
        %v3042 = vsel %vm3039, %v3041, %v3037
        %v3043 = vmul.f32 %v3018, %v3042
        %v3044 = vmin.f32 %v3043, 1.0
        %v3045 = vmax.f32 %v3044, -1.0
        %v3046 = vmul.f32 %v1922, %v1922
        %v3047 = vmin.f32 16.0, %v3046
        %v3048 = vmul.f32 %v3047, 2.1237322e-06
        %v3049 = vadd.f32 %v3048, 0.00028619796
        %v3050 = vmul.f32 %v3047, %v3049
        %v3051 = vadd.f32 %v3050, 0.0036580483
        %v3052 = vmul.f32 %v3047, %v3051
        %v3053 = vadd.f32 %v3052, 0.05243302
        %v3054 = vmul.f32 %v3047, %v3053
        %v3055 = vadd.f32 %v3054, 0.18741608
        %v3056 = vmul.f32 %v3047, %v3055
        %v3057 = vadd.f32 %v3056, 1.1283791
        %v3058 = vmul.f32 %v1922, %v3057
        %v3059 = vmul.f32 %v3047, 3.8918573e-05
        %v3060 = vadd.f32 %v3059, 0.001143296
        %v3061 = vmul.f32 %v3047, %v3060
        %v3062 = vadd.f32 %v3061, 0.014752088
        %v3063 = vmul.f32 %v3047, %v3062
        %v3064 = vadd.f32 %v3063, 0.112945676
        %v3065 = vmul.f32 %v3047, %v3064
        %v3066 = vadd.f32 %v3065, 0.4994258
        %v3067 = vmul.f32 %v3047, %v3066
        %v3068 = vadd.f32 %v3067, 1.0
        %v3069 = vrcp.pop %v3068
        %v3070 = vmul.f32 %v3068, %v3069
        %v3071 = vsub.f32 1.0, %v3070
        %v3072 = vmul.f32 %v3069, %v3071
        %v3073 = vadd.f32 %v3069, %v3072
        %vm3074 = vweird.f32 %v3068
        %vm3075 = vweird.f32 %v3069
        %vm3076 = vmor %vm3074, %vm3075
        %v3077 = vsel %vm3076, %v3069, %v3073
        %v3078 = vand.u32 2147483647, %v3068
        %vm3079 = vcmp.eq.f32.partialorder %v3078, 8.507059e+37
        %v3080 = vand.u32 %v3068, 2147483648
        %v3081 = vor.u32 1.1754944e-38, %v3080
        %v3082 = vsel %vm3079, %v3081, %v3077
        %v3083 = vmul.f32 %v3058, %v3082
        %v3084 = vmin.f32 %v3083, 1.0
        %v3085 = vmax.f32 %v3084, -1.0
        %v3086 = vmul.f32 %v1923, %v1923
        %v3087 = vmin.f32 16.0, %v3086
        %v3088 = vmul.f32 %v3087, 2.1237322e-06
        %v3089 = vadd.f32 %v3088, 0.00028619796
        %v3090 = vmul.f32 %v3087, %v3089
        %v3091 = vadd.f32 %v3090, 0.0036580483
        %v3092 = vmul.f32 %v3087, %v3091
        %v3093 = vadd.f32 %v3092, 0.05243302
        %v3094 = vmul.f32 %v3087, %v3093
        %v3095 = vadd.f32 %v3094, 0.18741608
        %v3096 = vmul.f32 %v3087, %v3095
        %v3097 = vadd.f32 %v3096, 1.1283791
        %v3098 = vmul.f32 %v1923, %v3097
        %v3099 = vmul.f32 %v3087, 3.8918573e-05
        %v3100 = vadd.f32 %v3099, 0.001143296
        %v3101 = vmul.f32 %v3087, %v3100
        %v3102 = vadd.f32 %v3101, 0.014752088
        %v3103 = vmul.f32 %v3087, %v3102
        %v3104 = vadd.f32 %v3103, 0.112945676
        %v3105 = vmul.f32 %v3087, %v3104
        %v3106 = vadd.f32 %v3105, 0.4994258
        %v3107 = vmul.f32 %v3087, %v3106
        %v3108 = vadd.f32 %v3107, 1.0
        %v3109 = vrcp.pop %v3108
        %v3110 = vmul.f32 %v3108, %v3109
        %v3111 = vsub.f32 1.0, %v3110
        %v3112 = vmul.f32 %v3109, %v3111
        %v3113 = vadd.f32 %v3109, %v3112
        %vm3114 = vweird.f32 %v3108
        %vm3115 = vweird.f32 %v3109
        %vm3116 = vmor %vm3114, %vm3115
        %v3117 = vsel %vm3116, %v3109, %v3113
        %v3118 = vand.u32 2147483647, %v3108
        %vm3119 = vcmp.eq.f32.partialorder %v3118, 8.507059e+37
        %v3120 = vand.u32 %v3108, 2147483648
        %v3121 = vor.u32 1.1754944e-38, %v3120
        %v3122 = vsel %vm3119, %v3121, %v3117
        %v3123 = vmul.f32 %v3098, %v3122
        %v3124 = vmin.f32 %v3123, 1.0
        %v3125 = vmax.f32 %v3124, -1.0
        %v3126 = vmul.f32 %v1924, %v1924
        %v3127 = vmin.f32 16.0, %v3126
        %v3128 = vmul.f32 %v3127, 2.1237322e-06
        %v3129 = vadd.f32 %v3128, 0.00028619796
        %v3130 = vmul.f32 %v3127, %v3129
        %v3131 = vadd.f32 %v3130, 0.0036580483
        %v3132 = vmul.f32 %v3127, %v3131
        %v3133 = vadd.f32 %v3132, 0.05243302
        %v3134 = vmul.f32 %v3127, %v3133
        %v3135 = vadd.f32 %v3134, 0.18741608
        %v3136 = vmul.f32 %v3127, %v3135
        %v3137 = vadd.f32 %v3136, 1.1283791
        %v3138 = vmul.f32 %v1924, %v3137
        %v3139 = vmul.f32 %v3127, 3.8918573e-05
        %v3140 = vadd.f32 %v3139, 0.001143296
        %v3141 = vmul.f32 %v3127, %v3140
        %v3142 = vadd.f32 %v3141, 0.014752088
        %v3143 = vmul.f32 %v3127, %v3142
        %v3144 = vadd.f32 %v3143, 0.112945676
        %v3145 = vmul.f32 %v3127, %v3144
        %v3146 = vadd.f32 %v3145, 0.4994258
        %v3147 = vmul.f32 %v3127, %v3146
        %v3148 = vadd.f32 %v3147, 1.0
        %v3149 = vrcp.pop %v3148
        %v3150 = vmul.f32 %v3148, %v3149
        %v3151 = vsub.f32 1.0, %v3150
        %v3152 = vmul.f32 %v3149, %v3151
        %v3153 = vadd.f32 %v3149, %v3152
        %vm3154 = vweird.f32 %v3148
        %vm3155 = vweird.f32 %v3149
        %vm3156 = vmor %vm3154, %vm3155
        %v3157 = vsel %vm3156, %v3149, %v3153
        %v3158 = vand.u32 2147483647, %v3148
        %vm3159 = vcmp.eq.f32.partialorder %v3158, 8.507059e+37
        %v3160 = vand.u32 %v3148, 2147483648
        %v3161 = vor.u32 1.1754944e-38, %v3160
        %v3162 = vsel %vm3159, %v3161, %v3157
        %v3163 = vmul.f32 %v3138, %v3162
        %v3164 = vmin.f32 %v3163, 1.0
        %v3165 = vmax.f32 %v3164, -1.0
        %v3166 = vmul.f32 %v1925, %v1925
        %v3167 = vmin.f32 16.0, %v3166
        %v3168 = vmul.f32 %v3167, 2.1237322e-06
        %v3169 = vadd.f32 %v3168, 0.00028619796
        %v3170 = vmul.f32 %v3167, %v3169
        %v3171 = vadd.f32 %v3170, 0.0036580483
        %v3172 = vmul.f32 %v3167, %v3171
        %v3173 = vadd.f32 %v3172, 0.05243302
        %v3174 = vmul.f32 %v3167, %v3173
        %v3175 = vadd.f32 %v3174, 0.18741608
        %v3176 = vmul.f32 %v3167, %v3175
        %v3177 = vadd.f32 %v3176, 1.1283791
        %v3178 = vmul.f32 %v1925, %v3177
        %v3179 = vmul.f32 %v3167, 3.8918573e-05
        %v3180 = vadd.f32 %v3179, 0.001143296
        %v3181 = vmul.f32 %v3167, %v3180
        %v3182 = vadd.f32 %v3181, 0.014752088
        %v3183 = vmul.f32 %v3167, %v3182
        %v3184 = vadd.f32 %v3183, 0.112945676
        %v3185 = vmul.f32 %v3167, %v3184
        %v3186 = vadd.f32 %v3185, 0.4994258
        %v3187 = vmul.f32 %v3167, %v3186
        %v3188 = vadd.f32 %v3187, 1.0
        %v3189 = vrcp.pop %v3188
        %v3190 = vmul.f32 %v3188, %v3189
        %v3191 = vsub.f32 1.0, %v3190
        %v3192 = vmul.f32 %v3189, %v3191
        %v3193 = vadd.f32 %v3189, %v3192
        %vm3194 = vweird.f32 %v3188
        %vm3195 = vweird.f32 %v3189
        %vm3196 = vmor %vm3194, %vm3195
        %v3197 = vsel %vm3196, %v3189, %v3193
        %v3198 = vand.u32 2147483647, %v3188
        %vm3199 = vcmp.eq.f32.partialorder %v3198, 8.507059e+37
        %v3200 = vand.u32 %v3188, 2147483648
        %v3201 = vor.u32 1.1754944e-38, %v3200
        %v3202 = vsel %vm3199, %v3201, %v3197
        %v3203 = vmul.f32 %v3178, %v3202
        %v3204 = vmin.f32 %v3203, 1.0
        %v3205 = vmax.f32 %v3204, -1.0
        %v3206 = vadd.f32 %v1965, 1.0
        %v3207 = vadd.f32 %v2005, 1.0
        %v3208 = vadd.f32 %v2045, 1.0
        %v3209 = vadd.f32 %v2085, 1.0
        %v3210 = vadd.f32 %v2125, 1.0
        %v3211 = vadd.f32 %v2165, 1.0
        %v3212 = vadd.f32 %v2205, 1.0
        %v3213 = vadd.f32 %v2245, 1.0
        %v3214 = vadd.f32 %v2285, 1.0
        %v3215 = vadd.f32 %v2325, 1.0
        %v3216 = vadd.f32 %v2365, 1.0
        %v3217 = vadd.f32 %v2405, 1.0
        %v3218 = vadd.f32 %v2445, 1.0
        %v3219 = vadd.f32 %v2485, 1.0
        %v3220 = vadd.f32 %v2525, 1.0
        %v3221 = vadd.f32 %v2565, 1.0
        %v3222 = vadd.f32 %v2605, 1.0
        %v3223 = vadd.f32 %v2645, 1.0
        %v3224 = vadd.f32 %v2685, 1.0
        %v3225 = vadd.f32 %v2725, 1.0
        %v3226 = vadd.f32 %v2765, 1.0
        %v3227 = vadd.f32 %v2805, 1.0
        %v3228 = vadd.f32 %v2845, 1.0
        %v3229 = vadd.f32 %v2885, 1.0
        %v3230 = vadd.f32 %v2925, 1.0
        %v3231 = vadd.f32 %v2965, 1.0
        %v3232 = vadd.f32 %v3005, 1.0
        %v3233 = vadd.f32 %v3045, 1.0
        %v3234 = vadd.f32 %v3085, 1.0
        %v3235 = vadd.f32 %v3125, 1.0
        %v3236 = vadd.f32 %v3165, 1.0
        %v3237 = vadd.f32 %v3205, 1.0
        %v3238 = vmul.f32 %v1862, %v3206
        %v3239 = vmul.f32 %v1863, %v3207
        %v3240 = vmul.f32 %v1864, %v3208
        %v3241 = vmul.f32 %v1865, %v3209
        %v3242 = vmul.f32 %v1866, %v3210
        %v3243 = vmul.f32 %v1867, %v3211
        %v3244 = vmul.f32 %v1868, %v3212
        %v3245 = vmul.f32 %v1869, %v3213
        %v3246 = vmul.f32 %v1870, %v3214
        %v3247 = vmul.f32 %v1871, %v3215
        %v3248 = vmul.f32 %v1872, %v3216
        %v3249 = vmul.f32 %v1873, %v3217
        %v3250 = vmul.f32 %v1874, %v3218
        %v3251 = vmul.f32 %v1875, %v3219
        %v3252 = vmul.f32 %v1876, %v3220
        %v3253 = vmul.f32 %v1877, %v3221
        %v3254 = vmul.f32 %v1878, %v3222
        %v3255 = vmul.f32 %v1879, %v3223
        %v3256 = vmul.f32 %v1880, %v3224
        %v3257 = vmul.f32 %v1881, %v3225
        %v3258 = vmul.f32 %v1882, %v3226
        %v3259 = vmul.f32 %v1883, %v3227
        %v3260 = vmul.f32 %v1884, %v3228
        %v3261 = vmul.f32 %v1885, %v3229
        %v3262 = vmul.f32 %v1886, %v3230
        %v3263 = vmul.f32 %v1887, %v3231
        %v3264 = vmul.f32 %v1888, %v3232
        %v3265 = vmul.f32 %v1889, %v3233
        %v3266 = vmul.f32 %v1890, %v3234
        %v3267 = vmul.f32 %v1891, %v3235
        %v3268 = vmul.f32 %v1892, %v3236
        %v3269 = vmul.f32 %v1893, %v3237
        %3270 = vst [vmem:[#allocation3 + $0x2] sm:$0xff] %v3238
        %3271 = vst [vmem:[#allocation3 + $0xa] sm:$0xff] %v3239
        %3272 = vst [vmem:[#allocation3 + $0x1a] sm:$0xff] %v3240
        %3273 = vst [vmem:[#allocation3 + $0x22] sm:$0xff] %v3241
        %3274 = vst [vmem:[#allocation3 + $0x32] sm:$0xff] %v3242
        %3275 = vst [vmem:[#allocation3 + $0x3a] sm:$0xff] %v3243
        %3276 = vst [vmem:[#allocation3 + $0x4a] sm:$0xff] %v3244
        %3277 = vst [vmem:[#allocation3 + $0x52] sm:$0xff] %v3245
        %3278 = vst [vmem:[#allocation3 + $0x62] sm:$0xff] %v3246
        %3279 = vst [vmem:[#allocation3 + $0x6a] sm:$0xff] %v3247
        %3280 = vst [vmem:[#allocation3 + $0x7a] sm:$0xff] %v3248
        %3281 = vst [vmem:[#allocation3 + $0x82] sm:$0xff] %v3249
        %3282 = vst [vmem:[#allocation3 + $0x92] sm:$0xff] %v3250
        %3283 = vst [vmem:[#allocation3 + $0x9a] sm:$0xff] %v3251
        %3284 = vst [vmem:[#allocation3 + $0xaa] sm:$0xff] %v3252
        %3285 = vst [vmem:[#allocation3 + $0xb2] sm:$0xff] %v3253
        %3286 = vst [vmem:[#allocation3 + $0xc2] sm:$0xff] %v3254
        %3287 = vst [vmem:[#allocation3 + $0xca] sm:$0xff] %v3255
        %3288 = vst [vmem:[#allocation3 + $0xda] sm:$0xff] %v3256
        %3289 = vst [vmem:[#allocation3 + $0xe2] sm:$0xff] %v3257
        %3290 = vst [vmem:[#allocation3 + $0xf2] sm:$0xff] %v3258
        %3291 = vst [vmem:[#allocation3 + $0xfa] sm:$0xff] %v3259
        %3292 = vst [vmem:[#allocation3 + $0x10a] sm:$0xff] %v3260
        %3293 = vst [vmem:[#allocation3 + $0x112] sm:$0xff] %v3261
        %3294 = vst [vmem:[#allocation3 + $0x122] sm:$0xff] %v3262
        %3295 = vst [vmem:[#allocation3 + $0x12a] sm:$0xff] %v3263
        %3296 = vst [vmem:[#allocation3 + $0x13a] sm:$0xff] %v3264
        %3297 = vst [vmem:[#allocation3 + $0x142] sm:$0xff] %v3265
        %3298 = vst [vmem:[#allocation3 + $0x152] sm:$0xff] %v3266
        %3299 = vst [vmem:[#allocation3 + $0x15a] sm:$0xff] %v3267
        %3300 = vst [vmem:[#allocation3 + $0x16a] sm:$0xff] %v3268
        %3301 = vst [vmem:[#allocation3 + $0x172] sm:$0xff] %v3269
        %s3302 = smul.u32 %s31, 128
        %v3303 = vstv %s3302
        %v3304 = vadd.s32 %v591, %v3303
        %v3305 = vld [vmem:[#allocation3 + $0x4] sm:$0xff]
        %v3306 = vld [vmem:[#allocation3 + $0xc] sm:$0xff]
        %v3307 = vld [vmem:[#allocation3 + $0x1c] sm:$0xff]
        %v3308 = vld [vmem:[#allocation3 + $0x24] sm:$0xff]
        %v3309 = vld [vmem:[#allocation3 + $0x34] sm:$0xff]
        %v3310 = vld [vmem:[#allocation3 + $0x3c] sm:$0xff]
        %v3311 = vld [vmem:[#allocation3 + $0x4c] sm:$0xff]
        %v3312 = vld [vmem:[#allocation3 + $0x54] sm:$0xff]
        %v3313 = vld [vmem:[#allocation3 + $0x64] sm:$0xff]
        %v3314 = vld [vmem:[#allocation3 + $0x6c] sm:$0xff]
        %v3315 = vld [vmem:[#allocation3 + $0x7c] sm:$0xff]
        %v3316 = vld [vmem:[#allocation3 + $0x84] sm:$0xff]
        %v3317 = vld [vmem:[#allocation3 + $0x94] sm:$0xff]
        %v3318 = vld [vmem:[#allocation3 + $0x9c] sm:$0xff]
        %v3319 = vld [vmem:[#allocation3 + $0xac] sm:$0xff]
        %v3320 = vld [vmem:[#allocation3 + $0xb4] sm:$0xff]
        %v3321 = vld [vmem:[#allocation3 + $0xc4] sm:$0xff]
        %v3322 = vld [vmem:[#allocation3 + $0xcc] sm:$0xff]
        %v3323 = vld [vmem:[#allocation3 + $0xdc] sm:$0xff]
        %v3324 = vld [vmem:[#allocation3 + $0xe4] sm:$0xff]
        %v3325 = vld [vmem:[#allocation3 + $0xf4] sm:$0xff]
        %v3326 = vld [vmem:[#allocation3 + $0xfc] sm:$0xff]
        %v3327 = vld [vmem:[#allocation3 + $0x10c] sm:$0xff]
        %v3328 = vld [vmem:[#allocation3 + $0x114] sm:$0xff]
        %v3329 = vld [vmem:[#allocation3 + $0x124] sm:$0xff]
        %v3330 = vld [vmem:[#allocation3 + $0x12c] sm:$0xff]
        %v3331 = vld [vmem:[#allocation3 + $0x13c] sm:$0xff]
        %v3332 = vld [vmem:[#allocation3 + $0x144] sm:$0xff]
        %v3333 = vld [vmem:[#allocation3 + $0x154] sm:$0xff]
        %v3334 = vld [vmem:[#allocation3 + $0x15c] sm:$0xff]
        %v3335 = vld [vmem:[#allocation3 + $0x16c] sm:$0xff]
        %v3336 = vld [vmem:[#allocation3 + $0x174] sm:$0xff]
        %vm3337 = vcmp.ge.s32.totalorder %v3304, 0
        %vm3338 = vcmp.lt.s32.totalorder %v3304, 4
        %vm3339 = vmand %vm3337, %vm3338
        %v3340 = vsel %vm3339, 1, 0
        %vm3341 = vcmp.eq.s32.totalorder %v3340, 1
        %v3342 = vsel %vm3341, %v3305, 0.0
        %v3343 = vsel %vm3341, %v3306, 0.0
        %v3344 = vsel %vm3341, %v3307, 0.0
        %v3345 = vsel %vm3341, %v3308, 0.0
        %v3346 = vsel %vm3341, %v3309, 0.0
        %v3347 = vsel %vm3341, %v3310, 0.0
        %v3348 = vsel %vm3341, %v3311, 0.0
        %v3349 = vsel %vm3341, %v3312, 0.0
        %v3350 = vsel %vm3341, %v3313, 0.0
        %v3351 = vsel %vm3341, %v3314, 0.0
        %v3352 = vsel %vm3341, %v3315, 0.0
        %v3353 = vsel %vm3341, %v3316, 0.0
        %v3354 = vsel %vm3341, %v3317, 0.0
        %v3355 = vsel %vm3341, %v3318, 0.0
        %v3356 = vsel %vm3341, %v3319, 0.0
        %v3357 = vsel %vm3341, %v3320, 0.0
        %v3358 = vsel %vm3341, %v3321, 0.0
        %v3359 = vsel %vm3341, %v3322, 0.0
        %v3360 = vsel %vm3341, %v3323, 0.0
        %v3361 = vsel %vm3341, %v3324, 0.0
        %v3362 = vsel %vm3341, %v3325, 0.0
        %v3363 = vsel %vm3341, %v3326, 0.0
        %v3364 = vsel %vm3341, %v3327, 0.0
        %v3365 = vsel %vm3341, %v3328, 0.0
        %v3366 = vsel %vm3341, %v3329, 0.0
        %v3367 = vsel %vm3341, %v3330, 0.0
        %v3368 = vsel %vm3341, %v3331, 0.0
        %v3369 = vsel %vm3341, %v3332, 0.0
        %v3370 = vsel %vm3341, %v3333, 0.0
        %v3371 = vsel %vm3341, %v3334, 0.0
        %v3372 = vsel %vm3341, %v3335, 0.0
        %v3373 = vsel %vm3341, %v3336, 0.0
        %v3374 = vld [vmem:[#allocation3 + $0x3] sm:$0xff]
        %v3375 = vld [vmem:[#allocation3 + $0xb] sm:$0xff]
        %v3376 = vld [vmem:[#allocation3 + $0x1b] sm:$0xff]
        %v3377 = vld [vmem:[#allocation3 + $0x23] sm:$0xff]
        %v3378 = vld [vmem:[#allocation3 + $0x33] sm:$0xff]
        %v3379 = vld [vmem:[#allocation3 + $0x3b] sm:$0xff]
        %v3380 = vld [vmem:[#allocation3 + $0x4b] sm:$0xff]
        %v3381 = vld [vmem:[#allocation3 + $0x53] sm:$0xff]
        %v3382 = vld [vmem:[#allocation3 + $0x63] sm:$0xff]
        %v3383 = vld [vmem:[#allocation3 + $0x6b] sm:$0xff]
        %v3384 = vld [vmem:[#allocation3 + $0x7b] sm:$0xff]
        %v3385 = vld [vmem:[#allocation3 + $0x83] sm:$0xff]
        %v3386 = vld [vmem:[#allocation3 + $0x93] sm:$0xff]
        %v3387 = vld [vmem:[#allocation3 + $0x9b] sm:$0xff]
        %v3388 = vld [vmem:[#allocation3 + $0xab] sm:$0xff]
        %v3389 = vld [vmem:[#allocation3 + $0xb3] sm:$0xff]
        %v3390 = vld [vmem:[#allocation3 + $0xc3] sm:$0xff]
        %v3391 = vld [vmem:[#allocation3 + $0xcb] sm:$0xff]
        %v3392 = vld [vmem:[#allocation3 + $0xdb] sm:$0xff]
        %v3393 = vld [vmem:[#allocation3 + $0xe3] sm:$0xff]
        %v3394 = vld [vmem:[#allocation3 + $0xf3] sm:$0xff]
        %v3395 = vld [vmem:[#allocation3 + $0xfb] sm:$0xff]
        %v3396 = vld [vmem:[#allocation3 + $0x10b] sm:$0xff]
        %v3397 = vld [vmem:[#allocation3 + $0x113] sm:$0xff]
        %v3398 = vld [vmem:[#allocation3 + $0x123] sm:$0xff]
        %v3399 = vld [vmem:[#allocation3 + $0x12b] sm:$0xff]
        %v3400 = vld [vmem:[#allocation3 + $0x13b] sm:$0xff]
        %v3401 = vld [vmem:[#allocation3 + $0x143] sm:$0xff]
        %v3402 = vld [vmem:[#allocation3 + $0x153] sm:$0xff]
        %v3403 = vld [vmem:[#allocation3 + $0x15b] sm:$0xff]
        %v3404 = vld [vmem:[#allocation3 + $0x16b] sm:$0xff]
        %v3405 = vld [vmem:[#allocation3 + $0x173] sm:$0xff]
        %vm3406 = vcmp.ge.s32.totalorder %v3304, 4
        %vm3407 = vcmp.lt.s32.totalorder %v3304, 8
        %vm3408 = vmand %vm3406, %vm3407
        %v3409 = vsel %vm3408, 1, 0
        %vm3410 = vcmp.eq.s32.totalorder %v3409, 1
        %v3411 = vsel %vm3410, %v3374, %v3342
        %v3412 = vsel %vm3410, %v3375, %v3343
        %v3413 = vsel %vm3410, %v3376, %v3344
        %v3414 = vsel %vm3410, %v3377, %v3345
        %v3415 = vsel %vm3410, %v3378, %v3346
        %v3416 = vsel %vm3410, %v3379, %v3347
        %v3417 = vsel %vm3410, %v3380, %v3348
        %v3418 = vsel %vm3410, %v3381, %v3349
        %v3419 = vsel %vm3410, %v3382, %v3350
        %v3420 = vsel %vm3410, %v3383, %v3351
        %v3421 = vsel %vm3410, %v3384, %v3352
        %v3422 = vsel %vm3410, %v3385, %v3353
        %v3423 = vsel %vm3410, %v3386, %v3354
        %v3424 = vsel %vm3410, %v3387, %v3355
        %v3425 = vsel %vm3410, %v3388, %v3356
        %v3426 = vsel %vm3410, %v3389, %v3357
        %v3427 = vsel %vm3410, %v3390, %v3358
        %v3428 = vsel %vm3410, %v3391, %v3359
        %v3429 = vsel %vm3410, %v3392, %v3360
        %v3430 = vsel %vm3410, %v3393, %v3361
        %v3431 = vsel %vm3410, %v3394, %v3362
        %v3432 = vsel %vm3410, %v3395, %v3363
        %v3433 = vsel %vm3410, %v3396, %v3364
        %v3434 = vsel %vm3410, %v3397, %v3365
        %v3435 = vsel %vm3410, %v3398, %v3366
        %v3436 = vsel %vm3410, %v3399, %v3367
        %v3437 = vsel %vm3410, %v3400, %v3368
        %v3438 = vsel %vm3410, %v3401, %v3369
        %v3439 = vsel %vm3410, %v3402, %v3370
        %v3440 = vsel %vm3410, %v3403, %v3371
        %v3441 = vsel %vm3410, %v3404, %v3372
        %v3442 = vsel %vm3410, %v3405, %v3373
        %v3443 = vld [vmem:[#allocation3 + $0x2] sm:$0xff]
        %v3444 = vld [vmem:[#allocation3 + $0xa] sm:$0xff]
        %v3445 = vld [vmem:[#allocation3 + $0x1a] sm:$0xff]
        %v3446 = vld [vmem:[#allocation3 + $0x22] sm:$0xff]
        %v3447 = vld [vmem:[#allocation3 + $0x32] sm:$0xff]
        %v3448 = vld [vmem:[#allocation3 + $0x3a] sm:$0xff]
        %v3449 = vld [vmem:[#allocation3 + $0x4a] sm:$0xff]
        %v3450 = vld [vmem:[#allocation3 + $0x52] sm:$0xff]
        %v3451 = vld [vmem:[#allocation3 + $0x62] sm:$0xff]
        %v3452 = vld [vmem:[#allocation3 + $0x6a] sm:$0xff]
        %v3453 = vld [vmem:[#allocation3 + $0x7a] sm:$0xff]
        %v3454 = vld [vmem:[#allocation3 + $0x82] sm:$0xff]
        %v3455 = vld [vmem:[#allocation3 + $0x92] sm:$0xff]
        %v3456 = vld [vmem:[#allocation3 + $0x9a] sm:$0xff]
        %v3457 = vld [vmem:[#allocation3 + $0xaa] sm:$0xff]
        %v3458 = vld [vmem:[#allocation3 + $0xb2] sm:$0xff]
        %v3459 = vld [vmem:[#allocation3 + $0xc2] sm:$0xff]
        %v3460 = vld [vmem:[#allocation3 + $0xca] sm:$0xff]
        %v3461 = vld [vmem:[#allocation3 + $0xda] sm:$0xff]
        %v3462 = vld [vmem:[#allocation3 + $0xe2] sm:$0xff]
        %v3463 = vld [vmem:[#allocation3 + $0xf2] sm:$0xff]
        %v3464 = vld [vmem:[#allocation3 + $0xfa] sm:$0xff]
        %v3465 = vld [vmem:[#allocation3 + $0x10a] sm:$0xff]
        %v3466 = vld [vmem:[#allocation3 + $0x112] sm:$0xff]
        %v3467 = vld [vmem:[#allocation3 + $0x122] sm:$0xff]
        %v3468 = vld [vmem:[#allocation3 + $0x12a] sm:$0xff]
        %v3469 = vld [vmem:[#allocation3 + $0x13a] sm:$0xff]
        %v3470 = vld [vmem:[#allocation3 + $0x142] sm:$0xff]
        %v3471 = vld [vmem:[#allocation3 + $0x152] sm:$0xff]
        %v3472 = vld [vmem:[#allocation3 + $0x15a] sm:$0xff]
        %v3473 = vld [vmem:[#allocation3 + $0x16a] sm:$0xff]
        %v3474 = vld [vmem:[#allocation3 + $0x172] sm:$0xff]
        %vm3475 = vcmp.ge.s32.totalorder %v3304, 8
        %vm3476 = vcmp.lt.s32.totalorder %v3304, 12
        %vm3477 = vmand %vm3475, %vm3476
        %v3478 = vsel %vm3477, 1, 0
        %vm3479 = vcmp.eq.s32.totalorder %v3478, 1
        %v3480 = vsel %vm3479, %v3443, %v3411
        %v3481 = vsel %vm3479, %v3444, %v3412
        %v3482 = vsel %vm3479, %v3445, %v3413
        %v3483 = vsel %vm3479, %v3446, %v3414
        %v3484 = vsel %vm3479, %v3447, %v3415
        %v3485 = vsel %vm3479, %v3448, %v3416
        %v3486 = vsel %vm3479, %v3449, %v3417
        %v3487 = vsel %vm3479, %v3450, %v3418
        %v3488 = vsel %vm3479, %v3451, %v3419
        %v3489 = vsel %vm3479, %v3452, %v3420
        %v3490 = vsel %vm3479, %v3453, %v3421
        %v3491 = vsel %vm3479, %v3454, %v3422
        %v3492 = vsel %vm3479, %v3455, %v3423
        %v3493 = vsel %vm3479, %v3456, %v3424
        %v3494 = vsel %vm3479, %v3457, %v3425
        %v3495 = vsel %vm3479, %v3458, %v3426
        %v3496 = vsel %vm3479, %v3459, %v3427
        %v3497 = vsel %vm3479, %v3460, %v3428
        %v3498 = vsel %vm3479, %v3461, %v3429
        %v3499 = vsel %vm3479, %v3462, %v3430
        %v3500 = vsel %vm3479, %v3463, %v3431
        %v3501 = vsel %vm3479, %v3464, %v3432
        %v3502 = vsel %vm3479, %v3465, %v3433
        %v3503 = vsel %vm3479, %v3466, %v3434
        %v3504 = vsel %vm3479, %v3467, %v3435
        %v3505 = vsel %vm3479, %v3468, %v3436
        %v3506 = vsel %vm3479, %v3469, %v3437
        %v3507 = vsel %vm3479, %v3470, %v3438
        %v3508 = vsel %vm3479, %v3471, %v3439
        %v3509 = vsel %vm3479, %v3472, %v3440
        %v3510 = vsel %vm3479, %v3473, %v3441
        %v3511 = vsel %vm3479, %v3474, %v3442
        %v3512 = vld [vmem:[#allocation3 + $0x1] sm:$0xff]
        %v3513 = vld [vmem:[#allocation3 + $0x9] sm:$0xff]
        %v3514 = vld [vmem:[#allocation3 + $0x19] sm:$0xff]
        %v3515 = vld [vmem:[#allocation3 + $0x21] sm:$0xff]
        %v3516 = vld [vmem:[#allocation3 + $0x31] sm:$0xff]
        %v3517 = vld [vmem:[#allocation3 + $0x39] sm:$0xff]
        %v3518 = vld [vmem:[#allocation3 + $0x49] sm:$0xff]
        %v3519 = vld [vmem:[#allocation3 + $0x51] sm:$0xff]
        %v3520 = vld [vmem:[#allocation3 + $0x61] sm:$0xff]
        %v3521 = vld [vmem:[#allocation3 + $0x69] sm:$0xff]
        %v3522 = vld [vmem:[#allocation3 + $0x79] sm:$0xff]
        %v3523 = vld [vmem:[#allocation3 + $0x81] sm:$0xff]
        %v3524 = vld [vmem:[#allocation3 + $0x91] sm:$0xff]
        %v3525 = vld [vmem:[#allocation3 + $0x99] sm:$0xff]
        %v3526 = vld [vmem:[#allocation3 + $0xa9] sm:$0xff]
        %v3527 = vld [vmem:[#allocation3 + $0xb1] sm:$0xff]
        %v3528 = vld [vmem:[#allocation3 + $0xc1] sm:$0xff]
        %v3529 = vld [vmem:[#allocation3 + $0xc9] sm:$0xff]
        %v3530 = vld [vmem:[#allocation3 + $0xd9] sm:$0xff]
        %v3531 = vld [vmem:[#allocation3 + $0xe1] sm:$0xff]
        %v3532 = vld [vmem:[#allocation3 + $0xf1] sm:$0xff]
        %v3533 = vld [vmem:[#allocation3 + $0xf9] sm:$0xff]
        %v3534 = vld [vmem:[#allocation3 + $0x109] sm:$0xff]
        %v3535 = vld [vmem:[#allocation3 + $0x111] sm:$0xff]
        %v3536 = vld [vmem:[#allocation3 + $0x121] sm:$0xff]
        %v3537 = vld [vmem:[#allocation3 + $0x129] sm:$0xff]
        %v3538 = vld [vmem:[#allocation3 + $0x139] sm:$0xff]
        %v3539 = vld [vmem:[#allocation3 + $0x141] sm:$0xff]
        %v3540 = vld [vmem:[#allocation3 + $0x151] sm:$0xff]
        %v3541 = vld [vmem:[#allocation3 + $0x159] sm:$0xff]
        %v3542 = vld [vmem:[#allocation3 + $0x169] sm:$0xff]
        %v3543 = vld [vmem:[#allocation3 + $0x171] sm:$0xff]
        %vm3544 = vcmp.ge.s32.totalorder %v3304, 12
        %vm3545 = vcmp.lt.s32.totalorder %v3304, 16
        %vm3546 = vmand %vm3544, %vm3545
        %v3547 = vsel %vm3546, 1, 0
        %vm3548 = vcmp.eq.s32.totalorder %v3547, 1
        %v3549 = vsel %vm3548, %v3512, %v3480
        %v3550 = vsel %vm3548, %v3513, %v3481
        %v3551 = vsel %vm3548, %v3514, %v3482
        %v3552 = vsel %vm3548, %v3515, %v3483
        %v3553 = vsel %vm3548, %v3516, %v3484
        %v3554 = vsel %vm3548, %v3517, %v3485
        %v3555 = vsel %vm3548, %v3518, %v3486
        %v3556 = vsel %vm3548, %v3519, %v3487
        %v3557 = vsel %vm3548, %v3520, %v3488
        %v3558 = vsel %vm3548, %v3521, %v3489
        %v3559 = vsel %vm3548, %v3522, %v3490
        %v3560 = vsel %vm3548, %v3523, %v3491
        %v3561 = vsel %vm3548, %v3524, %v3492
        %v3562 = vsel %vm3548, %v3525, %v3493
        %v3563 = vsel %vm3548, %v3526, %v3494
        %v3564 = vsel %vm3548, %v3527, %v3495
        %v3565 = vsel %vm3548, %v3528, %v3496
        %v3566 = vsel %vm3548, %v3529, %v3497
        %v3567 = vsel %vm3548, %v3530, %v3498
        %v3568 = vsel %vm3548, %v3531, %v3499
        %v3569 = vsel %vm3548, %v3532, %v3500
        %v3570 = vsel %vm3548, %v3533, %v3501
        %v3571 = vsel %vm3548, %v3534, %v3502
        %v3572 = vsel %vm3548, %v3535, %v3503
        %v3573 = vsel %vm3548, %v3536, %v3504
        %v3574 = vsel %vm3548, %v3537, %v3505
        %v3575 = vsel %vm3548, %v3538, %v3506
        %v3576 = vsel %vm3548, %v3539, %v3507
        %v3577 = vsel %vm3548, %v3540, %v3508
        %v3578 = vsel %vm3548, %v3541, %v3509
        %v3579 = vsel %vm3548, %v3542, %v3510
        %v3580 = vsel %vm3548, %v3543, %v3511
        %v3581 = vld [vmem:[#allocation3] sm:$0xff]
        %v3582 = vld [vmem:[#allocation3 + $0x8] sm:$0xff]
        %v3583 = vld [vmem:[#allocation3 + $0x18] sm:$0xff]
        %v3584 = vld [vmem:[#allocation3 + $0x20] sm:$0xff]
        %v3585 = vld [vmem:[#allocation3 + $0x30] sm:$0xff]
        %v3586 = vld [vmem:[#allocation3 + $0x38] sm:$0xff]
        %v3587 = vld [vmem:[#allocation3 + $0x48] sm:$0xff]
        %v3588 = vld [vmem:[#allocation3 + $0x50] sm:$0xff]
        %v3589 = vld [vmem:[#allocation3 + $0x60] sm:$0xff]
        %v3590 = vld [vmem:[#allocation3 + $0x68] sm:$0xff]
        %v3591 = vld [vmem:[#allocation3 + $0x78] sm:$0xff]
        %v3592 = vld [vmem:[#allocation3 + $0x80] sm:$0xff]
        %v3593 = vld [vmem:[#allocation3 + $0x90] sm:$0xff]
        %v3594 = vld [vmem:[#allocation3 + $0x98] sm:$0xff]
        %v3595 = vld [vmem:[#allocation3 + $0xa8] sm:$0xff]
        %v3596 = vld [vmem:[#allocation3 + $0xb0] sm:$0xff]
        %v3597 = vld [vmem:[#allocation3 + $0xc0] sm:$0xff]
        %v3598 = vld [vmem:[#allocation3 + $0xc8] sm:$0xff]
        %v3599 = vld [vmem:[#allocation3 + $0xd8] sm:$0xff]
        %v3600 = vld [vmem:[#allocation3 + $0xe0] sm:$0xff]
        %v3601 = vld [vmem:[#allocation3 + $0xf0] sm:$0xff]
        %v3602 = vld [vmem:[#allocation3 + $0xf8] sm:$0xff]
        %v3603 = vld [vmem:[#allocation3 + $0x108] sm:$0xff]
        %v3604 = vld [vmem:[#allocation3 + $0x110] sm:$0xff]
        %v3605 = vld [vmem:[#allocation3 + $0x120] sm:$0xff]
        %v3606 = vld [vmem:[#allocation3 + $0x128] sm:$0xff]
        %v3607 = vld [vmem:[#allocation3 + $0x138] sm:$0xff]
        %v3608 = vld [vmem:[#allocation3 + $0x140] sm:$0xff]
        %v3609 = vld [vmem:[#allocation3 + $0x150] sm:$0xff]
        %v3610 = vld [vmem:[#allocation3 + $0x158] sm:$0xff]
        %v3611 = vld [vmem:[#allocation3 + $0x168] sm:$0xff]
        %v3612 = vld [vmem:[#allocation3 + $0x170] sm:$0xff]
        %vm3613 = vcmp.ge.s32.totalorder %v3304, 16
        %vm3614 = vcmp.lt.s32.totalorder %v3304, 20
        %vm3615 = vmand %vm3613, %vm3614
        %v3616 = vsel %vm3615, 1, 0
        %vm3617 = vcmp.eq.s32.totalorder %v3616, 1
        %v3618 = vsel %vm3617, %v3581, %v3549
        %v3619 = vsel %vm3617, %v3582, %v3550
        %v3620 = vsel %vm3617, %v3583, %v3551
        %v3621 = vsel %vm3617, %v3584, %v3552
        %v3622 = vsel %vm3617, %v3585, %v3553
        %v3623 = vsel %vm3617, %v3586, %v3554
        %v3624 = vsel %vm3617, %v3587, %v3555
        %v3625 = vsel %vm3617, %v3588, %v3556
        %v3626 = vsel %vm3617, %v3589, %v3557
        %v3627 = vsel %vm3617, %v3590, %v3558
        %v3628 = vsel %vm3617, %v3591, %v3559
        %v3629 = vsel %vm3617, %v3592, %v3560
        %v3630 = vsel %vm3617, %v3593, %v3561
        %v3631 = vsel %vm3617, %v3594, %v3562
        %v3632 = vsel %vm3617, %v3595, %v3563
        %v3633 = vsel %vm3617, %v3596, %v3564
        %v3634 = vsel %vm3617, %v3597, %v3565
        %v3635 = vsel %vm3617, %v3598, %v3566
        %v3636 = vsel %vm3617, %v3599, %v3567
        %v3637 = vsel %vm3617, %v3600, %v3568
        %v3638 = vsel %vm3617, %v3601, %v3569
        %v3639 = vsel %vm3617, %v3602, %v3570
        %v3640 = vsel %vm3617, %v3603, %v3571
        %v3641 = vsel %vm3617, %v3604, %v3572
        %v3642 = vsel %vm3617, %v3605, %v3573
        %v3643 = vsel %vm3617, %v3606, %v3574
        %v3644 = vsel %vm3617, %v3607, %v3575
        %v3645 = vsel %vm3617, %v3608, %v3576
        %v3646 = vsel %vm3617, %v3609, %v3577
        %v3647 = vsel %vm3617, %v3610, %v3578
        %v3648 = vsel %vm3617, %v3611, %v3579
        %v3649 = vsel %vm3617, %v3612, %v3580
        %v3650 = vld [vmem:[#allocation4] sm:$0xff]
        %v3651 = vld [vmem:[#allocation4 + $0x8] sm:$0xff]
        %v3652 = vld [vmem:[#allocation4 + $0x10] sm:$0xff]
        %v3653 = vld [vmem:[#allocation4 + $0x18] sm:$0xff]
        %v3654 = vld [vmem:[#allocation4 + $0x20] sm:$0xff]
        %v3655 = vld [vmem:[#allocation4 + $0x28] sm:$0xff]
        %v3656 = vld [vmem:[#allocation4 + $0x30] sm:$0xff]
        %v3657 = vld [vmem:[#allocation4 + $0x38] sm:$0xff]
        %v3658 = vld [vmem:[#allocation4 + $0x40] sm:$0xff]
        %v3659 = vld [vmem:[#allocation4 + $0x48] sm:$0xff]
        %v3660 = vld [vmem:[#allocation4 + $0x50] sm:$0xff]
        %v3661 = vld [vmem:[#allocation4 + $0x58] sm:$0xff]
        %v3662 = vld [vmem:[#allocation4 + $0x60] sm:$0xff]
        %v3663 = vld [vmem:[#allocation4 + $0x68] sm:$0xff]
        %v3664 = vld [vmem:[#allocation4 + $0x70] sm:$0xff]
        %v3665 = vld [vmem:[#allocation4 + $0x78] sm:$0xff]
        %v3666 = vld [vmem:[#allocation4 + $0x80] sm:$0xff]
        %v3667 = vld [vmem:[#allocation4 + $0x88] sm:$0xff]
        %v3668 = vld [vmem:[#allocation4 + $0x90] sm:$0xff]
        %v3669 = vld [vmem:[#allocation4 + $0x98] sm:$0xff]
        %v3670 = vld [vmem:[#allocation4 + $0xa0] sm:$0xff]
        %v3671 = vld [vmem:[#allocation4 + $0xa8] sm:$0xff]
        %v3672 = vld [vmem:[#allocation4 + $0xb0] sm:$0xff]
        %v3673 = vld [vmem:[#allocation4 + $0xb8] sm:$0xff]
        %v3674 = vld [vmem:[#allocation4 + $0xc0] sm:$0xff]
        %v3675 = vld [vmem:[#allocation4 + $0xc8] sm:$0xff]
        %v3676 = vld [vmem:[#allocation4 + $0xd0] sm:$0xff]
        %v3677 = vld [vmem:[#allocation4 + $0xd8] sm:$0xff]
        %v3678 = vld [vmem:[#allocation4 + $0xe0] sm:$0xff]
        %v3679 = vld [vmem:[#allocation4 + $0xe8] sm:$0xff]
        %v3680 = vld [vmem:[#allocation4 + $0xf0] sm:$0xff]
        %v3681 = vld [vmem:[#allocation4 + $0xf8] sm:$0xff]
        %v3682 = vld [vmem:[#allocation11] sm:$0xff]
        %v3683 = vld [vmem:[#allocation11 + $0x8] sm:$0xff]
        %v3684 = vld [vmem:[#allocation11 + $0x10] sm:$0xff]
        %v3685 = vld [vmem:[#allocation11 + $0x18] sm:$0xff]
        %v3686 = vld [vmem:[#allocation11 + $0x20] sm:$0xff]
        %v3687 = vld [vmem:[#allocation11 + $0x28] sm:$0xff]
        %v3688 = vld [vmem:[#allocation11 + $0x30] sm:$0xff]
        %v3689 = vld [vmem:[#allocation11 + $0x38] sm:$0xff]
        %v3690 = vld [vmem:[#allocation11 + $0x40] sm:$0xff]
        %v3691 = vld [vmem:[#allocation11 + $0x48] sm:$0xff]
        %v3692 = vld [vmem:[#allocation11 + $0x50] sm:$0xff]
        %v3693 = vld [vmem:[#allocation11 + $0x58] sm:$0xff]
        %v3694 = vld [vmem:[#allocation11 + $0x60] sm:$0xff]
        %v3695 = vld [vmem:[#allocation11 + $0x68] sm:$0xff]
        %v3696 = vld [vmem:[#allocation11 + $0x70] sm:$0xff]
        %v3697 = vld [vmem:[#allocation11 + $0x78] sm:$0xff]
        %3698 = vmatpush.msra.mxu0 %v3697
        %3699 = vmatpush.msra.mxu0 %v3696
        %3700 = vmatpush.msra.mxu0 %v3695
        %3701 = vmatpush.msra.mxu0 %v3694
        %3702 = vmatpush.msra.mxu0 %v3693
        %3703 = vmatpush.msra.mxu0 %v3692
        %3704 = vmatpush.msra.mxu0 %v3691
        %3705 = vmatpush.msra.mxu0 %v3690
        %3706 = vmatpush.msra.mxu0 %v3689
        %3707 = vmatpush.msra.mxu0 %v3688
        %3708 = vmatpush.msra.mxu0 %v3687
        %3709 = vmatpush.msra.mxu0 %v3686
        %3710 = vmatpush.msra.mxu0 %v3685
        %3711 = vmatpush.msra.mxu0 %v3684
        %3712 = vmatpush.msra.mxu0 %v3683
        %3713 = vmatpush.msra.mxu0 %v3682
        %3714 = vmatmul.f32.gmra.mxu0 %v3618
        %v3715 = vpop.f32.mrf.mxu0
        %v3716 = vadd.f32 0.0, %v3715
        %3717 = vmatmul.f32.gmra.mxu0 %v3619
        %v3718 = vpop.f32.mrf.mxu0
        %v3719 = vadd.f32 0.0, %v3718
        %3720 = vmatmul.f32.gmra.mxu0 %v3620
        %v3721 = vpop.f32.mrf.mxu0
        %v3722 = vadd.f32 0.0, %v3721
        %3723 = vmatmul.f32.gmra.mxu0 %v3621
        %v3724 = vpop.f32.mrf.mxu0
        %v3725 = vadd.f32 0.0, %v3724
        %3726 = vmatmul.f32.gmra.mxu0 %v3622
        %v3727 = vpop.f32.mrf.mxu0
        %v3728 = vadd.f32 0.0, %v3727
        %3729 = vmatmul.f32.gmra.mxu0 %v3623
        %v3730 = vpop.f32.mrf.mxu0
        %v3731 = vadd.f32 0.0, %v3730
        %3732 = vmatmul.f32.gmra.mxu0 %v3624
        %v3733 = vpop.f32.mrf.mxu0
        %v3734 = vadd.f32 0.0, %v3733
        %3735 = vmatmul.f32.gmra.mxu0 %v3625
        %v3736 = vpop.f32.mrf.mxu0
        %v3737 = vadd.f32 0.0, %v3736
        %3738 = vmatmul.f32.gmra.mxu0 %v3626
        %v3739 = vpop.f32.mrf.mxu0
        %v3740 = vadd.f32 0.0, %v3739
        %3741 = vmatmul.f32.gmra.mxu0 %v3627
        %v3742 = vpop.f32.mrf.mxu0
        %v3743 = vadd.f32 0.0, %v3742
        %3744 = vmatmul.f32.gmra.mxu0 %v3628
        %v3745 = vpop.f32.mrf.mxu0
        %v3746 = vadd.f32 0.0, %v3745
        %3747 = vmatmul.f32.gmra.mxu0 %v3629
        %v3748 = vpop.f32.mrf.mxu0
        %v3749 = vadd.f32 0.0, %v3748
        %3750 = vmatmul.f32.gmra.mxu0 %v3630
        %v3751 = vpop.f32.mrf.mxu0
        %v3752 = vadd.f32 0.0, %v3751
        %3753 = vmatmul.f32.gmra.mxu0 %v3631
        %v3754 = vpop.f32.mrf.mxu0
        %v3755 = vadd.f32 0.0, %v3754
        %3756 = vmatmul.f32.gmra.mxu0 %v3632
        %v3757 = vpop.f32.mrf.mxu0
        %v3758 = vadd.f32 0.0, %v3757
        %3759 = vmatmul.f32.gmra.mxu0 %v3633
        %v3760 = vpop.f32.mrf.mxu0
        %v3761 = vadd.f32 0.0, %v3760
        %3762 = vmatmul.f32.gmra.mxu0 %v3634
        %v3763 = vpop.f32.mrf.mxu0
        %v3764 = vadd.f32 0.0, %v3763
        %3765 = vmatmul.f32.gmra.mxu0 %v3635
        %v3766 = vpop.f32.mrf.mxu0
        %v3767 = vadd.f32 0.0, %v3766
        %3768 = vmatmul.f32.gmra.mxu0 %v3636
        %v3769 = vpop.f32.mrf.mxu0
        %v3770 = vadd.f32 0.0, %v3769
        %3771 = vmatmul.f32.gmra.mxu0 %v3637
        %v3772 = vpop.f32.mrf.mxu0
        %v3773 = vadd.f32 0.0, %v3772
        %3774 = vmatmul.f32.gmra.mxu0 %v3638
        %v3775 = vpop.f32.mrf.mxu0
        %v3776 = vadd.f32 0.0, %v3775
        %3777 = vmatmul.f32.gmra.mxu0 %v3639
        %v3778 = vpop.f32.mrf.mxu0
        %v3779 = vadd.f32 0.0, %v3778
        %3780 = vmatmul.f32.gmra.mxu0 %v3640
        %v3781 = vpop.f32.mrf.mxu0
        %v3782 = vadd.f32 0.0, %v3781
        %3783 = vmatmul.f32.gmra.mxu0 %v3641
        %v3784 = vpop.f32.mrf.mxu0
        %v3785 = vadd.f32 0.0, %v3784
        %3786 = vmatmul.f32.gmra.mxu0 %v3642
        %v3787 = vpop.f32.mrf.mxu0
        %v3788 = vadd.f32 0.0, %v3787
        %3789 = vmatmul.f32.gmra.mxu0 %v3643
        %v3790 = vpop.f32.mrf.mxu0
        %v3791 = vadd.f32 0.0, %v3790
        %3792 = vmatmul.f32.gmra.mxu0 %v3644
        %v3793 = vpop.f32.mrf.mxu0
        %v3794 = vadd.f32 0.0, %v3793
        %3795 = vmatmul.f32.gmra.mxu0 %v3645
        %v3796 = vpop.f32.mrf.mxu0
        %v3797 = vadd.f32 0.0, %v3796
        %3798 = vmatmul.f32.gmra.mxu0 %v3646
        %v3799 = vpop.f32.mrf.mxu0
        %v3800 = vadd.f32 0.0, %v3799
        %3801 = vmatmul.f32.gmra.mxu0 %v3647
        %v3802 = vpop.f32.mrf.mxu0
        %v3803 = vadd.f32 0.0, %v3802
        %3804 = vmatmul.f32.gmra.mxu0 %v3648
        %v3805 = vpop.f32.mrf.mxu0
        %v3806 = vadd.f32 0.0, %v3805
        %3807 = vmatmul.f32.gmra.mxu0 %v3649
        %v3808 = vpop.f32.mrf.mxu0
        %v3809 = vadd.f32 0.0, %v3808
        %3810 = vdwg.mxu0
        %v3811 = vadd.f32 %v3650, %v3716
        %v3812 = vadd.f32 %v3651, %v3719
        %v3813 = vadd.f32 %v3652, %v3722
        %v3814 = vadd.f32 %v3653, %v3725
        %v3815 = vadd.f32 %v3654, %v3728
        %v3816 = vadd.f32 %v3655, %v3731
        %v3817 = vadd.f32 %v3656, %v3734
        %v3818 = vadd.f32 %v3657, %v3737
        %v3819 = vadd.f32 %v3658, %v3740
        %v3820 = vadd.f32 %v3659, %v3743
        %v3821 = vadd.f32 %v3660, %v3746
        %v3822 = vadd.f32 %v3661, %v3749
        %v3823 = vadd.f32 %v3662, %v3752
        %v3824 = vadd.f32 %v3663, %v3755
        %v3825 = vadd.f32 %v3664, %v3758
        %v3826 = vadd.f32 %v3665, %v3761
        %v3827 = vadd.f32 %v3666, %v3764
        %v3828 = vadd.f32 %v3667, %v3767
        %v3829 = vadd.f32 %v3668, %v3770
        %v3830 = vadd.f32 %v3669, %v3773
        %v3831 = vadd.f32 %v3670, %v3776
        %v3832 = vadd.f32 %v3671, %v3779
        %v3833 = vadd.f32 %v3672, %v3782
        %v3834 = vadd.f32 %v3673, %v3785
        %v3835 = vadd.f32 %v3674, %v3788
        %v3836 = vadd.f32 %v3675, %v3791
        %v3837 = vadd.f32 %v3676, %v3794
        %v3838 = vadd.f32 %v3677, %v3797
        %v3839 = vadd.f32 %v3678, %v3800
        %v3840 = vadd.f32 %v3679, %v3803
        %v3841 = vadd.f32 %v3680, %v3806
        %v3842 = vadd.f32 %v3681, %v3809
        %3843 = vst [vmem:[#allocation4] sm:$0xff] %v3811
        %3844 = vst [vmem:[#allocation4 + $0x8] sm:$0xff] %v3812
        %3845 = vst [vmem:[#allocation4 + $0x10] sm:$0xff] %v3813
        %3846 = vst [vmem:[#allocation4 + $0x18] sm:$0xff] %v3814
        %3847 = vst [vmem:[#allocation4 + $0x20] sm:$0xff] %v3815
        %3848 = vst [vmem:[#allocation4 + $0x28] sm:$0xff] %v3816
        %3849 = vst [vmem:[#allocation4 + $0x30] sm:$0xff] %v3817
        %3850 = vst [vmem:[#allocation4 + $0x38] sm:$0xff] %v3818
        %3851 = vst [vmem:[#allocation4 + $0x40] sm:$0xff] %v3819
        %3852 = vst [vmem:[#allocation4 + $0x48] sm:$0xff] %v3820
        %3853 = vst [vmem:[#allocation4 + $0x50] sm:$0xff] %v3821
        %3854 = vst [vmem:[#allocation4 + $0x58] sm:$0xff] %v3822
        %3855 = vst [vmem:[#allocation4 + $0x60] sm:$0xff] %v3823
        %3856 = vst [vmem:[#allocation4 + $0x68] sm:$0xff] %v3824
        %3857 = vst [vmem:[#allocation4 + $0x70] sm:$0xff] %v3825
        %3858 = vst [vmem:[#allocation4 + $0x78] sm:$0xff] %v3826
        %3859 = vst [vmem:[#allocation4 + $0x80] sm:$0xff] %v3827
        %3860 = vst [vmem:[#allocation4 + $0x88] sm:$0xff] %v3828
        %3861 = vst [vmem:[#allocation4 + $0x90] sm:$0xff] %v3829
        %3862 = vst [vmem:[#allocation4 + $0x98] sm:$0xff] %v3830
        %3863 = vst [vmem:[#allocation4 + $0xa0] sm:$0xff] %v3831
        %3864 = vst [vmem:[#allocation4 + $0xa8] sm:$0xff] %v3832
        %3865 = vst [vmem:[#allocation4 + $0xb0] sm:$0xff] %v3833
        %3866 = vst [vmem:[#allocation4 + $0xb8] sm:$0xff] %v3834
        %3867 = vst [vmem:[#allocation4 + $0xc0] sm:$0xff] %v3835
        %3868 = vst [vmem:[#allocation4 + $0xc8] sm:$0xff] %v3836
        %3869 = vst [vmem:[#allocation4 + $0xd0] sm:$0xff] %v3837
        %3870 = vst [vmem:[#allocation4 + $0xd8] sm:$0xff] %v3838
        %3871 = vst [vmem:[#allocation4 + $0xe0] sm:$0xff] %v3839
        %3872 = vst [vmem:[#allocation4 + $0xe8] sm:$0xff] %v3840
        %3873 = vst [vmem:[#allocation4 + $0xf0] sm:$0xff] %v3841
        %3874 = vst [vmem:[#allocation4 + $0xf8] sm:$0xff] %v3842
        // Predicated region
        $region69: #{tpu_custom_call.1} parent=47 // pred_check
          %p3875 = pneg %p412
        $region70: #{tpu_custom_call.1} parent=47 // pred_check_branch
          %3877 = sbr.rel (%p3875) target = $region72
        $region71: #{tpu_custom_call.1} parent=47 // pred_region
          %v3878 = vld [vmem:[#allocation4] sm:$0xff]
          %v3879 = vld [vmem:[#allocation4 + $0x8] sm:$0xff]
          %v3880 = vld [vmem:[#allocation4 + $0x10] sm:$0xff]
          %v3881 = vld [vmem:[#allocation4 + $0x18] sm:$0xff]
          %v3882 = vld [vmem:[#allocation4 + $0x20] sm:$0xff]
          %v3883 = vld [vmem:[#allocation4 + $0x28] sm:$0xff]
          %v3884 = vld [vmem:[#allocation4 + $0x30] sm:$0xff]
          %v3885 = vld [vmem:[#allocation4 + $0x38] sm:$0xff]
          %v3886 = vld [vmem:[#allocation4 + $0x40] sm:$0xff]
          %v3887 = vld [vmem:[#allocation4 + $0x48] sm:$0xff]
          %v3888 = vld [vmem:[#allocation4 + $0x50] sm:$0xff]
          %v3889 = vld [vmem:[#allocation4 + $0x58] sm:$0xff]
          %v3890 = vld [vmem:[#allocation4 + $0x60] sm:$0xff]
          %v3891 = vld [vmem:[#allocation4 + $0x68] sm:$0xff]
          %v3892 = vld [vmem:[#allocation4 + $0x70] sm:$0xff]
          %v3893 = vld [vmem:[#allocation4 + $0x78] sm:$0xff]
          %v3894 = vld [vmem:[#allocation4 + $0x80] sm:$0xff]
          %v3895 = vld [vmem:[#allocation4 + $0x88] sm:$0xff]
          %v3896 = vld [vmem:[#allocation4 + $0x90] sm:$0xff]
          %v3897 = vld [vmem:[#allocation4 + $0x98] sm:$0xff]
          %v3898 = vld [vmem:[#allocation4 + $0xa0] sm:$0xff]
          %v3899 = vld [vmem:[#allocation4 + $0xa8] sm:$0xff]
          %v3900 = vld [vmem:[#allocation4 + $0xb0] sm:$0xff]
          %v3901 = vld [vmem:[#allocation4 + $0xb8] sm:$0xff]
          %v3902 = vld [vmem:[#allocation4 + $0xc0] sm:$0xff]
          %v3903 = vld [vmem:[#allocation4 + $0xc8] sm:$0xff]
          %v3904 = vld [vmem:[#allocation4 + $0xd0] sm:$0xff]
          %v3905 = vld [vmem:[#allocation4 + $0xd8] sm:$0xff]
          %v3906 = vld [vmem:[#allocation4 + $0xe0] sm:$0xff]
          %v3907 = vld [vmem:[#allocation4 + $0xe8] sm:$0xff]
          %v3908 = vld [vmem:[#allocation4 + $0xf0] sm:$0xff]
          %v3909 = vld [vmem:[#allocation4 + $0xf8] sm:$0xff]
          %v3910 = vld [vmem:[%s6] sm:$0x1]
          %v3912 = vperm.slane %v3910, 0
          %v3914 = vadd.f32 %v3878, %v3912
          %v3915 = vadd.f32 %v3879, %v3912
          %v3916 = vadd.f32 %v3880, %v3912
          %v3917 = vadd.f32 %v3881, %v3912
          %v3918 = vadd.f32 %v3882, %v3912
          %v3919 = vadd.f32 %v3883, %v3912
          %v3920 = vadd.f32 %v3884, %v3912
          %v3921 = vadd.f32 %v3885, %v3912
          %v3922 = vadd.f32 %v3886, %v3912
          %v3923 = vadd.f32 %v3887, %v3912
          %v3924 = vadd.f32 %v3888, %v3912
          %v3925 = vadd.f32 %v3889, %v3912
          %v3926 = vadd.f32 %v3890, %v3912
          %v3927 = vadd.f32 %v3891, %v3912
          %v3928 = vadd.f32 %v3892, %v3912
          %v3929 = vadd.f32 %v3893, %v3912
          %v3930 = vadd.f32 %v3894, %v3912
          %v3931 = vadd.f32 %v3895, %v3912
          %v3932 = vadd.f32 %v3896, %v3912
          %v3933 = vadd.f32 %v3897, %v3912
          %v3934 = vadd.f32 %v3898, %v3912
          %v3935 = vadd.f32 %v3899, %v3912
          %v3936 = vadd.f32 %v3900, %v3912
          %v3937 = vadd.f32 %v3901, %v3912
          %v3938 = vadd.f32 %v3902, %v3912
          %v3939 = vadd.f32 %v3903, %v3912
          %v3940 = vadd.f32 %v3904, %v3912
          %v3941 = vadd.f32 %v3905, %v3912
          %v3942 = vadd.f32 %v3906, %v3912
          %v3943 = vadd.f32 %v3907, %v3912
          %v3944 = vadd.f32 %v3908, %v3912
          %v3945 = vadd.f32 %v3909, %v3912
          %3946 = vst [vmem:[%s404] sm:$0xff] %v3914
          %3947 = vst [vmem:[%s404 + $0x8] sm:$0xff] %v3915
          %3948 = vst [vmem:[%s404 + $0x10] sm:$0xff] %v3916
          %3949 = vst [vmem:[%s404 + $0x18] sm:$0xff] %v3917
          %3950 = vst [vmem:[%s404 + $0x20] sm:$0xff] %v3918
          %3951 = vst [vmem:[%s404 + $0x28] sm:$0xff] %v3919
          %3952 = vst [vmem:[%s404 + $0x30] sm:$0xff] %v3920
          %3953 = vst [vmem:[%s404 + $0x38] sm:$0xff] %v3921
          %3954 = vst [vmem:[%s404 + $0x40] sm:$0xff] %v3922
          %3955 = vst [vmem:[%s404 + $0x48] sm:$0xff] %v3923
          %3956 = vst [vmem:[%s404 + $0x50] sm:$0xff] %v3924
          %3957 = vst [vmem:[%s404 + $0x58] sm:$0xff] %v3925
          %3958 = vst [vmem:[%s404 + $0x60] sm:$0xff] %v3926
          %3959 = vst [vmem:[%s404 + $0x68] sm:$0xff] %v3927
          %3960 = vst [vmem:[%s404 + $0x70] sm:$0xff] %v3928
          %3961 = vst [vmem:[%s404 + $0x78] sm:$0xff] %v3929
          %3962 = vst [vmem:[%s404 + $0x80] sm:$0xff] %v3930
          %3963 = vst [vmem:[%s404 + $0x88] sm:$0xff] %v3931
          %3964 = vst [vmem:[%s404 + $0x90] sm:$0xff] %v3932
          %3965 = vst [vmem:[%s404 + $0x98] sm:$0xff] %v3933
          %3966 = vst [vmem:[%s404 + $0xa0] sm:$0xff] %v3934
          %3967 = vst [vmem:[%s404 + $0xa8] sm:$0xff] %v3935
          %3968 = vst [vmem:[%s404 + $0xb0] sm:$0xff] %v3936
          %3969 = vst [vmem:[%s404 + $0xb8] sm:$0xff] %v3937
          %3970 = vst [vmem:[%s404 + $0xc0] sm:$0xff] %v3938
          %3971 = vst [vmem:[%s404 + $0xc8] sm:$0xff] %v3939
          %3972 = vst [vmem:[%s404 + $0xd0] sm:$0xff] %v3940
          %3973 = vst [vmem:[%s404 + $0xd8] sm:$0xff] %v3941
          %3974 = vst [vmem:[%s404 + $0xe0] sm:$0xff] %v3942
          %3975 = vst [vmem:[%s404 + $0xe8] sm:$0xff] %v3943
          %3976 = vst [vmem:[%s404 + $0xf0] sm:$0xff] %v3944
          %3977 = vst [vmem:[%s404 + $0xf8] sm:$0xff] %v3945
        $region72: #{tpu_custom_call.1} parent=47 // pred_fallthru
          _
        %s3978 = sand.u32 %s223, 1
        %s3979 = scalar_lea.sflag [#allocation7], %s3978
        %s3980 = sand.u32 %s223, 1
        %s3981 = smul.addr %s3980, 256
        %s3982 = scalar_lea.vmem [#allocation13], %s3981
        // Predicated region
        $region73: #{tpu_custom_call.1} parent=47 // pred_check
          %p3983 = pneg %p233
        $region74: #{tpu_custom_call.1} parent=47 // pred_check_branch
          %3985 = sbr.rel (%p3983) target = $region76
        $region75: #{tpu_custom_call.1} parent=47 // pred_region
          %3987 = vsyncadd %s3979, 0
          %s3988 = smul.addr %s30, 32
          %s3989 = smul.addr %s3988, 8
          %s3990 = scalar_lea.hbm %s7, %s3989
          %s3991 = sshll.u32 %s3982, 4
          %s3992 = int_to_ptr.vmem [resolvable:$true] %s3991
          %s3993 = sshll.u32 %s3990, 4
          %s3994 = int_to_ptr.hbm [resolvable:$true] %s3993
          %3999 = dma.vmem_to_hbm [thread:$0]  %s3992, 4096, %s3994, %s3979, 128, 128, 8
        $region76: #{tpu_custom_call.1} parent=47 // pred_fallthru
          _
      $region48: #{tpu_custom_call.1} parent=5 // pred_fallthru
        _
      %p4000 = scmp.le.s32.totalorder 2, %s21
      // Predicated region
      $region77: #{tpu_custom_call.1} parent=5 // pred_check
        %p4001 = pneg %p4000
      $region78: #{tpu_custom_call.1} parent=5 // pred_check_branch
        %4003 = sbr.rel (%p4001) target = $region80
      $region79: #{tpu_custom_call.1} parent=5 // pred_region
        %s4004 = ssub.s32 %s21, 2
        // Predicated region
        $region81: #{tpu_custom_call.1} parent=79 // pred_check
          %p4005 = pneg %p239
        $region82: #{tpu_custom_call.1} parent=79 // pred_check_branch
          %4007 = sbr.rel (%p4005) target = $region84
        $region83: #{tpu_custom_call.1} parent=79 // pred_region
          %s4008 = sand.u32 %s224, 1
          %s4009 = scalar_lea.sflag [#allocation7], %s4008
          %s4010 = sand.u32 %s224, 1
          %s4011 = smul.addr %s4010, 256
          %s4012 = scalar_lea.vmem [#allocation13], %s4011
          %4014 = dma.done %s4009, 4096
        $region84: #{tpu_custom_call.1} parent=79 // pred_fallthru
          _
      $region80: #{tpu_custom_call.1} parent=5 // pred_fallthru
        _
    $region6: #{tpu_custom_call.1} parent=1 // loop_footer
      %s25 = sadd.s32 1, %s21
    $region7: #{tpu_custom_call.1} parent=1 // loop_footer_branch
      %20 = sbr.rel target = $region3
    $region8: #{tpu_custom_call.1} parent=1 // loop_exit
      _
    %4015 = vsyncpa [#allocation6], 1
    %s4016 = scalar_lea.sflag [#allocation6], 1
    %4017 = vsyncpa %s4016, 1
    %4018 = vsyncpa [#allocation9], 1
    %4019 = vsyncpa [#allocation12], 1
    %4020 = vsyncpa [#allocation7], 1
    %s4021 = scalar_lea.sflag [#allocation7], 1
    %4022 = vsyncpa %s4021, 1

</llo_original>
